<compile_context>
chip_gen: v5e
topology: v5e:2x2
jax: 0.10.0
libtpu: 0.0.40
codegen_flags: <defaults>
</compile_context>

<pallas_src>
import functools

import jax
import jax.numpy as jnp
from jax.experimental import pallas as pl
from jax.experimental.pallas import tpu as pltpu


# ----------------------------------------------------------------------------
# Fused kernel: whole UNetFire forward for one image per grid step
# ----------------------------------------------------------------------------
def _unet_fire_kernel(x_ref, h0p_ref, h1p_ref,
                      hw_ref, hb_ref,
                      g0wx_ref, g0wh_ref, g0wo_ref, g0b_ref,
                      r0w1_ref, r0b1_ref, r0w2_ref, r0b2_ref,
                      g1wx_ref, g1wh_ref, g1wo_ref, g1b_ref,
                      r1w1_ref, r1b1_ref, r1w2_ref, r1b2_ref,
                      pw_ref, pb_ref,
                      img_ref, s0_ref, s1_ref,
                      shbuf, *, H, W, C, PAD):
    HW = H * W
    f32 = jnp.float32

    # Zero the line buffer once per image.  This provides (a) the zero halo for
    # the vertical taps and (b) zero-fill for unused head input channels.
    # Done every grid step (not program_id==0) so it stays correct when the
    # 'parallel' batch axis is sharded across TensorCores.
    shbuf[...] = jnp.zeros(shbuf.shape, f32)

    # Horizontal-tap validity masks (row wrap-around in the flattened layout).
    col = jax.lax.broadcasted_iota(jnp.int32, (1, HW), 1) % W
    m_left = col >= 1          # tap dx = -1 is valid
    m_right = col <= W - 2     # tap dx = +1 is valid

    def patches(a):
        """im2col: a is (rows<=C, HW); returns the (9*C, HW) tap-stacked matrix."""
        shbuf[0:a.shape[0], PAD:PAD + HW] = a
        taps = []
        for dy in (-1, 0, 1):
            for dx in (-1, 0, 1):
                d = dy * W + dx
                t = shbuf[:, PAD + d:PAD + d + HW]     # lane-shifted read
                if dx == -1:
                    t = jnp.where(m_left, t, 0.0)
                elif dx == 1:
                    t = jnp.where(m_right, t, 0.0)
                taps.append(t)
        return jnp.concatenate(taps, axis=0)           # (9*C, HW)

    def conv3(a, w_ref, b_ref):
        # one MXU matmul per conv:  (Cout, 9C) x (9C, HW)
        return jnp.dot(w_ref[...], patches(a), preferred_element_type=f32) + b_ref[...]

    def gru(xa, hp, wx_ref, wh_ref, wo_ref, b_ref):
        # fused gates: gx = [z;r;o] x-parts (+ gate biases), gh = [z;r] h-parts
        gx = jnp.dot(wx_ref[...], patches(xa), preferred_element_type=f32) + b_ref[...]
        gh = jnp.dot(wh_ref[...], patches(hp), preferred_element_type=f32)
        z = jax.nn.sigmoid(gx[0:C] + gh[0:C])
        r = jax.nn.sigmoid(gx[C:2 * C] + gh[C:2 * C])
        cand = jnp.tanh(gx[2 * C:3 * C] +
                        jnp.dot(wo_ref[...], patches(hp * r),
                                preferred_element_type=f32))
        return hp * (1.0 - z) + cand * z

    def resblock(a, w1_ref, b1_ref, w2_ref, b2_ref):
        t = jnp.maximum(conv3(a, w1_ref, b1_ref), 0.0)
        t = conv3(t, w2_ref, b2_ref)
        return jnp.maximum(t + a, 0.0)

    # head: ConvLayer(3x3, relu) + ConvGRU
    head = jnp.maximum(conv3(x_ref[...], hw_ref, hb_ref), 0.0)
    s0 = gru(head, h0p_ref[...], g0wx_ref, g0wh_ref, g0wo_ref, g0b_ref)
    s0_ref[...] = s0

    # resblock 0 (recurrent): ResidualBlock + ConvGRU
    r0 = resblock(s0, r0w1_ref, r0b1_ref, r0w2_ref, r0b2_ref)
    s1 = gru(r0, h1p_ref[...], g1wx_ref, g1wh_ref, g1wo_ref, g1b_ref)
    s1_ref[...] = s1

    # resblock 1 (plain)
    r1 = resblock(s1, r1w1_ref, r1b1_ref, r1w2_ref, r1b2_ref)

    # pred: 1x1 conv, no activation
    img_ref[...] = jnp.dot(pw_ref[...], r1, preferred_element_type=f32) + pb_ref[...]


# ----------------------------------------------------------------------------
# Wrapper: single pallas_call, grid over batch, channels-major (C, H*W) layout
# ----------------------------------------------------------------------------
def unet_fire_forward(prep, x_nchw, prev_states=None):
    N, Cin, H, W = x_nchw.shape
    C = prep["head_w"].shape[0]
    cout = prep["pred_w"].shape[0]
    HW = H * W
    PAD = W + 1
    assert C % 8 == 0 and Cin <= C, "demo kernel assumes Cin <= C and C % 8 == 0"

    # NCHW -> (N, C, H*W) is a free reshape (no transpose needed in this layout)
    x = x_nchw.reshape(N, Cin, HW).astype(jnp.float32)
    if prev_states is None:
        prev_states = [None, None]

    def as_state(s):
        if s is None:
            return jnp.zeros((N, C, HW), jnp.float32)
        return s.reshape(N, C, HW).astype(jnp.float32)

    h0p, h1p = as_state(prev_states[0]), as_state(prev_states[1])

    weights = (prep["head_w"], prep["head_b"],
               *prep["g0"], *prep["rb0"], *prep["g1"], *prep["rb1"],
               prep["pred_w"], prep["pred_b"])

    def act_spec(ch):
        return pl.BlockSpec((None, ch, HW), lambda n: (n, 0, 0))

    def w_spec(a):
        return pl.BlockSpec(a.shape, lambda n: (0, 0))

    kernel = functools.partial(_unet_fire_kernel, H=H, W=W, C=C, PAD=PAD)

    img, s0, s1 = pl.pallas_call(
        kernel,
        out_shape=(jax.ShapeDtypeStruct((N, cout, HW), jnp.float32),
                   jax.ShapeDtypeStruct((N, C, HW), jnp.float32),
                   jax.ShapeDtypeStruct((N, C, HW), jnp.float32)),
        grid=(N,),
        in_specs=[act_spec(Cin), act_spec(C), act_spec(C)]
                 + [w_spec(w) for w in weights],
        out_specs=(act_spec(cout), act_spec(C), act_spec(C)),
        scratch_shapes=[pltpu.VMEM((C, HW + 2 * PAD), jnp.float32)],
        compiler_params=pltpu.CompilerParams(dimension_semantics=("parallel",)),
    )(x, h0p, h1p, *weights)

    img = img.reshape(N, cout, H, W)
    states = [s0.reshape(N, C, H, W), s1.reshape(N, C, H, W)]
    return img, states


# ----------------------------------------------------------------------------
# Parameters (raw HWIO form) + conversion to the fused-matmul form
# ----------------------------------------------------------------------------
def init_params(key, num_input_channels, base_num_channels, num_output_channels=1):
    keys = iter(jax.random.split(key, 40))
    C = base_num_channels

    def rnd(shape, scale=0.1):
        return scale * jax.random.normal(next(keys), shape, jnp.float32)

    def gru_params():
        return {
            "wzx": rnd((3, 3, C, C)), "wzh": rnd((3, 3, C, C)), "bz": rnd((C,)),
            "wrx": rnd((3, 3, C, C)), "wrh": rnd((3, 3, C, C)), "br": rnd((C,)),
            "wox": rnd((3, 3, C, C)), "woh": rnd((3, 3, C, C)), "bo": rnd((C,)),
        }

    return {
        "head_conv_w": rnd((3, 3, num_input_channels, C)), "head_conv_b": rnd((C,)),
        "head_gru": gru_params(),
        "rb0_w1": rnd((3, 3, C, C)), "rb0_b1": rnd((C,)),
        "rb0_w2": rnd((3, 3, C, C)), "rb0_b2": rnd((C,)),
        "rb0_gru": gru_params(),
        "rb1_w1": rnd((3, 3, C, C)), "rb1_b1": rnd((C,)),
        "rb1_w2": rnd((3, 3, C, C)), "rb1_b2": rnd((C,)),
        "pred_w": rnd((1, 1, C, num_output_channels)),
        "pred_b": jnp.full((num_output_channels,), 0.5, jnp.float32),  # bias.fill_(0.5)
    }


def prepare_params(raw):
    """HWIO conv weights -> (Cout, 9*C) im2col matrices; fuse GRU gate weights."""
    C = raw["head_conv_w"].shape[3]
    cin = raw["head_conv_w"].shape[2]

    def mat(w):
        kh, kw, ci, co = w.shape
        return jnp.transpose(w.reshape(kh * kw, ci, co), (2, 0, 1)).reshape(co, kh * kw * ci)

    # pad head input channels up to C (dead channels read zeros from the buffer)
    head_w = jnp.pad(raw["head_conv_w"], ((0, 0), (0, 0), (0, C - cin), (0, 0)))

    def gru_prep(g):
        return (mat(jnp.concatenate([g["wzx"], g["wrx"], g["wox"]], axis=3)),  # (3C, 9C)
                mat(jnp.concatenate([g["wzh"], g["wrh"]], axis=3)),            # (2C, 9C)
                mat(g["woh"]),                                                 # (C, 9C)
                jnp.concatenate([g["bz"], g["br"], g["bo"]])[:, None])         # (3C, 1)

    return {
        "head_w": mat(head_w), "head_b": raw["head_conv_b"][:, None],
        "g0": gru_prep(raw["head_gru"]),
        "rb0": (mat(raw["rb0_w1"]), raw["rb0_b1"][:, None],
                mat(raw["rb0_w2"]), raw["rb0_b2"][:, None]),
        "g1": gru_prep(raw["rb0_gru"]),
        "rb1": (mat(raw["rb1_w1"]), raw["rb1_b1"][:, None],
                mat(raw["rb1_w2"]), raw["rb1_b2"][:, None]),
        "pred_w": raw["pred_w"][0, 0].T,            # (cout, C)
        "pred_b": raw["pred_b"][:, None],           # (cout, 1)
    }


# ----------------------------------------------------------------------------
# Pure-JAX reference (PyTorch semantics) for the in-script correctness check
# ----------------------------------------------------------------------------
def _conv_ref(x, w_hwio, b, padding="SAME"):
    y = jax.lax.conv_general_dilated(
        x, w_hwio, window_strides=(1, 1), padding=padding,
        dimension_numbers=("NCHW", "HWIO", "NCHW"),
        precision=jax.lax.Precision.HIGHEST)
    return y + b[None, :, None, None]


def _res_ref(x, w1, b1, w2, b2):
    t = jax.nn.relu(_conv_ref(x, w1, b1))
    t = _conv_ref(t, w2, b2)
    return jax.nn.relu(t + x)


def _gru_ref(x, h, g):
    xh = jnp.concatenate([x, h], axis=1)
    z = jax.nn.sigmoid(_conv_ref(xh, jnp.concatenate([g["wzx"], g["wzh"]], axis=2), g["bz"]))
    r = jax.nn.sigmoid(_conv_ref(xh, jnp.concatenate([g["wrx"], g["wrh"]], axis=2), g["br"]))
    xhr = jnp.concatenate([x, r * h], axis=1)
    c = jnp.tanh(_conv_ref(xhr, jnp.concatenate([g["wox"], g["woh"]], axis=2), g["bo"]))
    return h * (1.0 - z) + c * z


def unet_fire_reference(raw, x, prev_states=None):
    C = raw["head_conv_w"].shape[3]
    N, _, H, W = x.shape
    if prev_states is None:
        prev_states = [None, None]

    def st(s):
        return jnp.zeros((N, C, H, W), jnp.float32) if s is None else s

    h = jax.nn.relu(_conv_ref(x, raw["head_conv_w"], raw["head_conv_b"]))
    s0 = _gru_ref(h, st(prev_states[0]), raw["head_gru"])
    r = _res_ref(s0, raw["rb0_w1"], raw["rb0_b1"], raw["rb0_w2"], raw["rb0_b2"])
    s1 = _gru_ref(r, st(prev_states[1]), raw["rb0_gru"])
    r = _res_ref(s1, raw["rb1_w1"], raw["rb1_b1"], raw["rb1_w2"], raw["rb1_b2"])
    img = _conv_ref(r, raw["pred_w"], raw["pred_b"], padding="VALID")
    return img, [s0, s1]


# ----------------------------------------------------------------------------
if __name__ == "__main__":
    key = jax.random.PRNGKey(0)
    k_param, k_x = jax.random.split(key)

    N, CIN, H, W = 2, 4, 16, 16
    BASE = 8
    COUT = 1

    raw = init_params(k_param, CIN, BASE, COUT)
    prep = prepare_params(raw)
    x = jax.random.normal(k_x, (N, CIN, H, W), jnp.float32)

    fwd = jax.jit(unet_fire_forward)

    # step 1: no previous recurrent state
    img, states = fwd(prep, x, None)
    jax.block_until_ready(img)
    jax.block_until_ready(states)

    # step 2: feed the recurrent state back in
    img2, states2 = fwd(prep, x, states)
    jax.block_until_ready(img2)

    # correctness check against the pure-JAX reference
    img_ref, states_ref = unet_fire_reference(raw, x, None)
    img2_ref, _ = unet_fire_reference(raw, x, states)

    def max_err(a, b):
        return float(jnp.max(jnp.abs(a - b)))

    err = max(max_err(img, img_ref),
              max_err(states[0], states_ref[0]),
              max_err(states[1], states_ref[1]),
              max_err(img2, img2_ref))
    assert err < 1e-2, f"kernel/reference mismatch: max abs err = {err}"

    assert img.shape == (N, COUT, H, W)
    assert len(states) == 2 and states[0].shape == (N, BASE, H, W)
    print("KERNEL_OK")
</pallas_src>

<mosaic_0001>
module attributes {stable_mosaic.version = 11 : i64} {
  func.func @_unet_fire_kernel(%arg0: i32, %arg1: memref<1x4x256xf32, #tpu.memory_space<vmem>>, %arg2: memref<1x8x256xf32, #tpu.memory_space<vmem>>, %arg3: memref<1x8x256xf32, #tpu.memory_space<vmem>>, %arg4: memref<8x72xf32, #tpu.memory_space<vmem>>, %arg5: memref<8x1xf32, #tpu.memory_space<vmem>>, %arg6: memref<24x72xf32, #tpu.memory_space<vmem>>, %arg7: memref<16x72xf32, #tpu.memory_space<vmem>>, %arg8: memref<8x72xf32, #tpu.memory_space<vmem>>, %arg9: memref<24x1xf32, #tpu.memory_space<vmem>>, %arg10: memref<8x72xf32, #tpu.memory_space<vmem>>, %arg11: memref<8x1xf32, #tpu.memory_space<vmem>>, %arg12: memref<8x72xf32, #tpu.memory_space<vmem>>, %arg13: memref<8x1xf32, #tpu.memory_space<vmem>>, %arg14: memref<24x72xf32, #tpu.memory_space<vmem>>, %arg15: memref<16x72xf32, #tpu.memory_space<vmem>>, %arg16: memref<8x72xf32, #tpu.memory_space<vmem>>, %arg17: memref<24x1xf32, #tpu.memory_space<vmem>>, %arg18: memref<8x72xf32, #tpu.memory_space<vmem>>, %arg19: memref<8x1xf32, #tpu.memory_space<vmem>>, %arg20: memref<8x72xf32, #tpu.memory_space<vmem>>, %arg21: memref<8x1xf32, #tpu.memory_space<vmem>>, %arg22: memref<1x8xf32, #tpu.memory_space<vmem>>, %arg23: memref<1x1xf32, #tpu.memory_space<vmem>>, %arg24: memref<1x1x256xf32, #tpu.memory_space<vmem>>, %arg25: memref<1x8x256xf32, #tpu.memory_space<vmem>>, %arg26: memref<1x8x256xf32, #tpu.memory_space<vmem>>, %arg27: memref<8x290xf32, #tpu.memory_space<vmem>>) attributes {dimension_semantics = [#tpu.dimension_semantics<parallel>], iteration_bounds = array<i64: 2>, scalar_prefetch = 0 : i64, scratch_operands = 1 : i64, tpu.core_type = #tpu.core_type<tc>, window_params = [{transform_indices = @transform_0, window_bounds = array<i64: 1, 4, 256>}, {transform_indices = @transform_1, window_bounds = array<i64: 1, 8, 256>}, {transform_indices = @transform_2, window_bounds = array<i64: 1, 8, 256>}, {pipeline_mode = #tpu.pipeline_mode<synchronous>, transform_indices = @transform_3, window_bounds = array<i64: 8, 72>}, {pipeline_mode = #tpu.pipeline_mode<synchronous>, transform_indices = @transform_4, window_bounds = array<i64: 8, 1>}, {pipeline_mode = #tpu.pipeline_mode<synchronous>, transform_indices = @transform_5, window_bounds = array<i64: 24, 72>}, {pipeline_mode = #tpu.pipeline_mode<synchronous>, transform_indices = @transform_6, window_bounds = array<i64: 16, 72>}, {pipeline_mode = #tpu.pipeline_mode<synchronous>, transform_indices = @transform_7, window_bounds = array<i64: 8, 72>}, {pipeline_mode = #tpu.pipeline_mode<synchronous>, transform_indices = @transform_8, window_bounds = array<i64: 24, 1>}, {pipeline_mode = #tpu.pipeline_mode<synchronous>, transform_indices = @transform_9, window_bounds = array<i64: 8, 72>}, {pipeline_mode = #tpu.pipeline_mode<synchronous>, transform_indices = @transform_10, window_bounds = array<i64: 8, 1>}, {pipeline_mode = #tpu.pipeline_mode<synchronous>, transform_indices = @transform_11, window_bounds = array<i64: 8, 72>}, {pipeline_mode = #tpu.pipeline_mode<synchronous>, transform_indices = @transform_12, window_bounds = array<i64: 8, 1>}, {pipeline_mode = #tpu.pipeline_mode<synchronous>, transform_indices = @transform_13, window_bounds = array<i64: 24, 72>}, {pipeline_mode = #tpu.pipeline_mode<synchronous>, transform_indices = @transform_14, window_bounds = array<i64: 16, 72>}, {pipeline_mode = #tpu.pipeline_mode<synchronous>, transform_indices = @transform_15, window_bounds = array<i64: 8, 72>}, {pipeline_mode = #tpu.pipeline_mode<synchronous>, transform_indices = @transform_16, window_bounds = array<i64: 24, 1>}, {pipeline_mode = #tpu.pipeline_mode<synchronous>, transform_indices = @transform_17, window_bounds = array<i64: 8, 72>}, {pipeline_mode = #tpu.pipeline_mode<synchronous>, transform_indices = @transform_18, window_bounds = array<i64: 8, 1>}, {pipeline_mode = #tpu.pipeline_mode<synchronous>, transform_indices = @transform_19, window_bounds = array<i64: 8, 72>}, {pipeline_mode = #tpu.pipeline_mode<synchronous>, transform_indices = @transform_20, window_bounds = array<i64: 8, 1>}, {pipeline_mode = #tpu.pipeline_mode<synchronous>, transform_indices = @transform_21, window_bounds = array<i64: 1, 8>}, {pipeline_mode = #tpu.pipeline_mode<synchronous>, transform_indices = @transform_22, window_bounds = array<i64: 1, 1>}, {transform_indices = @transform_23, window_bounds = array<i64: 1, 1, 256>}, {transform_indices = @transform_24, window_bounds = array<i64: 1, 8, 256>}, {transform_indices = @transform_25, window_bounds = array<i64: 1, 8, 256>}]} {
    %cst = arith.constant 0.000000e+00 : f32
    %0 = vector.broadcast %cst : f32 to vector<8x290xf32>
    %c0 = arith.constant 0 : index
    %c0_0 = arith.constant 0 : index
    %1 = vector.load %arg27[%c0, %c0_0] : memref<8x290xf32, #tpu.memory_space<vmem>>, vector<8x290xf32>
    tpu.vector_store %arg27[%c0, %c0_0], %0 {strides = array<i32>} : memref<8x290xf32, #tpu.memory_space<vmem>>, vector<8x290xf32>,
    %2 = tpu.iota {dimensions = array<i32: 1>} : vector<1x256xi32>
    %c16_i32 = arith.constant 16 : i32
    %c0_i32 = arith.constant 0 : i32
    %3 = arith.cmpi eq, %c16_i32, %c0_i32 : i32
    %c1_i32 = arith.constant 1 : i32
    %4 = arith.select %3, %c1_i32, %c16_i32 : i32
    %5 = vector.broadcast %4 : i32 to vector<1x256xi32>
    %6 = arith.remsi %2, %5 : vector<1x256xi32>
    %c0_i32_1 = arith.constant 0 : i32
    %7 = vector.broadcast %c0_i32_1 : i32 to vector<1x256xi32>
    %8 = arith.cmpi ne, %6, %7 : vector<1x256xi32>
    %c0_i32_2 = arith.constant 0 : i32
    %9 = vector.broadcast %c0_i32_2 : i32 to vector<1x256xi32>
    %10 = arith.cmpi slt, %6, %9 : vector<1x256xi32>
    %c0_i32_3 = arith.constant 0 : i32
    %11 = arith.cmpi slt, %4, %c0_i32_3 : i32
    %12 = vector.broadcast %11 : i1 to vector<1x256xi1>
    %13 = vector.broadcast %12 : vector<1x256xi1> to vector<1x256xi1>
    %14 = arith.xori %10, %13 : vector<1x256xi1>
    %15 = arith.andi %14, %8 : vector<1x256xi1>
    %16 = vector.broadcast %4 : i32 to vector<1x256xi32>
    %17 = arith.addi %6, %16 : vector<1x256xi32>
    %18 = arith.select %15, %17, %6 : vector<1x256xi1>, vector<1x256xi32>
    %c1_i32_4 = arith.constant 1 : i32
    %19 = vector.broadcast %c1_i32_4 : i32 to vector<1x256xi32>
    %20 = arith.cmpi sge, %18, %19 : vector<1x256xi32>
    %c14_i32 = arith.constant 14 : i32
    %21 = vector.broadcast %c14_i32 : i32 to vector<1x256xi32>
    %22 = arith.cmpi sle, %18, %21 : vector<1x256xi32>
    %c0_5 = arith.constant 0 : index
    %c0_6 = arith.constant 0 : index
    %c0_7 = arith.constant 0 : index
    %23 = vector.load %arg1[%c0_5, %c0_6, %c0_7] : memref<1x4x256xf32, #tpu.memory_space<vmem>>, vector<1x4x256xf32>
    %24 = vector.shape_cast %23 : vector<1x4x256xf32> to vector<4x256xf32>
    %c0_8 = arith.constant 0 : index
    %c0_9 = arith.constant 0 : index
    %25 = vector.load %arg4[%c0_8, %c0_9] : memref<8x72xf32, #tpu.memory_space<vmem>>, vector<8x72xf32>
    %c0_10 = arith.constant 0 : index
    %c17 = arith.constant 17 : index
    %26 = vector.load %arg27[%c0_10, %c17] : memref<8x290xf32, #tpu.memory_space<vmem>>, vector<4x256xf32>
    tpu.vector_store %arg27[%c0_10, %c17], %24 {strides = array<i32>} : memref<8x290xf32, #tpu.memory_space<vmem>>, vector<4x256xf32>,
    %c0_11 = arith.constant 0 : index
    %c0_12 = arith.constant 0 : index
    %27 = vector.load %arg27[%c0_11, %c0_12] : memref<8x290xf32, #tpu.memory_space<vmem>>, vector<8x256xf32>
    %cst_13 = arith.constant 0.000000e+00 : f32
    %28 = vector.shape_cast %20 : vector<1x256xi1> to vector<1x256xi1>
    %29 = vector.broadcast %28 : vector<1x256xi1> to vector<8x256xi1>
    %30 = vector.broadcast %cst_13 : f32 to vector<8x256xf32>
    %31 = arith.select %29, %27, %30 : vector<8x256xi1>, vector<8x256xf32>
    %c0_14 = arith.constant 0 : index
    %c1 = arith.constant 1 : index
    %32 = vector.load %arg27[%c0_14, %c1] : memref<8x290xf32, #tpu.memory_space<vmem>>, vector<8x256xf32>
    %c0_15 = arith.constant 0 : index
    %c2 = arith.constant 2 : index
    %33 = vector.load %arg27[%c0_15, %c2] : memref<8x290xf32, #tpu.memory_space<vmem>>, vector<8x256xf32>
    %cst_16 = arith.constant 0.000000e+00 : f32
    %34 = vector.shape_cast %22 : vector<1x256xi1> to vector<1x256xi1>
    %35 = vector.broadcast %34 : vector<1x256xi1> to vector<8x256xi1>
    %36 = vector.broadcast %cst_16 : f32 to vector<8x256xf32>
    %37 = arith.select %35, %33, %36 : vector<8x256xi1>, vector<8x256xf32>
    %c0_17 = arith.constant 0 : index
    %c16 = arith.constant 16 : index
    %38 = vector.load %arg27[%c0_17, %c16] : memref<8x290xf32, #tpu.memory_space<vmem>>, vector<8x256xf32>
    %cst_18 = arith.constant 0.000000e+00 : f32
    %39 = vector.shape_cast %20 : vector<1x256xi1> to vector<1x256xi1>
    %40 = vector.broadcast %39 : vector<1x256xi1> to vector<8x256xi1>
    %41 = vector.broadcast %cst_18 : f32 to vector<8x256xf32>
    %42 = arith.select %40, %38, %41 : vector<8x256xi1>, vector<8x256xf32>
    %c0_19 = arith.constant 0 : index
    %c17_20 = arith.constant 17 : index
    %43 = vector.load %arg27[%c0_19, %c17_20] : memref<8x290xf32, #tpu.memory_space<vmem>>, vector<8x256xf32>
    %c0_21 = arith.constant 0 : index
    %c18 = arith.constant 18 : index
    %44 = vector.load %arg27[%c0_21, %c18] : memref<8x290xf32, #tpu.memory_space<vmem>>, vector<8x256xf32>
    %cst_22 = arith.constant 0.000000e+00 : f32
    %45 = vector.shape_cast %22 : vector<1x256xi1> to vector<1x256xi1>
    %46 = vector.broadcast %45 : vector<1x256xi1> to vector<8x256xi1>
    %47 = vector.broadcast %cst_22 : f32 to vector<8x256xf32>
    %48 = arith.select %46, %44, %47 : vector<8x256xi1>, vector<8x256xf32>
    %c0_23 = arith.constant 0 : index
    %c32 = arith.constant 32 : index
    %49 = vector.load %arg27[%c0_23, %c32] : memref<8x290xf32, #tpu.memory_space<vmem>>, vector<8x256xf32>
    %cst_24 = arith.constant 0.000000e+00 : f32
    %50 = vector.shape_cast %20 : vector<1x256xi1> to vector<1x256xi1>
    %51 = vector.broadcast %50 : vector<1x256xi1> to vector<8x256xi1>
    %52 = vector.broadcast %cst_24 : f32 to vector<8x256xf32>
    %53 = arith.select %51, %49, %52 : vector<8x256xi1>, vector<8x256xf32>
    %c0_25 = arith.constant 0 : index
    %c33 = arith.constant 33 : index
    %54 = vector.load %arg27[%c0_25, %c33] : memref<8x290xf32, #tpu.memory_space<vmem>>, vector<8x256xf32>
    %c0_26 = arith.constant 0 : index
    %c34 = arith.constant 34 : index
    %55 = vector.load %arg27[%c0_26, %c34] : memref<8x290xf32, #tpu.memory_space<vmem>>, vector<8x256xf32>
    %cst_27 = arith.constant 0.000000e+00 : f32
    %56 = vector.shape_cast %22 : vector<1x256xi1> to vector<1x256xi1>
    %57 = vector.broadcast %56 : vector<1x256xi1> to vector<8x256xi1>
    %58 = vector.broadcast %cst_27 : f32 to vector<8x256xf32>
    %59 = arith.select %57, %55, %58 : vector<8x256xi1>, vector<8x256xf32>
    %60 = tpu.concatenate %31, %32, %37, %42, %43, %48, %53, %54, %59 in 0 : vector<8x256xf32>, vector<8x256xf32>, vector<8x256xf32>, vector<8x256xf32>, vector<8x256xf32>, vector<8x256xf32>, vector<8x256xf32>, vector<8x256xf32>, vector<8x256xf32> -> vector<72x256xf32>
    %cst_28 = arith.constant dense<0.000000e+00> : vector<8x256xf32>
    %61 = tpu.matmul %25, %60, %cst_28 {dimension_numbers = #tpu.dot_dimension_numbers<[1], [0], [0], [1], [0, 0, 1, 1], [], []>} : vector<8x72xf32>, vector<72x256xf32>, vector<8x256xf32> -> vector<8x256xf32>
    %c0_29 = arith.constant 0 : index
    %c0_30 = arith.constant 0 : index
    %62 = vector.load %arg5[%c0_29, %c0_30] : memref<8x1xf32, #tpu.memory_space<vmem>>, vector<8x1xf32>
    %63 = vector.broadcast %62 : vector<8x1xf32> to vector<8x256xf32>
    %64 = arith.addf %61, %63 : vector<8x256xf32>
    %cst_31 = arith.constant 0.000000e+00 : f32
    %65 = vector.broadcast %cst_31 : f32 to vector<8x256xf32>
    %66 = arith.maximumf %64, %65 : vector<8x256xf32>
    %c0_32 = arith.constant 0 : index
    %c0_33 = arith.constant 0 : index
    %c0_34 = arith.constant 0 : index
    %67 = vector.load %arg2[%c0_32, %c0_33, %c0_34] : memref<1x8x256xf32, #tpu.memory_space<vmem>>, vector<1x8x256xf32>
    %68 = vector.shape_cast %67 : vector<1x8x256xf32> to vector<8x256xf32>
    %c0_35 = arith.constant 0 : index
    %c0_36 = arith.constant 0 : index
    %69 = vector.load %arg6[%c0_35, %c0_36] : memref<24x72xf32, #tpu.memory_space<vmem>>, vector<24x72xf32>
    %c0_37 = arith.constant 0 : index
    %c17_38 = arith.constant 17 : index
    %70 = vector.load %arg27[%c0_37, %c17_38] : memref<8x290xf32, #tpu.memory_space<vmem>>, vector<8x256xf32>
    tpu.vector_store %arg27[%c0_37, %c17_38], %66 {strides = array<i32>} : memref<8x290xf32, #tpu.memory_space<vmem>>, vector<8x256xf32>,
    %c0_39 = arith.constant 0 : index
    %c0_40 = arith.constant 0 : index
    %71 = vector.load %arg27[%c0_39, %c0_40] : memref<8x290xf32, #tpu.memory_space<vmem>>, vector<8x256xf32>
    %cst_41 = arith.constant 0.000000e+00 : f32
    %72 = vector.shape_cast %20 : vector<1x256xi1> to vector<1x256xi1>
    %73 = vector.broadcast %72 : vector<1x256xi1> to vector<8x256xi1>
    %74 = vector.broadcast %cst_41 : f32 to vector<8x256xf32>
    %75 = arith.select %73, %71, %74 : vector<8x256xi1>, vector<8x256xf32>
    %c0_42 = arith.constant 0 : index
    %c1_43 = arith.constant 1 : index
    %76 = vector.load %arg27[%c0_42, %c1_43] : memref<8x290xf32, #tpu.memory_space<vmem>>, vector<8x256xf32>
    %c0_44 = arith.constant 0 : index
    %c2_45 = arith.constant 2 : index
    %77 = vector.load %arg27[%c0_44, %c2_45] : memref<8x290xf32, #tpu.memory_space<vmem>>, vector<8x256xf32>
    %cst_46 = arith.constant 0.000000e+00 : f32
    %78 = vector.shape_cast %22 : vector<1x256xi1> to vector<1x256xi1>
    %79 = vector.broadcast %78 : vector<1x256xi1> to vector<8x256xi1>
    %80 = vector.broadcast %cst_46 : f32 to vector<8x256xf32>
    %81 = arith.select %79, %77, %80 : vector<8x256xi1>, vector<8x256xf32>
    %c0_47 = arith.constant 0 : index
    %c16_48 = arith.constant 16 : index
    %82 = vector.load %arg27[%c0_47, %c16_48] : memref<8x290xf32, #tpu.memory_space<vmem>>, vector<8x256xf32>
    %cst_49 = arith.constant 0.000000e+00 : f32
    %83 = vector.shape_cast %20 : vector<1x256xi1> to vector<1x256xi1>
    %84 = vector.broadcast %83 : vector<1x256xi1> to vector<8x256xi1>
    %85 = vector.broadcast %cst_49 : f32 to vector<8x256xf32>
    %86 = arith.select %84, %82, %85 : vector<8x256xi1>, vector<8x256xf32>
    %c0_50 = arith.constant 0 : index
    %c17_51 = arith.constant 17 : index
    %87 = vector.load %arg27[%c0_50, %c17_51] : memref<8x290xf32, #tpu.memory_space<vmem>>, vector<8x256xf32>
    %c0_52 = arith.constant 0 : index
    %c18_53 = arith.constant 18 : index
    %88 = vector.load %arg27[%c0_52, %c18_53] : memref<8x290xf32, #tpu.memory_space<vmem>>, vector<8x256xf32>
    %cst_54 = arith.constant 0.000000e+00 : f32
    %89 = vector.shape_cast %22 : vector<1x256xi1> to vector<1x256xi1>
    %90 = vector.broadcast %89 : vector<1x256xi1> to vector<8x256xi1>
    %91 = vector.broadcast %cst_54 : f32 to vector<8x256xf32>
    %92 = arith.select %90, %88, %91 : vector<8x256xi1>, vector<8x256xf32>
    %c0_55 = arith.constant 0 : index
    %c32_56 = arith.constant 32 : index
    %93 = vector.load %arg27[%c0_55, %c32_56] : memref<8x290xf32, #tpu.memory_space<vmem>>, vector<8x256xf32>
    %cst_57 = arith.constant 0.000000e+00 : f32
    %94 = vector.shape_cast %20 : vector<1x256xi1> to vector<1x256xi1>
    %95 = vector.broadcast %94 : vector<1x256xi1> to vector<8x256xi1>
    %96 = vector.broadcast %cst_57 : f32 to vector<8x256xf32>
    %97 = arith.select %95, %93, %96 : vector<8x256xi1>, vector<8x256xf32>
    %c0_58 = arith.constant 0 : index
    %c33_59 = arith.constant 33 : index
    %98 = vector.load %arg27[%c0_58, %c33_59] : memref<8x290xf32, #tpu.memory_space<vmem>>, vector<8x256xf32>
    %c0_60 = arith.constant 0 : index
    %c34_61 = arith.constant 34 : index
    %99 = vector.load %arg27[%c0_60, %c34_61] : memref<8x290xf32, #tpu.memory_space<vmem>>, vector<8x256xf32>
    %cst_62 = arith.constant 0.000000e+00 : f32
    %100 = vector.shape_cast %22 : vector<1x256xi1> to vector<1x256xi1>
    %101 = vector.broadcast %100 : vector<1x256xi1> to vector<8x256xi1>
    %102 = vector.broadcast %cst_62 : f32 to vector<8x256xf32>
    %103 = arith.select %101, %99, %102 : vector<8x256xi1>, vector<8x256xf32>
    %104 = tpu.concatenate %75, %76, %81, %86, %87, %92, %97, %98, %103 in 0 : vector<8x256xf32>, vector<8x256xf32>, vector<8x256xf32>, vector<8x256xf32>, vector<8x256xf32>, vector<8x256xf32>, vector<8x256xf32>, vector<8x256xf32>, vector<8x256xf32> -> vector<72x256xf32>
    %cst_63 = arith.constant dense<0.000000e+00> : vector<24x256xf32>
    %105 = tpu.matmul %69, %104, %cst_63 {dimension_numbers = #tpu.dot_dimension_numbers<[1], [0], [0], [1], [0, 0, 1, 1], [], []>} : vector<24x72xf32>, vector<72x256xf32>, vector<24x256xf32> -> vector<24x256xf32>
    %c0_64 = arith.constant 0 : index
    %c0_65 = arith.constant 0 : index
    %106 = vector.load %arg9[%c0_64, %c0_65] : memref<24x1xf32, #tpu.memory_space<vmem>>, vector<24x1xf32>
    %107 = vector.broadcast %106 : vector<24x1xf32> to vector<24x256xf32>
    %108 = arith.addf %105, %107 : vector<24x256xf32>
    %c0_66 = arith.constant 0 : index
    %c0_67 = arith.constant 0 : index
    %109 = vector.load %arg7[%c0_66, %c0_67] : memref<16x72xf32, #tpu.memory_space<vmem>>, vector<16x72xf32>
    %c0_68 = arith.constant 0 : index
    %c17_69 = arith.constant 17 : index
    %110 = vector.load %arg27[%c0_68, %c17_69] : memref<8x290xf32, #tpu.memory_space<vmem>>, vector<8x256xf32>
    tpu.vector_store %arg27[%c0_68, %c17_69], %68 {strides = array<i32>} : memref<8x290xf32, #tpu.memory_space<vmem>>, vector<8x256xf32>,
    %c0_70 = arith.constant 0 : index
    %c0_71 = arith.constant 0 : index
    %111 = vector.load %arg27[%c0_70, %c0_71] : memref<8x290xf32, #tpu.memory_space<vmem>>, vector<8x256xf32>
    %cst_72 = arith.constant 0.000000e+00 : f32
    %112 = vector.shape_cast %20 : vector<1x256xi1> to vector<1x256xi1>
    %113 = vector.broadcast %112 : vector<1x256xi1> to vector<8x256xi1>
    %114 = vector.broadcast %cst_72 : f32 to vector<8x256xf32>
    %115 = arith.select %113, %111, %114 : vector<8x256xi1>, vector<8x256xf32>
    %c0_73 = arith.constant 0 : index
    %c1_74 = arith.constant 1 : index
    %116 = vector.load %arg27[%c0_73, %c1_74] : memref<8x290xf32, #tpu.memory_space<vmem>>, vector<8x256xf32>
    %c0_75 = arith.constant 0 : index
    %c2_76 = arith.constant 2 : index
    %117 = vector.load %arg27[%c0_75, %c2_76] : memref<8x290xf32, #tpu.memory_space<vmem>>, vector<8x256xf32>
    %cst_77 = arith.constant 0.000000e+00 : f32
    %118 = vector.shape_cast %22 : vector<1x256xi1> to vector<1x256xi1>
    %119 = vector.broadcast %118 : vector<1x256xi1> to vector<8x256xi1>
    %120 = vector.broadcast %cst_77 : f32 to vector<8x256xf32>
    %121 = arith.select %119, %117, %120 : vector<8x256xi1>, vector<8x256xf32>
    %c0_78 = arith.constant 0 : index
    %c16_79 = arith.constant 16 : index
    %122 = vector.load %arg27[%c0_78, %c16_79] : memref<8x290xf32, #tpu.memory_space<vmem>>, vector<8x256xf32>
    %cst_80 = arith.constant 0.000000e+00 : f32
    %123 = vector.shape_cast %20 : vector<1x256xi1> to vector<1x256xi1>
    %124 = vector.broadcast %123 : vector<1x256xi1> to vector<8x256xi1>
    %125 = vector.broadcast %cst_80 : f32 to vector<8x256xf32>
    %126 = arith.select %124, %122, %125 : vector<8x256xi1>, vector<8x256xf32>
    %c0_81 = arith.constant 0 : index
    %c17_82 = arith.constant 17 : index
    %127 = vector.load %arg27[%c0_81, %c17_82] : memref<8x290xf32, #tpu.memory_space<vmem>>, vector<8x256xf32>
    %c0_83 = arith.constant 0 : index
    %c18_84 = arith.constant 18 : index
    %128 = vector.load %arg27[%c0_83, %c18_84] : memref<8x290xf32, #tpu.memory_space<vmem>>, vector<8x256xf32>
    %cst_85 = arith.constant 0.000000e+00 : f32
    %129 = vector.shape_cast %22 : vector<1x256xi1> to vector<1x256xi1>
    %130 = vector.broadcast %129 : vector<1x256xi1> to vector<8x256xi1>
    %131 = vector.broadcast %cst_85 : f32 to vector<8x256xf32>
    %132 = arith.select %130, %128, %131 : vector<8x256xi1>, vector<8x256xf32>
    %c0_86 = arith.constant 0 : index
    %c32_87 = arith.constant 32 : index
    %133 = vector.load %arg27[%c0_86, %c32_87] : memref<8x290xf32, #tpu.memory_space<vmem>>, vector<8x256xf32>
    %cst_88 = arith.constant 0.000000e+00 : f32
    %134 = vector.shape_cast %20 : vector<1x256xi1> to vector<1x256xi1>
    %135 = vector.broadcast %134 : vector<1x256xi1> to vector<8x256xi1>
    %136 = vector.broadcast %cst_88 : f32 to vector<8x256xf32>
    %137 = arith.select %135, %133, %136 : vector<8x256xi1>, vector<8x256xf32>
    %c0_89 = arith.constant 0 : index
    %c33_90 = arith.constant 33 : index
    %138 = vector.load %arg27[%c0_89, %c33_90] : memref<8x290xf32, #tpu.memory_space<vmem>>, vector<8x256xf32>
    %c0_91 = arith.constant 0 : index
    %c34_92 = arith.constant 34 : index
    %139 = vector.load %arg27[%c0_91, %c34_92] : memref<8x290xf32, #tpu.memory_space<vmem>>, vector<8x256xf32>
    %cst_93 = arith.constant 0.000000e+00 : f32
    %140 = vector.shape_cast %22 : vector<1x256xi1> to vector<1x256xi1>
    %141 = vector.broadcast %140 : vector<1x256xi1> to vector<8x256xi1>
    %142 = vector.broadcast %cst_93 : f32 to vector<8x256xf32>
    %143 = arith.select %141, %139, %142 : vector<8x256xi1>, vector<8x256xf32>
    %144 = tpu.concatenate %115, %116, %121, %126, %127, %132, %137, %138, %143 in 0 : vector<8x256xf32>, vector<8x256xf32>, vector<8x256xf32>, vector<8x256xf32>, vector<8x256xf32>, vector<8x256xf32>, vector<8x256xf32>, vector<8x256xf32>, vector<8x256xf32> -> vector<72x256xf32>
    %cst_94 = arith.constant dense<0.000000e+00> : vector<16x256xf32>
    %145 = tpu.matmul %109, %144, %cst_94 {dimension_numbers = #tpu.dot_dimension_numbers<[1], [0], [0], [1], [0, 0, 1, 1], [], []>} : vector<16x72xf32>, vector<72x256xf32>, vector<16x256xf32> -> vector<16x256xf32>
    %146 = vector.extract_strided_slice %108 {offsets = [0, 0], sizes = [8, 256], strides = [1, 1]} : vector<24x256xf32> to vector<8x256xf32>
    %147 = vector.extract_strided_slice %145 {offsets = [0, 0], sizes = [8, 256], strides = [1, 1]} : vector<16x256xf32> to vector<8x256xf32>
    %148 = arith.addf %146, %147 : vector<8x256xf32>
    %149 = arith.negf %148 : vector<8x256xf32>
    %150 = math.exp %149 : vector<8x256xf32>
    %cst_95 = arith.constant 1.000000e+00 : f32
    %151 = vector.broadcast %cst_95 : f32 to vector<8x256xf32>
    %152 = arith.addf %151, %150 : vector<8x256xf32>
    %153 = arith.divf %151, %152 : vector<8x256xf32>
    %154 = vector.extract_strided_slice %108 {offsets = [8, 0], sizes = [8, 256], strides = [1, 1]} : vector<24x256xf32> to vector<8x256xf32>
    %155 = vector.extract_strided_slice %145 {offsets = [8, 0], sizes = [8, 256], strides = [1, 1]} : vector<16x256xf32> to vector<8x256xf32>
    %156 = arith.addf %154, %155 : vector<8x256xf32>
    %157 = arith.negf %156 : vector<8x256xf32>
    %158 = math.exp %157 : vector<8x256xf32>
    %cst_96 = arith.constant 1.000000e+00 : f32
    %159 = vector.broadcast %cst_96 : f32 to vector<8x256xf32>
    %160 = arith.addf %159, %158 : vector<8x256xf32>
    %161 = arith.divf %159, %160 : vector<8x256xf32>
    %162 = vector.extract_strided_slice %108 {offsets = [16, 0], sizes = [8, 256], strides = [1, 1]} : vector<24x256xf32> to vector<8x256xf32>
    %c0_97 = arith.constant 0 : index
    %c0_98 = arith.constant 0 : index
    %163 = vector.load %arg8[%c0_97, %c0_98] : memref<8x72xf32, #tpu.memory_space<vmem>>, vector<8x72xf32>
    %164 = arith.mulf %68, %161 : vector<8x256xf32>
    %c0_99 = arith.constant 0 : index
    %c17_100 = arith.constant 17 : index
    %165 = vector.load %arg27[%c0_99, %c17_100] : memref<8x290xf32, #tpu.memory_space<vmem>>, vector<8x256xf32>
    tpu.vector_store %arg27[%c0_99, %c17_100], %164 {strides = array<i32>} : memref<8x290xf32, #tpu.memory_space<vmem>>, vector<8x256xf32>,
    %c0_101 = arith.constant 0 : index
    %c0_102 = arith.constant 0 : index
    %166 = vector.load %arg27[%c0_101, %c0_102] : memref<8x290xf32, #tpu.memory_space<vmem>>, vector<8x256xf32>
    %cst_103 = arith.constant 0.000000e+00 : f32
    %167 = vector.shape_cast %20 : vector<1x256xi1> to vector<1x256xi1>
    %168 = vector.broadcast %167 : vector<1x256xi1> to vector<8x256xi1>
    %169 = vector.broadcast %cst_103 : f32 to vector<8x256xf32>
    %170 = arith.select %168, %166, %169 : vector<8x256xi1>, vector<8x256xf32>
    %c0_104 = arith.constant 0 : index
    %c1_105 = arith.constant 1 : index
    %171 = vector.load %arg27[%c0_104, %c1_105] : memref<8x290xf32, #tpu.memory_space<vmem>>, vector<8x256xf32>
    %c0_106 = arith.constant 0 : index
    %c2_107 = arith.constant 2 : index
    %172 = vector.load %arg27[%c0_106, %c2_107] : memref<8x290xf32, #tpu.memory_space<vmem>>, vector<8x256xf32>
    %cst_108 = arith.constant 0.000000e+00 : f32
    %173 = vector.shape_cast %22 : vector<1x256xi1> to vector<1x256xi1>
    %174 = vector.broadcast %173 : vector<1x256xi1> to vector<8x256xi1>
    %175 = vector.broadcast %cst_108 : f32 to vector<8x256xf32>
    %176 = arith.select %174, %172, %175 : vector<8x256xi1>, vector<8x256xf32>
    %c0_109 = arith.constant 0 : index
    %c16_110 = arith.constant 16 : index
    %177 = vector.load %arg27[%c0_109, %c16_110] : memref<8x290xf32, #tpu.memory_space<vmem>>, vector<8x256xf32>
    %cst_111 = arith.constant 0.000000e+00 : f32
    %178 = vector.shape_cast %20 : vector<1x256xi1> to vector<1x256xi1>
    %179 = vector.broadcast %178 : vector<1x256xi1> to vector<8x256xi1>
    %180 = vector.broadcast %cst_111 : f32 to vector<8x256xf32>
    %181 = arith.select %179, %177, %180 : vector<8x256xi1>, vector<8x256xf32>
    %c0_112 = arith.constant 0 : index
    %c17_113 = arith.constant 17 : index
    %182 = vector.load %arg27[%c0_112, %c17_113] : memref<8x290xf32, #tpu.memory_space<vmem>>, vector<8x256xf32>
    %c0_114 = arith.constant 0 : index
    %c18_115 = arith.constant 18 : index
    %183 = vector.load %arg27[%c0_114, %c18_115] : memref<8x290xf32, #tpu.memory_space<vmem>>, vector<8x256xf32>
    %cst_116 = arith.constant 0.000000e+00 : f32
    %184 = vector.shape_cast %22 : vector<1x256xi1> to vector<1x256xi1>
    %185 = vector.broadcast %184 : vector<1x256xi1> to vector<8x256xi1>
    %186 = vector.broadcast %cst_116 : f32 to vector<8x256xf32>
    %187 = arith.select %185, %183, %186 : vector<8x256xi1>, vector<8x256xf32>
    %c0_117 = arith.constant 0 : index
    %c32_118 = arith.constant 32 : index
    %188 = vector.load %arg27[%c0_117, %c32_118] : memref<8x290xf32, #tpu.memory_space<vmem>>, vector<8x256xf32>
    %cst_119 = arith.constant 0.000000e+00 : f32
    %189 = vector.shape_cast %20 : vector<1x256xi1> to vector<1x256xi1>
    %190 = vector.broadcast %189 : vector<1x256xi1> to vector<8x256xi1>
    %191 = vector.broadcast %cst_119 : f32 to vector<8x256xf32>
    %192 = arith.select %190, %188, %191 : vector<8x256xi1>, vector<8x256xf32>
    %c0_120 = arith.constant 0 : index
    %c33_121 = arith.constant 33 : index
    %193 = vector.load %arg27[%c0_120, %c33_121] : memref<8x290xf32, #tpu.memory_space<vmem>>, vector<8x256xf32>
    %c0_122 = arith.constant 0 : index
    %c34_123 = arith.constant 34 : index
    %194 = vector.load %arg27[%c0_122, %c34_123] : memref<8x290xf32, #tpu.memory_space<vmem>>, vector<8x256xf32>
    %cst_124 = arith.constant 0.000000e+00 : f32
    %195 = vector.shape_cast %22 : vector<1x256xi1> to vector<1x256xi1>
    %196 = vector.broadcast %195 : vector<1x256xi1> to vector<8x256xi1>
    %197 = vector.broadcast %cst_124 : f32 to vector<8x256xf32>
    %198 = arith.select %196, %194, %197 : vector<8x256xi1>, vector<8x256xf32>
    %199 = tpu.concatenate %170, %171, %176, %181, %182, %187, %192, %193, %198 in 0 : vector<8x256xf32>, vector<8x256xf32>, vector<8x256xf32>, vector<8x256xf32>, vector<8x256xf32>, vector<8x256xf32>, vector<8x256xf32>, vector<8x256xf32>, vector<8x256xf32> -> vector<72x256xf32>
    %cst_125 = arith.constant dense<0.000000e+00> : vector<8x256xf32>
    %200 = tpu.matmul %163, %199, %cst_125 {dimension_numbers = #tpu.dot_dimension_numbers<[1], [0], [0], [1], [0, 0, 1, 1], [], []>} : vector<8x72xf32>, vector<72x256xf32>, vector<8x256xf32> -> vector<8x256xf32>
    %201 = arith.addf %162, %200 : vector<8x256xf32>
    %202 = math.tanh %201 : vector<8x256xf32>
    %cst_126 = arith.constant 1.000000e+00 : f32
    %203 = vector.broadcast %cst_126 : f32 to vector<8x256xf32>
    %204 = arith.subf %203, %153 : vector<8x256xf32>
    %205 = arith.mulf %68, %204 : vector<8x256xf32>
    %206 = arith.mulf %202, %153 : vector<8x256xf32>
    %207 = arith.addf %205, %206 : vector<8x256xf32>
    %c0_127 = arith.constant 0 : index
    %c0_128 = arith.constant 0 : index
    %c0_129 = arith.constant 0 : index
    %208 = vector.load %arg25[%c0_127, %c0_128, %c0_129] : memref<1x8x256xf32, #tpu.memory_space<vmem>>, vector<1x8x256xf32>
    %209 = vector.shape_cast %208 : vector<1x8x256xf32> to vector<8x256xf32>
    %210 = vector.shape_cast %207 : vector<8x256xf32> to vector<1x8x256xf32>
    tpu.vector_store %arg25[%c0_127, %c0_128, %c0_129], %210 {strides = array<i32>} : memref<1x8x256xf32, #tpu.memory_space<vmem>>, vector<1x8x256xf32>,
    %c0_130 = arith.constant 0 : index
    %c0_131 = arith.constant 0 : index
    %211 = vector.load %arg10[%c0_130, %c0_131] : memref<8x72xf32, #tpu.memory_space<vmem>>, vector<8x72xf32>
    %c0_132 = arith.constant 0 : index
    %c17_133 = arith.constant 17 : index
    %212 = vector.load %arg27[%c0_132, %c17_133] : memref<8x290xf32, #tpu.memory_space<vmem>>, vector<8x256xf32>
    tpu.vector_store %arg27[%c0_132, %c17_133], %207 {strides = array<i32>} : memref<8x290xf32, #tpu.memory_space<vmem>>, vector<8x256xf32>,
    %c0_134 = arith.constant 0 : index
    %c0_135 = arith.constant 0 : index
    %213 = vector.load %arg27[%c0_134, %c0_135] : memref<8x290xf32, #tpu.memory_space<vmem>>, vector<8x256xf32>
    %cst_136 = arith.constant 0.000000e+00 : f32
    %214 = vector.shape_cast %20 : vector<1x256xi1> to vector<1x256xi1>
    %215 = vector.broadcast %214 : vector<1x256xi1> to vector<8x256xi1>
    %216 = vector.broadcast %cst_136 : f32 to vector<8x256xf32>
    %217 = arith.select %215, %213, %216 : vector<8x256xi1>, vector<8x256xf32>
    %c0_137 = arith.constant 0 : index
    %c1_138 = arith.constant 1 : index
    %218 = vector.load %arg27[%c0_137, %c1_138] : memref<8x290xf32, #tpu.memory_space<vmem>>, vector<8x256xf32>
    %c0_139 = arith.constant 0 : index
    %c2_140 = arith.constant 2 : index
    %219 = vector.load %arg27[%c0_139, %c2_140] : memref<8x290xf32, #tpu.memory_space<vmem>>, vector<8x256xf32>
    %cst_141 = arith.constant 0.000000e+00 : f32
    %220 = vector.shape_cast %22 : vector<1x256xi1> to vector<1x256xi1>
    %221 = vector.broadcast %220 : vector<1x256xi1> to vector<8x256xi1>
    %222 = vector.broadcast %cst_141 : f32 to vector<8x256xf32>
    %223 = arith.select %221, %219, %222 : vector<8x256xi1>, vector<8x256xf32>
    %c0_142 = arith.constant 0 : index
    %c16_143 = arith.constant 16 : index
    %224 = vector.load %arg27[%c0_142, %c16_143] : memref<8x290xf32, #tpu.memory_space<vmem>>, vector<8x256xf32>
    %cst_144 = arith.constant 0.000000e+00 : f32
    %225 = vector.shape_cast %20 : vector<1x256xi1> to vector<1x256xi1>
    %226 = vector.broadcast %225 : vector<1x256xi1> to vector<8x256xi1>
    %227 = vector.broadcast %cst_144 : f32 to vector<8x256xf32>
    %228 = arith.select %226, %224, %227 : vector<8x256xi1>, vector<8x256xf32>
    %c0_145 = arith.constant 0 : index
    %c17_146 = arith.constant 17 : index
    %229 = vector.load %arg27[%c0_145, %c17_146] : memref<8x290xf32, #tpu.memory_space<vmem>>, vector<8x256xf32>
    %c0_147 = arith.constant 0 : index
    %c18_148 = arith.constant 18 : index
    %230 = vector.load %arg27[%c0_147, %c18_148] : memref<8x290xf32, #tpu.memory_space<vmem>>, vector<8x256xf32>
    %cst_149 = arith.constant 0.000000e+00 : f32
    %231 = vector.shape_cast %22 : vector<1x256xi1> to vector<1x256xi1>
    %232 = vector.broadcast %231 : vector<1x256xi1> to vector<8x256xi1>
    %233 = vector.broadcast %cst_149 : f32 to vector<8x256xf32>
    %234 = arith.select %232, %230, %233 : vector<8x256xi1>, vector<8x256xf32>
    %c0_150 = arith.constant 0 : index
    %c32_151 = arith.constant 32 : index
    %235 = vector.load %arg27[%c0_150, %c32_151] : memref<8x290xf32, #tpu.memory_space<vmem>>, vector<8x256xf32>
    %cst_152 = arith.constant 0.000000e+00 : f32
    %236 = vector.shape_cast %20 : vector<1x256xi1> to vector<1x256xi1>
    %237 = vector.broadcast %236 : vector<1x256xi1> to vector<8x256xi1>
    %238 = vector.broadcast %cst_152 : f32 to vector<8x256xf32>
    %239 = arith.select %237, %235, %238 : vector<8x256xi1>, vector<8x256xf32>
    %c0_153 = arith.constant 0 : index
    %c33_154 = arith.constant 33 : index
    %240 = vector.load %arg27[%c0_153, %c33_154] : memref<8x290xf32, #tpu.memory_space<vmem>>, vector<8x256xf32>
    %c0_155 = arith.constant 0 : index
    %c34_156 = arith.constant 34 : index
    %241 = vector.load %arg27[%c0_155, %c34_156] : memref<8x290xf32, #tpu.memory_space<vmem>>, vector<8x256xf32>
    %cst_157 = arith.constant 0.000000e+00 : f32
    %242 = vector.shape_cast %22 : vector<1x256xi1> to vector<1x256xi1>
    %243 = vector.broadcast %242 : vector<1x256xi1> to vector<8x256xi1>
    %244 = vector.broadcast %cst_157 : f32 to vector<8x256xf32>
    %245 = arith.select %243, %241, %244 : vector<8x256xi1>, vector<8x256xf32>
    %246 = tpu.concatenate %217, %218, %223, %228, %229, %234, %239, %240, %245 in 0 : vector<8x256xf32>, vector<8x256xf32>, vector<8x256xf32>, vector<8x256xf32>, vector<8x256xf32>, vector<8x256xf32>, vector<8x256xf32>, vector<8x256xf32>, vector<8x256xf32> -> vector<72x256xf32>
    %cst_158 = arith.constant dense<0.000000e+00> : vector<8x256xf32>
    %247 = tpu.matmul %211, %246, %cst_158 {dimension_numbers = #tpu.dot_dimension_numbers<[1], [0], [0], [1], [0, 0, 1, 1], [], []>} : vector<8x72xf32>, vector<72x256xf32>, vector<8x256xf32> -> vector<8x256xf32>
    %c0_159 = arith.constant 0 : index
    %c0_160 = arith.constant 0 : index
    %248 = vector.load %arg11[%c0_159, %c0_160] : memref<8x1xf32, #tpu.memory_space<vmem>>, vector<8x1xf32>
    %249 = vector.broadcast %248 : vector<8x1xf32> to vector<8x256xf32>
    %250 = arith.addf %247, %249 : vector<8x256xf32>
    %cst_161 = arith.constant 0.000000e+00 : f32
    %251 = vector.broadcast %cst_161 : f32 to vector<8x256xf32>
    %252 = arith.maximumf %250, %251 : vector<8x256xf32>
    %c0_162 = arith.constant 0 : index
    %c0_163 = arith.constant 0 : index
    %253 = vector.load %arg12[%c0_162, %c0_163] : memref<8x72xf32, #tpu.memory_space<vmem>>, vector<8x72xf32>
    %c0_164 = arith.constant 0 : index
    %c17_165 = arith.constant 17 : index
    %254 = vector.load %arg27[%c0_164, %c17_165] : memref<8x290xf32, #tpu.memory_space<vmem>>, vector<8x256xf32>
    tpu.vector_store %arg27[%c0_164, %c17_165], %252 {strides = array<i32>} : memref<8x290xf32, #tpu.memory_space<vmem>>, vector<8x256xf32>,
    %c0_166 = arith.constant 0 : index
    %c0_167 = arith.constant 0 : index
    %255 = vector.load %arg27[%c0_166, %c0_167] : memref<8x290xf32, #tpu.memory_space<vmem>>, vector<8x256xf32>
    %cst_168 = arith.constant 0.000000e+00 : f32
    %256 = vector.shape_cast %20 : vector<1x256xi1> to vector<1x256xi1>
    %257 = vector.broadcast %256 : vector<1x256xi1> to vector<8x256xi1>
    %258 = vector.broadcast %cst_168 : f32 to vector<8x256xf32>
    %259 = arith.select %257, %255, %258 : vector<8x256xi1>, vector<8x256xf32>
    %c0_169 = arith.constant 0 : index
    %c1_170 = arith.constant 1 : index
    %260 = vector.load %arg27[%c0_169, %c1_170] : memref<8x290xf32, #tpu.memory_space<vmem>>, vector<8x256xf32>
    %c0_171 = arith.constant 0 : index
    %c2_172 = arith.constant 2 : index
    %261 = vector.load %arg27[%c0_171, %c2_172] : memref<8x290xf32, #tpu.memory_space<vmem>>, vector<8x256xf32>
    %cst_173 = arith.constant 0.000000e+00 : f32
    %262 = vector.shape_cast %22 : vector<1x256xi1> to vector<1x256xi1>
    %263 = vector.broadcast %262 : vector<1x256xi1> to vector<8x256xi1>
    %264 = vector.broadcast %cst_173 : f32 to vector<8x256xf32>
    %265 = arith.select %263, %261, %264 : vector<8x256xi1>, vector<8x256xf32>
    %c0_174 = arith.constant 0 : index
    %c16_175 = arith.constant 16 : index
    %266 = vector.load %arg27[%c0_174, %c16_175] : memref<8x290xf32, #tpu.memory_space<vmem>>, vector<8x256xf32>
    %cst_176 = arith.constant 0.000000e+00 : f32
    %267 = vector.shape_cast %20 : vector<1x256xi1> to vector<1x256xi1>
    %268 = vector.broadcast %267 : vector<1x256xi1> to vector<8x256xi1>
    %269 = vector.broadcast %cst_176 : f32 to vector<8x256xf32>
    %270 = arith.select %268, %266, %269 : vector<8x256xi1>, vector<8x256xf32>
    %c0_177 = arith.constant 0 : index
    %c17_178 = arith.constant 17 : index
    %271 = vector.load %arg27[%c0_177, %c17_178] : memref<8x290xf32, #tpu.memory_space<vmem>>, vector<8x256xf32>
    %c0_179 = arith.constant 0 : index
    %c18_180 = arith.constant 18 : index
    %272 = vector.load %arg27[%c0_179, %c18_180] : memref<8x290xf32, #tpu.memory_space<vmem>>, vector<8x256xf32>
    %cst_181 = arith.constant 0.000000e+00 : f32
    %273 = vector.shape_cast %22 : vector<1x256xi1> to vector<1x256xi1>
    %274 = vector.broadcast %273 : vector<1x256xi1> to vector<8x256xi1>
    %275 = vector.broadcast %cst_181 : f32 to vector<8x256xf32>
    %276 = arith.select %274, %272, %275 : vector<8x256xi1>, vector<8x256xf32>
    %c0_182 = arith.constant 0 : index
    %c32_183 = arith.constant 32 : index
    %277 = vector.load %arg27[%c0_182, %c32_183] : memref<8x290xf32, #tpu.memory_space<vmem>>, vector<8x256xf32>
    %cst_184 = arith.constant 0.000000e+00 : f32
    %278 = vector.shape_cast %20 : vector<1x256xi1> to vector<1x256xi1>
    %279 = vector.broadcast %278 : vector<1x256xi1> to vector<8x256xi1>
    %280 = vector.broadcast %cst_184 : f32 to vector<8x256xf32>
    %281 = arith.select %279, %277, %280 : vector<8x256xi1>, vector<8x256xf32>
    %c0_185 = arith.constant 0 : index
    %c33_186 = arith.constant 33 : index
    %282 = vector.load %arg27[%c0_185, %c33_186] : memref<8x290xf32, #tpu.memory_space<vmem>>, vector<8x256xf32>
    %c0_187 = arith.constant 0 : index
    %c34_188 = arith.constant 34 : index
    %283 = vector.load %arg27[%c0_187, %c34_188] : memref<8x290xf32, #tpu.memory_space<vmem>>, vector<8x256xf32>
    %cst_189 = arith.constant 0.000000e+00 : f32
    %284 = vector.shape_cast %22 : vector<1x256xi1> to vector<1x256xi1>
    %285 = vector.broadcast %284 : vector<1x256xi1> to vector<8x256xi1>
    %286 = vector.broadcast %cst_189 : f32 to vector<8x256xf32>
    %287 = arith.select %285, %283, %286 : vector<8x256xi1>, vector<8x256xf32>
    %288 = tpu.concatenate %259, %260, %265, %270, %271, %276, %281, %282, %287 in 0 : vector<8x256xf32>, vector<8x256xf32>, vector<8x256xf32>, vector<8x256xf32>, vector<8x256xf32>, vector<8x256xf32>, vector<8x256xf32>, vector<8x256xf32>, vector<8x256xf32> -> vector<72x256xf32>
    %cst_190 = arith.constant dense<0.000000e+00> : vector<8x256xf32>
    %289 = tpu.matmul %253, %288, %cst_190 {dimension_numbers = #tpu.dot_dimension_numbers<[1], [0], [0], [1], [0, 0, 1, 1], [], []>} : vector<8x72xf32>, vector<72x256xf32>, vector<8x256xf32> -> vector<8x256xf32>
    %c0_191 = arith.constant 0 : index
    %c0_192 = arith.constant 0 : index
    %290 = vector.load %arg13[%c0_191, %c0_192] : memref<8x1xf32, #tpu.memory_space<vmem>>, vector<8x1xf32>
    %291 = vector.broadcast %290 : vector<8x1xf32> to vector<8x256xf32>
    %292 = arith.addf %289, %291 : vector<8x256xf32>
    %293 = arith.addf %292, %207 : vector<8x256xf32>
    %cst_193 = arith.constant 0.000000e+00 : f32
    %294 = vector.broadcast %cst_193 : f32 to vector<8x256xf32>
    %295 = arith.maximumf %293, %294 : vector<8x256xf32>
    %c0_194 = arith.constant 0 : index
    %c0_195 = arith.constant 0 : index
    %c0_196 = arith.constant 0 : index
    %296 = vector.load %arg3[%c0_194, %c0_195, %c0_196] : memref<1x8x256xf32, #tpu.memory_space<vmem>>, vector<1x8x256xf32>
    %297 = vector.shape_cast %296 : vector<1x8x256xf32> to vector<8x256xf32>
    %c0_197 = arith.constant 0 : index
    %c0_198 = arith.constant 0 : index
    %298 = vector.load %arg14[%c0_197, %c0_198] : memref<24x72xf32, #tpu.memory_space<vmem>>, vector<24x72xf32>
    %c0_199 = arith.constant 0 : index
    %c17_200 = arith.constant 17 : index
    %299 = vector.load %arg27[%c0_199, %c17_200] : memref<8x290xf32, #tpu.memory_space<vmem>>, vector<8x256xf32>
    tpu.vector_store %arg27[%c0_199, %c17_200], %295 {strides = array<i32>} : memref<8x290xf32, #tpu.memory_space<vmem>>, vector<8x256xf32>,
    %c0_201 = arith.constant 0 : index
    %c0_202 = arith.constant 0 : index
    %300 = vector.load %arg27[%c0_201, %c0_202] : memref<8x290xf32, #tpu.memory_space<vmem>>, vector<8x256xf32>
    %cst_203 = arith.constant 0.000000e+00 : f32
    %301 = vector.shape_cast %20 : vector<1x256xi1> to vector<1x256xi1>
    %302 = vector.broadcast %301 : vector<1x256xi1> to vector<8x256xi1>
    %303 = vector.broadcast %cst_203 : f32 to vector<8x256xf32>
    %304 = arith.select %302, %300, %303 : vector<8x256xi1>, vector<8x256xf32>
    %c0_204 = arith.constant 0 : index
    %c1_205 = arith.constant 1 : index
    %305 = vector.load %arg27[%c0_204, %c1_205] : memref<8x290xf32, #tpu.memory_space<vmem>>, vector<8x256xf32>
    %c0_206 = arith.constant 0 : index
    %c2_207 = arith.constant 2 : index
    %306 = vector.load %arg27[%c0_206, %c2_207] : memref<8x290xf32, #tpu.memory_space<vmem>>, vector<8x256xf32>
    %cst_208 = arith.constant 0.000000e+00 : f32
    %307 = vector.shape_cast %22 : vector<1x256xi1> to vector<1x256xi1>
    %308 = vector.broadcast %307 : vector<1x256xi1> to vector<8x256xi1>
    %309 = vector.broadcast %cst_208 : f32 to vector<8x256xf32>
    %310 = arith.select %308, %306, %309 : vector<8x256xi1>, vector<8x256xf32>
    %c0_209 = arith.constant 0 : index
    %c16_210 = arith.constant 16 : index
    %311 = vector.load %arg27[%c0_209, %c16_210] : memref<8x290xf32, #tpu.memory_space<vmem>>, vector<8x256xf32>
    %cst_211 = arith.constant 0.000000e+00 : f32
    %312 = vector.shape_cast %20 : vector<1x256xi1> to vector<1x256xi1>
    %313 = vector.broadcast %312 : vector<1x256xi1> to vector<8x256xi1>
    %314 = vector.broadcast %cst_211 : f32 to vector<8x256xf32>
    %315 = arith.select %313, %311, %314 : vector<8x256xi1>, vector<8x256xf32>
    %c0_212 = arith.constant 0 : index
    %c17_213 = arith.constant 17 : index
    %316 = vector.load %arg27[%c0_212, %c17_213] : memref<8x290xf32, #tpu.memory_space<vmem>>, vector<8x256xf32>
    %c0_214 = arith.constant 0 : index
    %c18_215 = arith.constant 18 : index
    %317 = vector.load %arg27[%c0_214, %c18_215] : memref<8x290xf32, #tpu.memory_space<vmem>>, vector<8x256xf32>
    %cst_216 = arith.constant 0.000000e+00 : f32
    %318 = vector.shape_cast %22 : vector<1x256xi1> to vector<1x256xi1>
    %319 = vector.broadcast %318 : vector<1x256xi1> to vector<8x256xi1>
    %320 = vector.broadcast %cst_216 : f32 to vector<8x256xf32>
    %321 = arith.select %319, %317, %320 : vector<8x256xi1>, vector<8x256xf32>
    %c0_217 = arith.constant 0 : index
    %c32_218 = arith.constant 32 : index
    %322 = vector.load %arg27[%c0_217, %c32_218] : memref<8x290xf32, #tpu.memory_space<vmem>>, vector<8x256xf32>
    %cst_219 = arith.constant 0.000000e+00 : f32
    %323 = vector.shape_cast %20 : vector<1x256xi1> to vector<1x256xi1>
    %324 = vector.broadcast %323 : vector<1x256xi1> to vector<8x256xi1>
    %325 = vector.broadcast %cst_219 : f32 to vector<8x256xf32>
    %326 = arith.select %324, %322, %325 : vector<8x256xi1>, vector<8x256xf32>
    %c0_220 = arith.constant 0 : index
    %c33_221 = arith.constant 33 : index
    %327 = vector.load %arg27[%c0_220, %c33_221] : memref<8x290xf32, #tpu.memory_space<vmem>>, vector<8x256xf32>
    %c0_222 = arith.constant 0 : index
    %c34_223 = arith.constant 34 : index
    %328 = vector.load %arg27[%c0_222, %c34_223] : memref<8x290xf32, #tpu.memory_space<vmem>>, vector<8x256xf32>
    %cst_224 = arith.constant 0.000000e+00 : f32
    %329 = vector.shape_cast %22 : vector<1x256xi1> to vector<1x256xi1>
    %330 = vector.broadcast %329 : vector<1x256xi1> to vector<8x256xi1>
    %331 = vector.broadcast %cst_224 : f32 to vector<8x256xf32>
    %332 = arith.select %330, %328, %331 : vector<8x256xi1>, vector<8x256xf32>
    %333 = tpu.concatenate %304, %305, %310, %315, %316, %321, %326, %327, %332 in 0 : vector<8x256xf32>, vector<8x256xf32>, vector<8x256xf32>, vector<8x256xf32>, vector<8x256xf32>, vector<8x256xf32>, vector<8x256xf32>, vector<8x256xf32>, vector<8x256xf32> -> vector<72x256xf32>
    %cst_225 = arith.constant dense<0.000000e+00> : vector<24x256xf32>
    %334 = tpu.matmul %298, %333, %cst_225 {dimension_numbers = #tpu.dot_dimension_numbers<[1], [0], [0], [1], [0, 0, 1, 1], [], []>} : vector<24x72xf32>, vector<72x256xf32>, vector<24x256xf32> -> vector<24x256xf32>
    %c0_226 = arith.constant 0 : index
    %c0_227 = arith.constant 0 : index
    %335 = vector.load %arg17[%c0_226, %c0_227] : memref<24x1xf32, #tpu.memory_space<vmem>>, vector<24x1xf32>
    %336 = vector.broadcast %335 : vector<24x1xf32> to vector<24x256xf32>
    %337 = arith.addf %334, %336 : vector<24x256xf32>
    %c0_228 = arith.constant 0 : index
    %c0_229 = arith.constant 0 : index
    %338 = vector.load %arg15[%c0_228, %c0_229] : memref<16x72xf32, #tpu.memory_space<vmem>>, vector<16x72xf32>
    %c0_230 = arith.constant 0 : index
    %c17_231 = arith.constant 17 : index
    %339 = vector.load %arg27[%c0_230, %c17_231] : memref<8x290xf32, #tpu.memory_space<vmem>>, vector<8x256xf32>
    tpu.vector_store %arg27[%c0_230, %c17_231], %297 {strides = array<i32>} : memref<8x290xf32, #tpu.memory_space<vmem>>, vector<8x256xf32>,
    %c0_232 = arith.constant 0 : index
    %c0_233 = arith.constant 0 : index
    %340 = vector.load %arg27[%c0_232, %c0_233] : memref<8x290xf32, #tpu.memory_space<vmem>>, vector<8x256xf32>
    %cst_234 = arith.constant 0.000000e+00 : f32
    %341 = vector.shape_cast %20 : vector<1x256xi1> to vector<1x256xi1>
    %342 = vector.broadcast %341 : vector<1x256xi1> to vector<8x256xi1>
    %343 = vector.broadcast %cst_234 : f32 to vector<8x256xf32>
    %344 = arith.select %342, %340, %343 : vector<8x256xi1>, vector<8x256xf32>
    %c0_235 = arith.constant 0 : index
    %c1_236 = arith.constant 1 : index
    %345 = vector.load %arg27[%c0_235, %c1_236] : memref<8x290xf32, #tpu.memory_space<vmem>>, vector<8x256xf32>
    %c0_237 = arith.constant 0 : index
    %c2_238 = arith.constant 2 : index
    %346 = vector.load %arg27[%c0_237, %c2_238] : memref<8x290xf32, #tpu.memory_space<vmem>>, vector<8x256xf32>
    %cst_239 = arith.constant 0.000000e+00 : f32
    %347 = vector.shape_cast %22 : vector<1x256xi1> to vector<1x256xi1>
    %348 = vector.broadcast %347 : vector<1x256xi1> to vector<8x256xi1>
    %349 = vector.broadcast %cst_239 : f32 to vector<8x256xf32>
    %350 = arith.select %348, %346, %349 : vector<8x256xi1>, vector<8x256xf32>
    %c0_240 = arith.constant 0 : index
    %c16_241 = arith.constant 16 : index
    %351 = vector.load %arg27[%c0_240, %c16_241] : memref<8x290xf32, #tpu.memory_space<vmem>>, vector<8x256xf32>
    %cst_242 = arith.constant 0.000000e+00 : f32
    %352 = vector.shape_cast %20 : vector<1x256xi1> to vector<1x256xi1>
    %353 = vector.broadcast %352 : vector<1x256xi1> to vector<8x256xi1>
    %354 = vector.broadcast %cst_242 : f32 to vector<8x256xf32>
    %355 = arith.select %353, %351, %354 : vector<8x256xi1>, vector<8x256xf32>
    %c0_243 = arith.constant 0 : index
    %c17_244 = arith.constant 17 : index
    %356 = vector.load %arg27[%c0_243, %c17_244] : memref<8x290xf32, #tpu.memory_space<vmem>>, vector<8x256xf32>
    %c0_245 = arith.constant 0 : index
    %c18_246 = arith.constant 18 : index
    %357 = vector.load %arg27[%c0_245, %c18_246] : memref<8x290xf32, #tpu.memory_space<vmem>>, vector<8x256xf32>
    %cst_247 = arith.constant 0.000000e+00 : f32
    %358 = vector.shape_cast %22 : vector<1x256xi1> to vector<1x256xi1>
    %359 = vector.broadcast %358 : vector<1x256xi1> to vector<8x256xi1>
    %360 = vector.broadcast %cst_247 : f32 to vector<8x256xf32>
    %361 = arith.select %359, %357, %360 : vector<8x256xi1>, vector<8x256xf32>
    %c0_248 = arith.constant 0 : index
    %c32_249 = arith.constant 32 : index
    %362 = vector.load %arg27[%c0_248, %c32_249] : memref<8x290xf32, #tpu.memory_space<vmem>>, vector<8x256xf32>
    %cst_250 = arith.constant 0.000000e+00 : f32
    %363 = vector.shape_cast %20 : vector<1x256xi1> to vector<1x256xi1>
    %364 = vector.broadcast %363 : vector<1x256xi1> to vector<8x256xi1>
    %365 = vector.broadcast %cst_250 : f32 to vector<8x256xf32>
    %366 = arith.select %364, %362, %365 : vector<8x256xi1>, vector<8x256xf32>
    %c0_251 = arith.constant 0 : index
    %c33_252 = arith.constant 33 : index
    %367 = vector.load %arg27[%c0_251, %c33_252] : memref<8x290xf32, #tpu.memory_space<vmem>>, vector<8x256xf32>
    %c0_253 = arith.constant 0 : index
    %c34_254 = arith.constant 34 : index
    %368 = vector.load %arg27[%c0_253, %c34_254] : memref<8x290xf32, #tpu.memory_space<vmem>>, vector<8x256xf32>
    %cst_255 = arith.constant 0.000000e+00 : f32
    %369 = vector.shape_cast %22 : vector<1x256xi1> to vector<1x256xi1>
    %370 = vector.broadcast %369 : vector<1x256xi1> to vector<8x256xi1>
    %371 = vector.broadcast %cst_255 : f32 to vector<8x256xf32>
    %372 = arith.select %370, %368, %371 : vector<8x256xi1>, vector<8x256xf32>
    %373 = tpu.concatenate %344, %345, %350, %355, %356, %361, %366, %367, %372 in 0 : vector<8x256xf32>, vector<8x256xf32>, vector<8x256xf32>, vector<8x256xf32>, vector<8x256xf32>, vector<8x256xf32>, vector<8x256xf32>, vector<8x256xf32>, vector<8x256xf32> -> vector<72x256xf32>
    %cst_256 = arith.constant dense<0.000000e+00> : vector<16x256xf32>
    %374 = tpu.matmul %338, %373, %cst_256 {dimension_numbers = #tpu.dot_dimension_numbers<[1], [0], [0], [1], [0, 0, 1, 1], [], []>} : vector<16x72xf32>, vector<72x256xf32>, vector<16x256xf32> -> vector<16x256xf32>
    %375 = vector.extract_strided_slice %337 {offsets = [0, 0], sizes = [8, 256], strides = [1, 1]} : vector<24x256xf32> to vector<8x256xf32>
    %376 = vector.extract_strided_slice %374 {offsets = [0, 0], sizes = [8, 256], strides = [1, 1]} : vector<16x256xf32> to vector<8x256xf32>
    %377 = arith.addf %375, %376 : vector<8x256xf32>
    %378 = arith.negf %377 : vector<8x256xf32>
    %379 = math.exp %378 : vector<8x256xf32>
    %cst_257 = arith.constant 1.000000e+00 : f32
    %380 = vector.broadcast %cst_257 : f32 to vector<8x256xf32>
    %381 = arith.addf %380, %379 : vector<8x256xf32>
    %382 = arith.divf %380, %381 : vector<8x256xf32>
    %383 = vector.extract_strided_slice %337 {offsets = [8, 0], sizes = [8, 256], strides = [1, 1]} : vector<24x256xf32> to vector<8x256xf32>
    %384 = vector.extract_strided_slice %374 {offsets = [8, 0], sizes = [8, 256], strides = [1, 1]} : vector<16x256xf32> to vector<8x256xf32>
    %385 = arith.addf %383, %384 : vector<8x256xf32>
    %386 = arith.negf %385 : vector<8x256xf32>
    %387 = math.exp %386 : vector<8x256xf32>
    %cst_258 = arith.constant 1.000000e+00 : f32
    %388 = vector.broadcast %cst_258 : f32 to vector<8x256xf32>
    %389 = arith.addf %388, %387 : vector<8x256xf32>
    %390 = arith.divf %388, %389 : vector<8x256xf32>
    %391 = vector.extract_strided_slice %337 {offsets = [16, 0], sizes = [8, 256], strides = [1, 1]} : vector<24x256xf32> to vector<8x256xf32>
    %c0_259 = arith.constant 0 : index
    %c0_260 = arith.constant 0 : index
    %392 = vector.load %arg16[%c0_259, %c0_260] : memref<8x72xf32, #tpu.memory_space<vmem>>, vector<8x72xf32>
    %393 = arith.mulf %297, %390 : vector<8x256xf32>
    %c0_261 = arith.constant 0 : index
    %c17_262 = arith.constant 17 : index
    %394 = vector.load %arg27[%c0_261, %c17_262] : memref<8x290xf32, #tpu.memory_space<vmem>>, vector<8x256xf32>
    tpu.vector_store %arg27[%c0_261, %c17_262], %393 {strides = array<i32>} : memref<8x290xf32, #tpu.memory_space<vmem>>, vector<8x256xf32>,
    %c0_263 = arith.constant 0 : index
    %c0_264 = arith.constant 0 : index
    %395 = vector.load %arg27[%c0_263, %c0_264] : memref<8x290xf32, #tpu.memory_space<vmem>>, vector<8x256xf32>
    %cst_265 = arith.constant 0.000000e+00 : f32
    %396 = vector.shape_cast %20 : vector<1x256xi1> to vector<1x256xi1>
    %397 = vector.broadcast %396 : vector<1x256xi1> to vector<8x256xi1>
    %398 = vector.broadcast %cst_265 : f32 to vector<8x256xf32>
    %399 = arith.select %397, %395, %398 : vector<8x256xi1>, vector<8x256xf32>
    %c0_266 = arith.constant 0 : index
    %c1_267 = arith.constant 1 : index
    %400 = vector.load %arg27[%c0_266, %c1_267] : memref<8x290xf32, #tpu.memory_space<vmem>>, vector<8x256xf32>
    %c0_268 = arith.constant 0 : index
    %c2_269 = arith.constant 2 : index
    %401 = vector.load %arg27[%c0_268, %c2_269] : memref<8x290xf32, #tpu.memory_space<vmem>>, vector<8x256xf32>
    %cst_270 = arith.constant 0.000000e+00 : f32
    %402 = vector.shape_cast %22 : vector<1x256xi1> to vector<1x256xi1>
    %403 = vector.broadcast %402 : vector<1x256xi1> to vector<8x256xi1>
    %404 = vector.broadcast %cst_270 : f32 to vector<8x256xf32>
    %405 = arith.select %403, %401, %404 : vector<8x256xi1>, vector<8x256xf32>
    %c0_271 = arith.constant 0 : index
    %c16_272 = arith.constant 16 : index
    %406 = vector.load %arg27[%c0_271, %c16_272] : memref<8x290xf32, #tpu.memory_space<vmem>>, vector<8x256xf32>
    %cst_273 = arith.constant 0.000000e+00 : f32
    %407 = vector.shape_cast %20 : vector<1x256xi1> to vector<1x256xi1>
    %408 = vector.broadcast %407 : vector<1x256xi1> to vector<8x256xi1>
    %409 = vector.broadcast %cst_273 : f32 to vector<8x256xf32>
    %410 = arith.select %408, %406, %409 : vector<8x256xi1>, vector<8x256xf32>
    %c0_274 = arith.constant 0 : index
    %c17_275 = arith.constant 17 : index
    %411 = vector.load %arg27[%c0_274, %c17_275] : memref<8x290xf32, #tpu.memory_space<vmem>>, vector<8x256xf32>
    %c0_276 = arith.constant 0 : index
    %c18_277 = arith.constant 18 : index
    %412 = vector.load %arg27[%c0_276, %c18_277] : memref<8x290xf32, #tpu.memory_space<vmem>>, vector<8x256xf32>
    %cst_278 = arith.constant 0.000000e+00 : f32
    %413 = vector.shape_cast %22 : vector<1x256xi1> to vector<1x256xi1>
    %414 = vector.broadcast %413 : vector<1x256xi1> to vector<8x256xi1>
    %415 = vector.broadcast %cst_278 : f32 to vector<8x256xf32>
    %416 = arith.select %414, %412, %415 : vector<8x256xi1>, vector<8x256xf32>
    %c0_279 = arith.constant 0 : index
    %c32_280 = arith.constant 32 : index
    %417 = vector.load %arg27[%c0_279, %c32_280] : memref<8x290xf32, #tpu.memory_space<vmem>>, vector<8x256xf32>
    %cst_281 = arith.constant 0.000000e+00 : f32
    %418 = vector.shape_cast %20 : vector<1x256xi1> to vector<1x256xi1>
    %419 = vector.broadcast %418 : vector<1x256xi1> to vector<8x256xi1>
    %420 = vector.broadcast %cst_281 : f32 to vector<8x256xf32>
    %421 = arith.select %419, %417, %420 : vector<8x256xi1>, vector<8x256xf32>
    %c0_282 = arith.constant 0 : index
    %c33_283 = arith.constant 33 : index
    %422 = vector.load %arg27[%c0_282, %c33_283] : memref<8x290xf32, #tpu.memory_space<vmem>>, vector<8x256xf32>
    %c0_284 = arith.constant 0 : index
    %c34_285 = arith.constant 34 : index
    %423 = vector.load %arg27[%c0_284, %c34_285] : memref<8x290xf32, #tpu.memory_space<vmem>>, vector<8x256xf32>
    %cst_286 = arith.constant 0.000000e+00 : f32
    %424 = vector.shape_cast %22 : vector<1x256xi1> to vector<1x256xi1>
    %425 = vector.broadcast %424 : vector<1x256xi1> to vector<8x256xi1>
    %426 = vector.broadcast %cst_286 : f32 to vector<8x256xf32>
    %427 = arith.select %425, %423, %426 : vector<8x256xi1>, vector<8x256xf32>
    %428 = tpu.concatenate %399, %400, %405, %410, %411, %416, %421, %422, %427 in 0 : vector<8x256xf32>, vector<8x256xf32>, vector<8x256xf32>, vector<8x256xf32>, vector<8x256xf32>, vector<8x256xf32>, vector<8x256xf32>, vector<8x256xf32>, vector<8x256xf32> -> vector<72x256xf32>
    %cst_287 = arith.constant dense<0.000000e+00> : vector<8x256xf32>
    %429 = tpu.matmul %392, %428, %cst_287 {dimension_numbers = #tpu.dot_dimension_numbers<[1], [0], [0], [1], [0, 0, 1, 1], [], []>} : vector<8x72xf32>, vector<72x256xf32>, vector<8x256xf32> -> vector<8x256xf32>
    %430 = arith.addf %391, %429 : vector<8x256xf32>
    %431 = math.tanh %430 : vector<8x256xf32>
    %cst_288 = arith.constant 1.000000e+00 : f32
    %432 = vector.broadcast %cst_288 : f32 to vector<8x256xf32>
    %433 = arith.subf %432, %382 : vector<8x256xf32>
    %434 = arith.mulf %297, %433 : vector<8x256xf32>
    %435 = arith.mulf %431, %382 : vector<8x256xf32>
    %436 = arith.addf %434, %435 : vector<8x256xf32>
    %c0_289 = arith.constant 0 : index
    %c0_290 = arith.constant 0 : index
    %c0_291 = arith.constant 0 : index
    %437 = vector.load %arg26[%c0_289, %c0_290, %c0_291] : memref<1x8x256xf32, #tpu.memory_space<vmem>>, vector<1x8x256xf32>
    %438 = vector.shape_cast %437 : vector<1x8x256xf32> to vector<8x256xf32>
    %439 = vector.shape_cast %436 : vector<8x256xf32> to vector<1x8x256xf32>
    tpu.vector_store %arg26[%c0_289, %c0_290, %c0_291], %439 {strides = array<i32>} : memref<1x8x256xf32, #tpu.memory_space<vmem>>, vector<1x8x256xf32>,
    %c0_292 = arith.constant 0 : index
    %c0_293 = arith.constant 0 : index
    %440 = vector.load %arg18[%c0_292, %c0_293] : memref<8x72xf32, #tpu.memory_space<vmem>>, vector<8x72xf32>
    %c0_294 = arith.constant 0 : index
    %c17_295 = arith.constant 17 : index
    %441 = vector.load %arg27[%c0_294, %c17_295] : memref<8x290xf32, #tpu.memory_space<vmem>>, vector<8x256xf32>
    tpu.vector_store %arg27[%c0_294, %c17_295], %436 {strides = array<i32>} : memref<8x290xf32, #tpu.memory_space<vmem>>, vector<8x256xf32>,
    %c0_296 = arith.constant 0 : index
    %c0_297 = arith.constant 0 : index
    %442 = vector.load %arg27[%c0_296, %c0_297] : memref<8x290xf32, #tpu.memory_space<vmem>>, vector<8x256xf32>
    %cst_298 = arith.constant 0.000000e+00 : f32
    %443 = vector.shape_cast %20 : vector<1x256xi1> to vector<1x256xi1>
    %444 = vector.broadcast %443 : vector<1x256xi1> to vector<8x256xi1>
    %445 = vector.broadcast %cst_298 : f32 to vector<8x256xf32>
    %446 = arith.select %444, %442, %445 : vector<8x256xi1>, vector<8x256xf32>
    %c0_299 = arith.constant 0 : index
    %c1_300 = arith.constant 1 : index
    %447 = vector.load %arg27[%c0_299, %c1_300] : memref<8x290xf32, #tpu.memory_space<vmem>>, vector<8x256xf32>
    %c0_301 = arith.constant 0 : index
    %c2_302 = arith.constant 2 : index
    %448 = vector.load %arg27[%c0_301, %c2_302] : memref<8x290xf32, #tpu.memory_space<vmem>>, vector<8x256xf32>
    %cst_303 = arith.constant 0.000000e+00 : f32
    %449 = vector.shape_cast %22 : vector<1x256xi1> to vector<1x256xi1>
    %450 = vector.broadcast %449 : vector<1x256xi1> to vector<8x256xi1>
    %451 = vector.broadcast %cst_303 : f32 to vector<8x256xf32>
    %452 = arith.select %450, %448, %451 : vector<8x256xi1>, vector<8x256xf32>
    %c0_304 = arith.constant 0 : index
    %c16_305 = arith.constant 16 : index
    %453 = vector.load %arg27[%c0_304, %c16_305] : memref<8x290xf32, #tpu.memory_space<vmem>>, vector<8x256xf32>
    %cst_306 = arith.constant 0.000000e+00 : f32
    %454 = vector.shape_cast %20 : vector<1x256xi1> to vector<1x256xi1>
    %455 = vector.broadcast %454 : vector<1x256xi1> to vector<8x256xi1>
    %456 = vector.broadcast %cst_306 : f32 to vector<8x256xf32>
    %457 = arith.select %455, %453, %456 : vector<8x256xi1>, vector<8x256xf32>
    %c0_307 = arith.constant 0 : index
    %c17_308 = arith.constant 17 : index
    %458 = vector.load %arg27[%c0_307, %c17_308] : memref<8x290xf32, #tpu.memory_space<vmem>>, vector<8x256xf32>
    %c0_309 = arith.constant 0 : index
    %c18_310 = arith.constant 18 : index
    %459 = vector.load %arg27[%c0_309, %c18_310] : memref<8x290xf32, #tpu.memory_space<vmem>>, vector<8x256xf32>
    %cst_311 = arith.constant 0.000000e+00 : f32
    %460 = vector.shape_cast %22 : vector<1x256xi1> to vector<1x256xi1>
    %461 = vector.broadcast %460 : vector<1x256xi1> to vector<8x256xi1>
    %462 = vector.broadcast %cst_311 : f32 to vector<8x256xf32>
    %463 = arith.select %461, %459, %462 : vector<8x256xi1>, vector<8x256xf32>
    %c0_312 = arith.constant 0 : index
    %c32_313 = arith.constant 32 : index
    %464 = vector.load %arg27[%c0_312, %c32_313] : memref<8x290xf32, #tpu.memory_space<vmem>>, vector<8x256xf32>
    %cst_314 = arith.constant 0.000000e+00 : f32
    %465 = vector.shape_cast %20 : vector<1x256xi1> to vector<1x256xi1>
    %466 = vector.broadcast %465 : vector<1x256xi1> to vector<8x256xi1>
    %467 = vector.broadcast %cst_314 : f32 to vector<8x256xf32>
    %468 = arith.select %466, %464, %467 : vector<8x256xi1>, vector<8x256xf32>
    %c0_315 = arith.constant 0 : index
    %c33_316 = arith.constant 33 : index
    %469 = vector.load %arg27[%c0_315, %c33_316] : memref<8x290xf32, #tpu.memory_space<vmem>>, vector<8x256xf32>
    %c0_317 = arith.constant 0 : index
    %c34_318 = arith.constant 34 : index
    %470 = vector.load %arg27[%c0_317, %c34_318] : memref<8x290xf32, #tpu.memory_space<vmem>>, vector<8x256xf32>
    %cst_319 = arith.constant 0.000000e+00 : f32
    %471 = vector.shape_cast %22 : vector<1x256xi1> to vector<1x256xi1>
    %472 = vector.broadcast %471 : vector<1x256xi1> to vector<8x256xi1>
    %473 = vector.broadcast %cst_319 : f32 to vector<8x256xf32>
    %474 = arith.select %472, %470, %473 : vector<8x256xi1>, vector<8x256xf32>
    %475 = tpu.concatenate %446, %447, %452, %457, %458, %463, %468, %469, %474 in 0 : vector<8x256xf32>, vector<8x256xf32>, vector<8x256xf32>, vector<8x256xf32>, vector<8x256xf32>, vector<8x256xf32>, vector<8x256xf32>, vector<8x256xf32>, vector<8x256xf32> -> vector<72x256xf32>
    %cst_320 = arith.constant dense<0.000000e+00> : vector<8x256xf32>
    %476 = tpu.matmul %440, %475, %cst_320 {dimension_numbers = #tpu.dot_dimension_numbers<[1], [0], [0], [1], [0, 0, 1, 1], [], []>} : vector<8x72xf32>, vector<72x256xf32>, vector<8x256xf32> -> vector<8x256xf32>
    %c0_321 = arith.constant 0 : index
    %c0_322 = arith.constant 0 : index
    %477 = vector.load %arg19[%c0_321, %c0_322] : memref<8x1xf32, #tpu.memory_space<vmem>>, vector<8x1xf32>
    %478 = vector.broadcast %477 : vector<8x1xf32> to vector<8x256xf32>
    %479 = arith.addf %476, %478 : vector<8x256xf32>
    %cst_323 = arith.constant 0.000000e+00 : f32
    %480 = vector.broadcast %cst_323 : f32 to vector<8x256xf32>
    %481 = arith.maximumf %479, %480 : vector<8x256xf32>
    %c0_324 = arith.constant 0 : index
    %c0_325 = arith.constant 0 : index
    %482 = vector.load %arg20[%c0_324, %c0_325] : memref<8x72xf32, #tpu.memory_space<vmem>>, vector<8x72xf32>
    %c0_326 = arith.constant 0 : index
    %c17_327 = arith.constant 17 : index
    %483 = vector.load %arg27[%c0_326, %c17_327] : memref<8x290xf32, #tpu.memory_space<vmem>>, vector<8x256xf32>
    tpu.vector_store %arg27[%c0_326, %c17_327], %481 {strides = array<i32>} : memref<8x290xf32, #tpu.memory_space<vmem>>, vector<8x256xf32>,
    %c0_328 = arith.constant 0 : index
    %c0_329 = arith.constant 0 : index
    %484 = vector.load %arg27[%c0_328, %c0_329] : memref<8x290xf32, #tpu.memory_space<vmem>>, vector<8x256xf32>
    %cst_330 = arith.constant 0.000000e+00 : f32
    %485 = vector.shape_cast %20 : vector<1x256xi1> to vector<1x256xi1>
    %486 = vector.broadcast %485 : vector<1x256xi1> to vector<8x256xi1>
    %487 = vector.broadcast %cst_330 : f32 to vector<8x256xf32>
    %488 = arith.select %486, %484, %487 : vector<8x256xi1>, vector<8x256xf32>
    %c0_331 = arith.constant 0 : index
    %c1_332 = arith.constant 1 : index
    %489 = vector.load %arg27[%c0_331, %c1_332] : memref<8x290xf32, #tpu.memory_space<vmem>>, vector<8x256xf32>
    %c0_333 = arith.constant 0 : index
    %c2_334 = arith.constant 2 : index
    %490 = vector.load %arg27[%c0_333, %c2_334] : memref<8x290xf32, #tpu.memory_space<vmem>>, vector<8x256xf32>
    %cst_335 = arith.constant 0.000000e+00 : f32
    %491 = vector.shape_cast %22 : vector<1x256xi1> to vector<1x256xi1>
    %492 = vector.broadcast %491 : vector<1x256xi1> to vector<8x256xi1>
    %493 = vector.broadcast %cst_335 : f32 to vector<8x256xf32>
    %494 = arith.select %492, %490, %493 : vector<8x256xi1>, vector<8x256xf32>
    %c0_336 = arith.constant 0 : index
    %c16_337 = arith.constant 16 : index
    %495 = vector.load %arg27[%c0_336, %c16_337] : memref<8x290xf32, #tpu.memory_space<vmem>>, vector<8x256xf32>
    %cst_338 = arith.constant 0.000000e+00 : f32
    %496 = vector.shape_cast %20 : vector<1x256xi1> to vector<1x256xi1>
    %497 = vector.broadcast %496 : vector<1x256xi1> to vector<8x256xi1>
    %498 = vector.broadcast %cst_338 : f32 to vector<8x256xf32>
    %499 = arith.select %497, %495, %498 : vector<8x256xi1>, vector<8x256xf32>
    %c0_339 = arith.constant 0 : index
    %c17_340 = arith.constant 17 : index
    %500 = vector.load %arg27[%c0_339, %c17_340] : memref<8x290xf32, #tpu.memory_space<vmem>>, vector<8x256xf32>
    %c0_341 = arith.constant 0 : index
    %c18_342 = arith.constant 18 : index
    %501 = vector.load %arg27[%c0_341, %c18_342] : memref<8x290xf32, #tpu.memory_space<vmem>>, vector<8x256xf32>
    %cst_343 = arith.constant 0.000000e+00 : f32
    %502 = vector.shape_cast %22 : vector<1x256xi1> to vector<1x256xi1>
    %503 = vector.broadcast %502 : vector<1x256xi1> to vector<8x256xi1>
    %504 = vector.broadcast %cst_343 : f32 to vector<8x256xf32>
    %505 = arith.select %503, %501, %504 : vector<8x256xi1>, vector<8x256xf32>
    %c0_344 = arith.constant 0 : index
    %c32_345 = arith.constant 32 : index
    %506 = vector.load %arg27[%c0_344, %c32_345] : memref<8x290xf32, #tpu.memory_space<vmem>>, vector<8x256xf32>
    %cst_346 = arith.constant 0.000000e+00 : f32
    %507 = vector.shape_cast %20 : vector<1x256xi1> to vector<1x256xi1>
    %508 = vector.broadcast %507 : vector<1x256xi1> to vector<8x256xi1>
    %509 = vector.broadcast %cst_346 : f32 to vector<8x256xf32>
    %510 = arith.select %508, %506, %509 : vector<8x256xi1>, vector<8x256xf32>
    %c0_347 = arith.constant 0 : index
    %c33_348 = arith.constant 33 : index
    %511 = vector.load %arg27[%c0_347, %c33_348] : memref<8x290xf32, #tpu.memory_space<vmem>>, vector<8x256xf32>
    %c0_349 = arith.constant 0 : index
    %c34_350 = arith.constant 34 : index
    %512 = vector.load %arg27[%c0_349, %c34_350] : memref<8x290xf32, #tpu.memory_space<vmem>>, vector<8x256xf32>
    %cst_351 = arith.constant 0.000000e+00 : f32
    %513 = vector.shape_cast %22 : vector<1x256xi1> to vector<1x256xi1>
    %514 = vector.broadcast %513 : vector<1x256xi1> to vector<8x256xi1>
    %515 = vector.broadcast %cst_351 : f32 to vector<8x256xf32>
    %516 = arith.select %514, %512, %515 : vector<8x256xi1>, vector<8x256xf32>
    %517 = tpu.concatenate %488, %489, %494, %499, %500, %505, %510, %511, %516 in 0 : vector<8x256xf32>, vector<8x256xf32>, vector<8x256xf32>, vector<8x256xf32>, vector<8x256xf32>, vector<8x256xf32>, vector<8x256xf32>, vector<8x256xf32>, vector<8x256xf32> -> vector<72x256xf32>
    %cst_352 = arith.constant dense<0.000000e+00> : vector<8x256xf32>
    %518 = tpu.matmul %482, %517, %cst_352 {dimension_numbers = #tpu.dot_dimension_numbers<[1], [0], [0], [1], [0, 0, 1, 1], [], []>} : vector<8x72xf32>, vector<72x256xf32>, vector<8x256xf32> -> vector<8x256xf32>
    %c0_353 = arith.constant 0 : index
    %c0_354 = arith.constant 0 : index
    %519 = vector.load %arg21[%c0_353, %c0_354] : memref<8x1xf32, #tpu.memory_space<vmem>>, vector<8x1xf32>
    %520 = vector.broadcast %519 : vector<8x1xf32> to vector<8x256xf32>
    %521 = arith.addf %518, %520 : vector<8x256xf32>
    %522 = arith.addf %521, %436 : vector<8x256xf32>
    %cst_355 = arith.constant 0.000000e+00 : f32
    %523 = vector.broadcast %cst_355 : f32 to vector<8x256xf32>
    %524 = arith.maximumf %522, %523 : vector<8x256xf32>
    %c0_356 = arith.constant 0 : index
    %c0_357 = arith.constant 0 : index
    %525 = vector.load %arg22[%c0_356, %c0_357] : memref<1x8xf32, #tpu.memory_space<vmem>>, vector<1x8xf32>
    %cst_358 = arith.constant dense<0.000000e+00> : vector<1x256xf32>
    %526 = tpu.matmul %525, %524, %cst_358 {dimension_numbers = #tpu.dot_dimension_numbers<[1], [0], [0], [1], [0, 0, 1, 1], [], []>} : vector<1x8xf32>, vector<8x256xf32>, vector<1x256xf32> -> vector<1x256xf32>
    %c0_359 = arith.constant 0 : index
    %c0_360 = arith.constant 0 : index
    %527 = vector.load %arg23[%c0_359, %c0_360] : memref<1x1xf32, #tpu.memory_space<vmem>>, vector<1x1xf32>
    %528 = vector.broadcast %527 : vector<1x1xf32> to vector<1x256xf32>
    %529 = arith.addf %526, %528 : vector<1x256xf32>
    %c0_361 = arith.constant 0 : index
    %c0_362 = arith.constant 0 : index
    %c0_363 = arith.constant 0 : index
    %530 = vector.load %arg24[%c0_361, %c0_362, %c0_363] : memref<1x1x256xf32, #tpu.memory_space<vmem>>, vector<1x1x256xf32>
    %531 = vector.shape_cast %530 : vector<1x1x256xf32> to vector<1x256xf32>
    %532 = vector.shape_cast %529 : vector<1x256xf32> to vector<1x1x256xf32>
    tpu.vector_store %arg24[%c0_361, %c0_362, %c0_363], %532 {strides = array<i32>} : memref<1x1x256xf32, #tpu.memory_space<vmem>>, vector<1x1x256xf32>,
    return
  }
  func.func @transform_0(%arg0: i32) -> (i32, i32, i32) {
    %c0_i32 = arith.constant 0 : i32
    %c0_i32_0 = arith.constant 0 : i32
    %c0_i32_1 = arith.constant 0 : i32
    return %arg0, %c0_i32, %c0_i32_0 : i32, i32, i32
  }
  func.func @transform_1(%arg0: i32) -> (i32, i32, i32) {
    %c0_i32 = arith.constant 0 : i32
    %c0_i32_0 = arith.constant 0 : i32
    %c0_i32_1 = arith.constant 0 : i32
    return %arg0, %c0_i32, %c0_i32_0 : i32, i32, i32
  }
  func.func @transform_2(%arg0: i32) -> (i32, i32, i32) {
    %c0_i32 = arith.constant 0 : i32
    %c0_i32_0 = arith.constant 0 : i32
    %c0_i32_1 = arith.constant 0 : i32
    return %arg0, %c0_i32, %c0_i32_0 : i32, i32, i32
  }
  func.func @transform_3(%arg0: i32) -> (i32, i32) {
    %c0_i32 = arith.constant 0 : i32
    %c0_i32_0 = arith.constant 0 : i32
    %c0_i32_1 = arith.constant 0 : i32
    return %c0_i32, %c0_i32_0 : i32, i32
  }
  func.func @transform_4(%arg0: i32) -> (i32, i32) {
    %c0_i32 = arith.constant 0 : i32
    %c0_i32_0 = arith.constant 0 : i32
    %c0_i32_1 = arith.constant 0 : i32
    return %c0_i32, %c0_i32_0 : i32, i32
  }
  func.func @transform_5(%arg0: i32) -> (i32, i32) {
    %c0_i32 = arith.constant 0 : i32
    %c0_i32_0 = arith.constant 0 : i32
    %c0_i32_1 = arith.constant 0 : i32
    return %c0_i32, %c0_i32_0 : i32, i32
  }
  func.func @transform_6(%arg0: i32) -> (i32, i32) {
    %c0_i32 = arith.constant 0 : i32
    %c0_i32_0 = arith.constant 0 : i32
    %c0_i32_1 = arith.constant 0 : i32
    return %c0_i32, %c0_i32_0 : i32, i32
  }
  func.func @transform_7(%arg0: i32) -> (i32, i32) {
    %c0_i32 = arith.constant 0 : i32
    %c0_i32_0 = arith.constant 0 : i32
    %c0_i32_1 = arith.constant 0 : i32
    return %c0_i32, %c0_i32_0 : i32, i32
  }
  func.func @transform_8(%arg0: i32) -> (i32, i32) {
    %c0_i32 = arith.constant 0 : i32
    %c0_i32_0 = arith.constant 0 : i32
    %c0_i32_1 = arith.constant 0 : i32
    return %c0_i32, %c0_i32_0 : i32, i32
  }
  func.func @transform_9(%arg0: i32) -> (i32, i32) {
    %c0_i32 = arith.constant 0 : i32
    %c0_i32_0 = arith.constant 0 : i32
    %c0_i32_1 = arith.constant 0 : i32
    return %c0_i32, %c0_i32_0 : i32, i32
  }
  func.func @transform_10(%arg0: i32) -> (i32, i32) {
    %c0_i32 = arith.constant 0 : i32
    %c0_i32_0 = arith.constant 0 : i32
    %c0_i32_1 = arith.constant 0 : i32
    return %c0_i32, %c0_i32_0 : i32, i32
  }
  func.func @transform_11(%arg0: i32) -> (i32, i32) {
    %c0_i32 = arith.constant 0 : i32
    %c0_i32_0 = arith.constant 0 : i32
    %c0_i32_1 = arith.constant 0 : i32
    return %c0_i32, %c0_i32_0 : i32, i32
  }
  func.func @transform_12(%arg0: i32) -> (i32, i32) {
    %c0_i32 = arith.constant 0 : i32
    %c0_i32_0 = arith.constant 0 : i32
    %c0_i32_1 = arith.constant 0 : i32
    return %c0_i32, %c0_i32_0 : i32, i32
  }
  func.func @transform_13(%arg0: i32) -> (i32, i32) {
    %c0_i32 = arith.constant 0 : i32
    %c0_i32_0 = arith.constant 0 : i32
    %c0_i32_1 = arith.constant 0 : i32
    return %c0_i32, %c0_i32_0 : i32, i32
  }
  func.func @transform_14(%arg0: i32) -> (i32, i32) {
    %c0_i32 = arith.constant 0 : i32
    %c0_i32_0 = arith.constant 0 : i32
    %c0_i32_1 = arith.constant 0 : i32
    return %c0_i32, %c0_i32_0 : i32, i32
  }
  func.func @transform_15(%arg0: i32) -> (i32, i32) {
    %c0_i32 = arith.constant 0 : i32
    %c0_i32_0 = arith.constant 0 : i32
    %c0_i32_1 = arith.constant 0 : i32
    return %c0_i32, %c0_i32_0 : i32, i32
  }
  func.func @transform_16(%arg0: i32) -> (i32, i32) {
    %c0_i32 = arith.constant 0 : i32
    %c0_i32_0 = arith.constant 0 : i32
    %c0_i32_1 = arith.constant 0 : i32
    return %c0_i32, %c0_i32_0 : i32, i32
  }
  func.func @transform_17(%arg0: i32) -> (i32, i32) {
    %c0_i32 = arith.constant 0 : i32
    %c0_i32_0 = arith.constant 0 : i32
    %c0_i32_1 = arith.constant 0 : i32
    return %c0_i32, %c0_i32_0 : i32, i32
  }
  func.func @transform_18(%arg0: i32) -> (i32, i32) {
    %c0_i32 = arith.constant 0 : i32
    %c0_i32_0 = arith.constant 0 : i32
    %c0_i32_1 = arith.constant 0 : i32
    return %c0_i32, %c0_i32_0 : i32, i32
  }
  func.func @transform_19(%arg0: i32) -> (i32, i32) {
    %c0_i32 = arith.constant 0 : i32
    %c0_i32_0 = arith.constant 0 : i32
    %c0_i32_1 = arith.constant 0 : i32
    return %c0_i32, %c0_i32_0 : i32, i32
  }
  func.func @transform_20(%arg0: i32) -> (i32, i32) {
    %c0_i32 = arith.constant 0 : i32
    %c0_i32_0 = arith.constant 0 : i32
    %c0_i32_1 = arith.constant 0 : i32
    return %c0_i32, %c0_i32_0 : i32, i32
  }
  func.func @transform_21(%arg0: i32) -> (i32, i32) {
    %c0_i32 = arith.constant 0 : i32
    %c0_i32_0 = arith.constant 0 : i32
    %c0_i32_1 = arith.constant 0 : i32
    return %c0_i32, %c0_i32_0 : i32, i32
  }
  func.func @transform_22(%arg0: i32) -> (i32, i32) {
    %c0_i32 = arith.constant 0 : i32
    %c0_i32_0 = arith.constant 0 : i32
    %c0_i32_1 = arith.constant 0 : i32
    return %c0_i32, %c0_i32_0 : i32, i32
  }
  func.func @transform_23(%arg0: i32) -> (i32, i32, i32) {
    %c0_i32 = arith.constant 0 : i32
    %c0_i32_0 = arith.constant 0 : i32
    %c0_i32_1 = arith.constant 0 : i32
    return %arg0, %c0_i32, %c0_i32_0 : i32, i32, i32
  }
  func.func @transform_24(%arg0: i32) -> (i32, i32, i32) {
    %c0_i32 = arith.constant 0 : i32
    %c0_i32_0 = arith.constant 0 : i32
    %c0_i32_1 = arith.constant 0 : i32
    return %arg0, %c0_i32, %c0_i32_0 : i32, i32, i32
  }
  func.func @transform_25(%arg0: i32) -> (i32, i32, i32) {
    %c0_i32 = arith.constant 0 : i32
    %c0_i32_0 = arith.constant 0 : i32
    %c0_i32_1 = arith.constant 0 : i32
    return %arg0, %c0_i32, %c0_i32_0 : i32, i32, i32
  }
}

</mosaic_0001>

<llo_original>
// kernel: unet_fire_forward.1
$region0: #{unet_fire_forward.1}
  #allocation0 [shape = 'u32[]', space=smem, size = 0x4, offset = 0x4, fixed_abs, tag = 'smem constant byte address 0x4 - core index']
  #allocation1 [shape = 'u32[72,128]{1,0:T(1,128)}', space=vmem, size = 0x9000, scoped, tag = 'internal scratch']
  #allocation2 [shape = 'f32[8,290]{1,0:T(8,128)}', space=vmem, size = 0x3000, scoped, tag = 'scratch operand']
  #allocation3 [shape = 'f32[1,1]{1,0:T(1,128)S(1)}', space=vmem, size = 0x200, scoped, tag = 'scoped memory for unet_fire_forward.1']
  %s0 = inlined_call_operand.vmem [shape: f32[2,4,256], index: 0, kind: input, shape index: {}]
  %s1 = inlined_call_operand.vmem [shape: f32[2,8,256], index: 1, kind: input, shape index: {}, may-alias: {1,2}]
  %s2 = inlined_call_operand.vmem [shape: f32[2,8,256], index: 2, kind: input, shape index: {}, may-alias: {1,2}]
  %s3 = inlined_call_operand.vmem [shape: f32[8,72], index: 3, kind: input, shape index: {}]
  %s4 = inlined_call_operand.vmem [shape: f32[8,1], index: 4, kind: input, shape index: {}]
  %s5 = inlined_call_operand.vmem [shape: f32[24,72], index: 5, kind: input, shape index: {}]
  %s6 = inlined_call_operand.vmem [shape: f32[16,72], index: 6, kind: input, shape index: {}]
  %s7 = inlined_call_operand.vmem [shape: f32[8,72], index: 7, kind: input, shape index: {}]
  %s8 = inlined_call_operand.vmem [shape: f32[24,1], index: 8, kind: input, shape index: {}]
  %s9 = inlined_call_operand.vmem [shape: f32[8,72], index: 9, kind: input, shape index: {}]
  %s10 = inlined_call_operand.vmem [shape: f32[8,1], index: 10, kind: input, shape index: {}]
  %s11 = inlined_call_operand.vmem [shape: f32[8,72], index: 11, kind: input, shape index: {}]
  %s12 = inlined_call_operand.vmem [shape: f32[8,1], index: 12, kind: input, shape index: {}]
  %s13 = inlined_call_operand.vmem [shape: f32[24,72], index: 13, kind: input, shape index: {}]
  %s14 = inlined_call_operand.vmem [shape: f32[16,72], index: 14, kind: input, shape index: {}]
  %s15 = inlined_call_operand.vmem [shape: f32[8,72], index: 15, kind: input, shape index: {}]
  %s16 = inlined_call_operand.vmem [shape: f32[24,1], index: 16, kind: input, shape index: {}]
  %s17 = inlined_call_operand.vmem [shape: f32[8,72], index: 17, kind: input, shape index: {}]
  %s18 = inlined_call_operand.vmem [shape: f32[8,1], index: 18, kind: input, shape index: {}]
  %s19 = inlined_call_operand.vmem [shape: f32[8,72], index: 19, kind: input, shape index: {}]
  %s20 = inlined_call_operand.vmem [shape: f32[8,1], index: 20, kind: input, shape index: {}]
  %s21 = inlined_call_operand.vmem [shape: f32[1,8], index: 21, kind: input, shape index: {}]
  %s22 = inlined_call_operand.<no memory space> [shape: f32[1,1], index: 22, kind: input, shape index: {}]
  %s23 = inlined_call_operand.vmem [shape: f32[2,1,256], index: 23, kind: output, shape index: {0}]
  %s24 = inlined_call_operand.vmem [shape: f32[2,8,256], index: 24, kind: output, shape index: {1}]
  %s25 = inlined_call_operand.vmem [shape: f32[2,8,256], index: 25, kind: output, shape index: {2}]
  %26 = xla_tuple %s23, %s24, %s25
  %s27 = sld [smem:[#allocation0]]
  $region141: #{unet_fire_forward.1} parent=0
    _
  %s29 = ssub.s32 1, %s27
  %s30 = scalar_select 0, %s29, %s27
  %v31 = vstv %s22
  %32 = vst [vmem:[#allocation3] sm:$0x1] %v31
  loop: start=0, step=1, limit=4
  $region2: #{unet_fire_forward.1} parent=0 // loop_pre_header
    _
  $region3: #{unet_fire_forward.1} parent=0 // loop_header
    %s34 = sphi 0, %s38
    %p35 = scmp.ge.s32.totalorder %s34, 4
    %s44 = sphi 0, %s46
    %s47 = sphi 0, %s44
    %s48 = sphi 0, %s47
    %s64 = sphi 0, %s48
    %s70 = sphi 0, %s72
    %s73 = sphi 0, %s70
    %s74 = sphi 0, %s73
    %s90 = sphi 0, %s74
    %s96 = sphi 0, %s98
    %s99 = sphi 0, %s96
    %s100 = sphi 0, %s99
    %s116 = sphi 0, %s100
    %s120 = sphi 0, %s120
    %s122 = sphi 0, %s120
    %s123 = sphi 0, %s122
    %s137 = sphi 0, %s123
    %s141 = sphi 0, %s141
    %s143 = sphi 0, %s141
    %s144 = sphi 0, %s143
    %s158 = sphi 0, %s144
    %s162 = sphi 0, %s162
    %s164 = sphi 0, %s162
    %s165 = sphi 0, %s164
    %s179 = sphi 0, %s165
    %s183 = sphi 0, %s183
    %s185 = sphi 0, %s183
    %s186 = sphi 0, %s185
    %s200 = sphi 0, %s186
    %s204 = sphi 0, %s204
    %s206 = sphi 0, %s204
    %s207 = sphi 0, %s206
    %s221 = sphi 0, %s207
    %s225 = sphi 0, %s225
    %s227 = sphi 0, %s225
    %s228 = sphi 0, %s227
    %s242 = sphi 0, %s228
    %s246 = sphi 0, %s246
    %s248 = sphi 0, %s246
    %s249 = sphi 0, %s248
    %s263 = sphi 0, %s249
    %s267 = sphi 0, %s267
    %s269 = sphi 0, %s267
    %s270 = sphi 0, %s269
    %s284 = sphi 0, %s270
    %s288 = sphi 0, %s288
    %s290 = sphi 0, %s288
    %s291 = sphi 0, %s290
    %s305 = sphi 0, %s291
    %s309 = sphi 0, %s309
    %s311 = sphi 0, %s309
    %s312 = sphi 0, %s311
    %s326 = sphi 0, %s312
    %s330 = sphi 0, %s330
    %s332 = sphi 0, %s330
    %s333 = sphi 0, %s332
    %s347 = sphi 0, %s333
    %s351 = sphi 0, %s351
    %s353 = sphi 0, %s351
    %s354 = sphi 0, %s353
    %s368 = sphi 0, %s354
    %s372 = sphi 0, %s372
    %s374 = sphi 0, %s372
    %s375 = sphi 0, %s374
    %s389 = sphi 0, %s375
    %s393 = sphi 0, %s393
    %s395 = sphi 0, %s393
    %s396 = sphi 0, %s395
    %s410 = sphi 0, %s396
    %s414 = sphi 0, %s414
    %s416 = sphi 0, %s414
    %s417 = sphi 0, %s416
    %s431 = sphi 0, %s417
    %s435 = sphi 0, %s435
    %s437 = sphi 0, %s435
    %s438 = sphi 0, %s437
    %s452 = sphi 0, %s438
    %s456 = sphi 0, %s456
    %s458 = sphi 0, %s456
    %s459 = sphi 0, %s458
    %s473 = sphi 0, %s459
    %s477 = sphi 0, %s477
    %s479 = sphi 0, %s477
    %s480 = sphi 0, %s479
    %s494 = sphi 0, %s480
    %s498 = sphi 0, %s498
    %s500 = sphi 0, %s498
    %s501 = sphi 0, %s500
    %s515 = sphi 0, %s501
    %s519 = sphi 0, %s519
    %s521 = sphi 0, %s519
    %s522 = sphi 0, %s521
    %s536 = sphi 0, %s522
    %s542 = sphi 0, %s544
    %s545 = sphi 0, %s542
    %s546 = sphi 0, %s545
    %s562 = sphi 0, %s546
    %s568 = sphi 0, %s570
    %s571 = sphi 0, %s568
    %s572 = sphi 0, %s571
    %s588 = sphi 0, %s572
    %s594 = sphi 0, %s596
    %s597 = sphi 0, %s594
    %s598 = sphi 0, %s597
    %s614 = sphi 0, %s598
  $region4: #{unet_fire_forward.1} parent=0 // loop_header_branch
    %37 = sbr.rel (%p35) target = $region8
  $region5: #{unet_fire_forward.1} parent=0 // loop_body
    %s39 = ssub.s32 %s34, 1
    %s40 = ssub.s32 %s34, 2
    %s41 = sadd.s32 %s34, 1
    %s42 = ssub.s32 %s34, %s41
    %p43 = scmp.eq.s32.totalorder %s42, 0
    %s45 = sadd.s32 %s44, 1
    %s46 = scalar_select %p43, %s44, %s45
    %p49 = pneg %p43
    %p50 = scmp.eq.s32.totalorder %s34, 1
    %p51 = por %p49, %p50
    %p52 = scmp.ne.s32.totalorder %s44, %s47
    %p53 = scmp.eq.s32.totalorder %s34, 0
    %p54 = por %p52, %p53
    %p55 = scmp.ne.s32.totalorder %s44, %s47
    %p56 = scmp.eq.s32.totalorder %s39, 1
    %p57 = por %p55, %p56
    %p58 = scmp.ne.s32.totalorder %s47, %s48
    %p59 = scmp.eq.s32.totalorder %s39, 0
    %p60 = por %p58, %p59
    %p61 = scmp.ne.s32.totalorder %s47, %s48
    %p62 = scmp.eq.s32.totalorder %s40, 1
    %p63 = por %p61, %p62
    %p65 = scmp.ne.s32.totalorder %s48, %s64
    %p66 = scmp.eq.s32.totalorder %s40, 0
    %p67 = por %p65, %p66
    %s68 = ssub.s32 %s34, %s41
    %p69 = scmp.eq.s32.totalorder %s68, 0
    %s71 = sadd.s32 %s70, 1
    %s72 = scalar_select %p69, %s70, %s71
    %p75 = pneg %p69
    %p76 = scmp.eq.s32.totalorder %s34, 1
    %p77 = por %p75, %p76
    %p78 = scmp.ne.s32.totalorder %s70, %s73
    %p79 = scmp.eq.s32.totalorder %s34, 0
    %p80 = por %p78, %p79
    %p81 = scmp.ne.s32.totalorder %s70, %s73
    %p82 = scmp.eq.s32.totalorder %s39, 1
    %p83 = por %p81, %p82
    %p84 = scmp.ne.s32.totalorder %s73, %s74
    %p85 = scmp.eq.s32.totalorder %s39, 0
    %p86 = por %p84, %p85
    %p87 = scmp.ne.s32.totalorder %s73, %s74
    %p88 = scmp.eq.s32.totalorder %s40, 1
    %p89 = por %p87, %p88
    %p91 = scmp.ne.s32.totalorder %s74, %s90
    %p92 = scmp.eq.s32.totalorder %s40, 0
    %p93 = por %p91, %p92
    %s94 = ssub.s32 %s34, %s41
    %p95 = scmp.eq.s32.totalorder %s94, 0
    %s97 = sadd.s32 %s96, 1
    %s98 = scalar_select %p95, %s96, %s97
    %p101 = pneg %p95
    %p102 = scmp.eq.s32.totalorder %s34, 1
    %p103 = por %p101, %p102
    %p104 = scmp.ne.s32.totalorder %s96, %s99
    %p105 = scmp.eq.s32.totalorder %s34, 0
    %p106 = por %p104, %p105
    %p107 = scmp.ne.s32.totalorder %s96, %s99
    %p108 = scmp.eq.s32.totalorder %s39, 1
    %p109 = por %p107, %p108
    %p110 = scmp.ne.s32.totalorder %s99, %s100
    %p111 = scmp.eq.s32.totalorder %s39, 0
    %p112 = por %p110, %p111
    %p113 = scmp.ne.s32.totalorder %s99, %s100
    %p114 = scmp.eq.s32.totalorder %s40, 1
    %p115 = por %p113, %p114
    %p117 = scmp.ne.s32.totalorder %s100, %s116
    %p118 = scmp.eq.s32.totalorder %s40, 0
    %p119 = por %p117, %p118
    %s121 = sadd.s32 %s120, 1
    %p124 = scmp.eq.s32.totalorder %s34, 1
    %p125 = scmp.ne.s32.totalorder %s120, %s122
    %p126 = scmp.eq.s32.totalorder %s34, 0
    %p127 = por %p125, %p126
    %p128 = scmp.ne.s32.totalorder %s120, %s122
    %p129 = scmp.eq.s32.totalorder %s39, 1
    %p130 = por %p128, %p129
    %p131 = scmp.ne.s32.totalorder %s122, %s123
    %p132 = scmp.eq.s32.totalorder %s39, 0
    %p133 = por %p131, %p132
    %p134 = scmp.ne.s32.totalorder %s122, %s123
    %p135 = scmp.eq.s32.totalorder %s40, 1
    %p136 = por %p134, %p135
    %p138 = scmp.ne.s32.totalorder %s123, %s137
    %p139 = scmp.eq.s32.totalorder %s40, 0
    %p140 = por %p138, %p139
    %s142 = sadd.s32 %s141, 1
    %p145 = scmp.eq.s32.totalorder %s34, 1
    %p146 = scmp.ne.s32.totalorder %s141, %s143
    %p147 = scmp.eq.s32.totalorder %s34, 0
    %p148 = por %p146, %p147
    %p149 = scmp.ne.s32.totalorder %s141, %s143
    %p150 = scmp.eq.s32.totalorder %s39, 1
    %p151 = por %p149, %p150
    %p152 = scmp.ne.s32.totalorder %s143, %s144
    %p153 = scmp.eq.s32.totalorder %s39, 0
    %p154 = por %p152, %p153
    %p155 = scmp.ne.s32.totalorder %s143, %s144
    %p156 = scmp.eq.s32.totalorder %s40, 1
    %p157 = por %p155, %p156
    %p159 = scmp.ne.s32.totalorder %s144, %s158
    %p160 = scmp.eq.s32.totalorder %s40, 0
    %p161 = por %p159, %p160
    %s163 = sadd.s32 %s162, 1
    %p166 = scmp.eq.s32.totalorder %s34, 1
    %p167 = scmp.ne.s32.totalorder %s162, %s164
    %p168 = scmp.eq.s32.totalorder %s34, 0
    %p169 = por %p167, %p168
    %p170 = scmp.ne.s32.totalorder %s162, %s164
    %p171 = scmp.eq.s32.totalorder %s39, 1
    %p172 = por %p170, %p171
    %p173 = scmp.ne.s32.totalorder %s164, %s165
    %p174 = scmp.eq.s32.totalorder %s39, 0
    %p175 = por %p173, %p174
    %p176 = scmp.ne.s32.totalorder %s164, %s165
    %p177 = scmp.eq.s32.totalorder %s40, 1
    %p178 = por %p176, %p177
    %p180 = scmp.ne.s32.totalorder %s165, %s179
    %p181 = scmp.eq.s32.totalorder %s40, 0
    %p182 = por %p180, %p181
    %s184 = sadd.s32 %s183, 1
    %p187 = scmp.eq.s32.totalorder %s34, 1
    %p188 = scmp.ne.s32.totalorder %s183, %s185
    %p189 = scmp.eq.s32.totalorder %s34, 0
    %p190 = por %p188, %p189
    %p191 = scmp.ne.s32.totalorder %s183, %s185
    %p192 = scmp.eq.s32.totalorder %s39, 1
    %p193 = por %p191, %p192
    %p194 = scmp.ne.s32.totalorder %s185, %s186
    %p195 = scmp.eq.s32.totalorder %s39, 0
    %p196 = por %p194, %p195
    %p197 = scmp.ne.s32.totalorder %s185, %s186
    %p198 = scmp.eq.s32.totalorder %s40, 1
    %p199 = por %p197, %p198
    %p201 = scmp.ne.s32.totalorder %s186, %s200
    %p202 = scmp.eq.s32.totalorder %s40, 0
    %p203 = por %p201, %p202
    %s205 = sadd.s32 %s204, 1
    %p208 = scmp.eq.s32.totalorder %s34, 1
    %p209 = scmp.ne.s32.totalorder %s204, %s206
    %p210 = scmp.eq.s32.totalorder %s34, 0
    %p211 = por %p209, %p210
    %p212 = scmp.ne.s32.totalorder %s204, %s206
    %p213 = scmp.eq.s32.totalorder %s39, 1
    %p214 = por %p212, %p213
    %p215 = scmp.ne.s32.totalorder %s206, %s207
    %p216 = scmp.eq.s32.totalorder %s39, 0
    %p217 = por %p215, %p216
    %p218 = scmp.ne.s32.totalorder %s206, %s207
    %p219 = scmp.eq.s32.totalorder %s40, 1
    %p220 = por %p218, %p219
    %p222 = scmp.ne.s32.totalorder %s207, %s221
    %p223 = scmp.eq.s32.totalorder %s40, 0
    %p224 = por %p222, %p223
    %s226 = sadd.s32 %s225, 1
    %p229 = scmp.eq.s32.totalorder %s34, 1
    %p230 = scmp.ne.s32.totalorder %s225, %s227
    %p231 = scmp.eq.s32.totalorder %s34, 0
    %p232 = por %p230, %p231
    %p233 = scmp.ne.s32.totalorder %s225, %s227
    %p234 = scmp.eq.s32.totalorder %s39, 1
    %p235 = por %p233, %p234
    %p236 = scmp.ne.s32.totalorder %s227, %s228
    %p237 = scmp.eq.s32.totalorder %s39, 0
    %p238 = por %p236, %p237
    %p239 = scmp.ne.s32.totalorder %s227, %s228
    %p240 = scmp.eq.s32.totalorder %s40, 1
    %p241 = por %p239, %p240
    %p243 = scmp.ne.s32.totalorder %s228, %s242
    %p244 = scmp.eq.s32.totalorder %s40, 0
    %p245 = por %p243, %p244
    %s247 = sadd.s32 %s246, 1
    %p250 = scmp.eq.s32.totalorder %s34, 1
    %p251 = scmp.ne.s32.totalorder %s246, %s248
    %p252 = scmp.eq.s32.totalorder %s34, 0
    %p253 = por %p251, %p252
    %p254 = scmp.ne.s32.totalorder %s246, %s248
    %p255 = scmp.eq.s32.totalorder %s39, 1
    %p256 = por %p254, %p255
    %p257 = scmp.ne.s32.totalorder %s248, %s249
    %p258 = scmp.eq.s32.totalorder %s39, 0
    %p259 = por %p257, %p258
    %p260 = scmp.ne.s32.totalorder %s248, %s249
    %p261 = scmp.eq.s32.totalorder %s40, 1
    %p262 = por %p260, %p261
    %p264 = scmp.ne.s32.totalorder %s249, %s263
    %p265 = scmp.eq.s32.totalorder %s40, 0
    %p266 = por %p264, %p265
    %s268 = sadd.s32 %s267, 1
    %p271 = scmp.eq.s32.totalorder %s34, 1
    %p272 = scmp.ne.s32.totalorder %s267, %s269
    %p273 = scmp.eq.s32.totalorder %s34, 0
    %p274 = por %p272, %p273
    %p275 = scmp.ne.s32.totalorder %s267, %s269
    %p276 = scmp.eq.s32.totalorder %s39, 1
    %p277 = por %p275, %p276
    %p278 = scmp.ne.s32.totalorder %s269, %s270
    %p279 = scmp.eq.s32.totalorder %s39, 0
    %p280 = por %p278, %p279
    %p281 = scmp.ne.s32.totalorder %s269, %s270
    %p282 = scmp.eq.s32.totalorder %s40, 1
    %p283 = por %p281, %p282
    %p285 = scmp.ne.s32.totalorder %s270, %s284
    %p286 = scmp.eq.s32.totalorder %s40, 0
    %p287 = por %p285, %p286
    %s289 = sadd.s32 %s288, 1
    %p292 = scmp.eq.s32.totalorder %s34, 1
    %p293 = scmp.ne.s32.totalorder %s288, %s290
    %p294 = scmp.eq.s32.totalorder %s34, 0
    %p295 = por %p293, %p294
    %p296 = scmp.ne.s32.totalorder %s288, %s290
    %p297 = scmp.eq.s32.totalorder %s39, 1
    %p298 = por %p296, %p297
    %p299 = scmp.ne.s32.totalorder %s290, %s291
    %p300 = scmp.eq.s32.totalorder %s39, 0
    %p301 = por %p299, %p300
    %p302 = scmp.ne.s32.totalorder %s290, %s291
    %p303 = scmp.eq.s32.totalorder %s40, 1
    %p304 = por %p302, %p303
    %p306 = scmp.ne.s32.totalorder %s291, %s305
    %p307 = scmp.eq.s32.totalorder %s40, 0
    %p308 = por %p306, %p307
    %s310 = sadd.s32 %s309, 1
    %p313 = scmp.eq.s32.totalorder %s34, 1
    %p314 = scmp.ne.s32.totalorder %s309, %s311
    %p315 = scmp.eq.s32.totalorder %s34, 0
    %p316 = por %p314, %p315
    %p317 = scmp.ne.s32.totalorder %s309, %s311
    %p318 = scmp.eq.s32.totalorder %s39, 1
    %p319 = por %p317, %p318
    %p320 = scmp.ne.s32.totalorder %s311, %s312
    %p321 = scmp.eq.s32.totalorder %s39, 0
    %p322 = por %p320, %p321
    %p323 = scmp.ne.s32.totalorder %s311, %s312
    %p324 = scmp.eq.s32.totalorder %s40, 1
    %p325 = por %p323, %p324
    %p327 = scmp.ne.s32.totalorder %s312, %s326
    %p328 = scmp.eq.s32.totalorder %s40, 0
    %p329 = por %p327, %p328
    %s331 = sadd.s32 %s330, 1
    %p334 = scmp.eq.s32.totalorder %s34, 1
    %p335 = scmp.ne.s32.totalorder %s330, %s332
    %p336 = scmp.eq.s32.totalorder %s34, 0
    %p337 = por %p335, %p336
    %p338 = scmp.ne.s32.totalorder %s330, %s332
    %p339 = scmp.eq.s32.totalorder %s39, 1
    %p340 = por %p338, %p339
    %p341 = scmp.ne.s32.totalorder %s332, %s333
    %p342 = scmp.eq.s32.totalorder %s39, 0
    %p343 = por %p341, %p342
    %p344 = scmp.ne.s32.totalorder %s332, %s333
    %p345 = scmp.eq.s32.totalorder %s40, 1
    %p346 = por %p344, %p345
    %p348 = scmp.ne.s32.totalorder %s333, %s347
    %p349 = scmp.eq.s32.totalorder %s40, 0
    %p350 = por %p348, %p349
    %s352 = sadd.s32 %s351, 1
    %p355 = scmp.eq.s32.totalorder %s34, 1
    %p356 = scmp.ne.s32.totalorder %s351, %s353
    %p357 = scmp.eq.s32.totalorder %s34, 0
    %p358 = por %p356, %p357
    %p359 = scmp.ne.s32.totalorder %s351, %s353
    %p360 = scmp.eq.s32.totalorder %s39, 1
    %p361 = por %p359, %p360
    %p362 = scmp.ne.s32.totalorder %s353, %s354
    %p363 = scmp.eq.s32.totalorder %s39, 0
    %p364 = por %p362, %p363
    %p365 = scmp.ne.s32.totalorder %s353, %s354
    %p366 = scmp.eq.s32.totalorder %s40, 1
    %p367 = por %p365, %p366
    %p369 = scmp.ne.s32.totalorder %s354, %s368
    %p370 = scmp.eq.s32.totalorder %s40, 0
    %p371 = por %p369, %p370
    %s373 = sadd.s32 %s372, 1
    %p376 = scmp.eq.s32.totalorder %s34, 1
    %p377 = scmp.ne.s32.totalorder %s372, %s374
    %p378 = scmp.eq.s32.totalorder %s34, 0
    %p379 = por %p377, %p378
    %p380 = scmp.ne.s32.totalorder %s372, %s374
    %p381 = scmp.eq.s32.totalorder %s39, 1
    %p382 = por %p380, %p381
    %p383 = scmp.ne.s32.totalorder %s374, %s375
    %p384 = scmp.eq.s32.totalorder %s39, 0
    %p385 = por %p383, %p384
    %p386 = scmp.ne.s32.totalorder %s374, %s375
    %p387 = scmp.eq.s32.totalorder %s40, 1
    %p388 = por %p386, %p387
    %p390 = scmp.ne.s32.totalorder %s375, %s389
    %p391 = scmp.eq.s32.totalorder %s40, 0
    %p392 = por %p390, %p391
    %s394 = sadd.s32 %s393, 1
    %p397 = scmp.eq.s32.totalorder %s34, 1
    %p398 = scmp.ne.s32.totalorder %s393, %s395
    %p399 = scmp.eq.s32.totalorder %s34, 0
    %p400 = por %p398, %p399
    %p401 = scmp.ne.s32.totalorder %s393, %s395
    %p402 = scmp.eq.s32.totalorder %s39, 1
    %p403 = por %p401, %p402
    %p404 = scmp.ne.s32.totalorder %s395, %s396
    %p405 = scmp.eq.s32.totalorder %s39, 0
    %p406 = por %p404, %p405
    %p407 = scmp.ne.s32.totalorder %s395, %s396
    %p408 = scmp.eq.s32.totalorder %s40, 1
    %p409 = por %p407, %p408
    %p411 = scmp.ne.s32.totalorder %s396, %s410
    %p412 = scmp.eq.s32.totalorder %s40, 0
    %p413 = por %p411, %p412
    %s415 = sadd.s32 %s414, 1
    %p418 = scmp.eq.s32.totalorder %s34, 1
    %p419 = scmp.ne.s32.totalorder %s414, %s416
    %p420 = scmp.eq.s32.totalorder %s34, 0
    %p421 = por %p419, %p420
    %p422 = scmp.ne.s32.totalorder %s414, %s416
    %p423 = scmp.eq.s32.totalorder %s39, 1
    %p424 = por %p422, %p423
    %p425 = scmp.ne.s32.totalorder %s416, %s417
    %p426 = scmp.eq.s32.totalorder %s39, 0
    %p427 = por %p425, %p426
    %p428 = scmp.ne.s32.totalorder %s416, %s417
    %p429 = scmp.eq.s32.totalorder %s40, 1
    %p430 = por %p428, %p429
    %p432 = scmp.ne.s32.totalorder %s417, %s431
    %p433 = scmp.eq.s32.totalorder %s40, 0
    %p434 = por %p432, %p433
    %s436 = sadd.s32 %s435, 1
    %p439 = scmp.eq.s32.totalorder %s34, 1
    %p440 = scmp.ne.s32.totalorder %s435, %s437
    %p441 = scmp.eq.s32.totalorder %s34, 0
    %p442 = por %p440, %p441
    %p443 = scmp.ne.s32.totalorder %s435, %s437
    %p444 = scmp.eq.s32.totalorder %s39, 1
    %p445 = por %p443, %p444
    %p446 = scmp.ne.s32.totalorder %s437, %s438
    %p447 = scmp.eq.s32.totalorder %s39, 0
    %p448 = por %p446, %p447
    %p449 = scmp.ne.s32.totalorder %s437, %s438
    %p450 = scmp.eq.s32.totalorder %s40, 1
    %p451 = por %p449, %p450
    %p453 = scmp.ne.s32.totalorder %s438, %s452
    %p454 = scmp.eq.s32.totalorder %s40, 0
    %p455 = por %p453, %p454
    %s457 = sadd.s32 %s456, 1
    %p460 = scmp.eq.s32.totalorder %s34, 1
    %p461 = scmp.ne.s32.totalorder %s456, %s458
    %p462 = scmp.eq.s32.totalorder %s34, 0
    %p463 = por %p461, %p462
    %p464 = scmp.ne.s32.totalorder %s456, %s458
    %p465 = scmp.eq.s32.totalorder %s39, 1
    %p466 = por %p464, %p465
    %p467 = scmp.ne.s32.totalorder %s458, %s459
    %p468 = scmp.eq.s32.totalorder %s39, 0
    %p469 = por %p467, %p468
    %p470 = scmp.ne.s32.totalorder %s458, %s459
    %p471 = scmp.eq.s32.totalorder %s40, 1
    %p472 = por %p470, %p471
    %p474 = scmp.ne.s32.totalorder %s459, %s473
    %p475 = scmp.eq.s32.totalorder %s40, 0
    %p476 = por %p474, %p475
    %s478 = sadd.s32 %s477, 1
    %p481 = scmp.eq.s32.totalorder %s34, 1
    %p482 = scmp.ne.s32.totalorder %s477, %s479
    %p483 = scmp.eq.s32.totalorder %s34, 0
    %p484 = por %p482, %p483
    %p485 = scmp.ne.s32.totalorder %s477, %s479
    %p486 = scmp.eq.s32.totalorder %s39, 1
    %p487 = por %p485, %p486
    %p488 = scmp.ne.s32.totalorder %s479, %s480
    %p489 = scmp.eq.s32.totalorder %s39, 0
    %p490 = por %p488, %p489
    %p491 = scmp.ne.s32.totalorder %s479, %s480
    %p492 = scmp.eq.s32.totalorder %s40, 1
    %p493 = por %p491, %p492
    %p495 = scmp.ne.s32.totalorder %s480, %s494
    %p496 = scmp.eq.s32.totalorder %s40, 0
    %p497 = por %p495, %p496
    %s499 = sadd.s32 %s498, 1
    %p502 = scmp.eq.s32.totalorder %s34, 1
    %p503 = scmp.ne.s32.totalorder %s498, %s500
    %p504 = scmp.eq.s32.totalorder %s34, 0
    %p505 = por %p503, %p504
    %p506 = scmp.ne.s32.totalorder %s498, %s500
    %p507 = scmp.eq.s32.totalorder %s39, 1
    %p508 = por %p506, %p507
    %p509 = scmp.ne.s32.totalorder %s500, %s501
    %p510 = scmp.eq.s32.totalorder %s39, 0
    %p511 = por %p509, %p510
    %p512 = scmp.ne.s32.totalorder %s500, %s501
    %p513 = scmp.eq.s32.totalorder %s40, 1
    %p514 = por %p512, %p513
    %p516 = scmp.ne.s32.totalorder %s501, %s515
    %p517 = scmp.eq.s32.totalorder %s40, 0
    %p518 = por %p516, %p517
    %s520 = sadd.s32 %s519, 1
    %p523 = scmp.eq.s32.totalorder %s34, 1
    %p524 = scmp.ne.s32.totalorder %s519, %s521
    %p525 = scmp.eq.s32.totalorder %s34, 0
    %p526 = por %p524, %p525
    %p527 = scmp.ne.s32.totalorder %s519, %s521
    %p528 = scmp.eq.s32.totalorder %s39, 1
    %p529 = por %p527, %p528
    %p530 = scmp.ne.s32.totalorder %s521, %s522
    %p531 = scmp.eq.s32.totalorder %s39, 0
    %p532 = por %p530, %p531
    %p533 = scmp.ne.s32.totalorder %s521, %s522
    %p534 = scmp.eq.s32.totalorder %s40, 1
    %p535 = por %p533, %p534
    %p537 = scmp.ne.s32.totalorder %s522, %s536
    %p538 = scmp.eq.s32.totalorder %s40, 0
    %p539 = por %p537, %p538
    %s540 = ssub.s32 %s34, %s41
    %p541 = scmp.eq.s32.totalorder %s540, 0
    %s543 = sadd.s32 %s542, 1
    %s544 = scalar_select %p541, %s542, %s543
    %p547 = pneg %p541
    %p548 = scmp.eq.s32.totalorder %s34, 1
    %p549 = por %p547, %p548
    %p550 = scmp.ne.s32.totalorder %s542, %s545
    %p551 = scmp.eq.s32.totalorder %s34, 0
    %p552 = por %p550, %p551
    %p553 = scmp.ne.s32.totalorder %s542, %s545
    %p554 = scmp.eq.s32.totalorder %s39, 1
    %p555 = por %p553, %p554
    %p556 = scmp.ne.s32.totalorder %s545, %s546
    %p557 = scmp.eq.s32.totalorder %s39, 0
    %p558 = por %p556, %p557
    %p559 = scmp.ne.s32.totalorder %s545, %s546
    %p560 = scmp.eq.s32.totalorder %s40, 1
    %p561 = por %p559, %p560
    %p563 = scmp.ne.s32.totalorder %s546, %s562
    %p564 = scmp.eq.s32.totalorder %s40, 0
    %p565 = por %p563, %p564
    %s566 = ssub.s32 %s34, %s41
    %p567 = scmp.eq.s32.totalorder %s566, 0
    %s569 = sadd.s32 %s568, 1
    %s570 = scalar_select %p567, %s568, %s569
    %p573 = pneg %p567
    %p574 = scmp.eq.s32.totalorder %s34, 1
    %p575 = por %p573, %p574
    %p576 = scmp.ne.s32.totalorder %s568, %s571
    %p577 = scmp.eq.s32.totalorder %s34, 0
    %p578 = por %p576, %p577
    %p579 = scmp.ne.s32.totalorder %s568, %s571
    %p580 = scmp.eq.s32.totalorder %s39, 1
    %p581 = por %p579, %p580
    %p582 = scmp.ne.s32.totalorder %s571, %s572
    %p583 = scmp.eq.s32.totalorder %s39, 0
    %p584 = por %p582, %p583
    %p585 = scmp.ne.s32.totalorder %s571, %s572
    %p586 = scmp.eq.s32.totalorder %s40, 1
    %p587 = por %p585, %p586
    %p589 = scmp.ne.s32.totalorder %s572, %s588
    %p590 = scmp.eq.s32.totalorder %s40, 0
    %p591 = por %p589, %p590
    %s592 = ssub.s32 %s34, %s41
    %p593 = scmp.eq.s32.totalorder %s592, 0
    %s595 = sadd.s32 %s594, 1
    %s596 = scalar_select %p593, %s594, %s595
    %p599 = pneg %p593
    %p600 = scmp.eq.s32.totalorder %s34, 1
    %p601 = por %p599, %p600
    %p602 = scmp.ne.s32.totalorder %s594, %s597
    %p603 = scmp.eq.s32.totalorder %s34, 0
    %p604 = por %p602, %p603
    %p605 = scmp.ne.s32.totalorder %s594, %s597
    %p606 = scmp.eq.s32.totalorder %s39, 1
    %p607 = por %p605, %p606
    %p608 = scmp.ne.s32.totalorder %s597, %s598
    %p609 = scmp.eq.s32.totalorder %s39, 0
    %p610 = por %p608, %p609
    %p611 = scmp.ne.s32.totalorder %s597, %s598
    %p612 = scmp.eq.s32.totalorder %s40, 1
    %p613 = por %p611, %p612
    %p615 = scmp.ne.s32.totalorder %s598, %s614
    %p616 = scmp.eq.s32.totalorder %s40, 0
    %p617 = por %p615, %p616
    %p618 = scmp.le.s32.totalorder 1, %s34
    %p619 = scmp.lt.s32.totalorder %s34, 3
    %p620 = pnand %p618, %p619
    %p621 = pneg %p620
    // Predicated region
    $region9: #{unet_fire_forward.1} parent=5 // pred_check
      _
    $region10: #{unet_fire_forward.1} parent=5 // pred_check_branch
      %623 = sbr.rel (%p620) target = $region12
    $region11: #{unet_fire_forward.1} parent=5 // pred_region
      %s624 = ssub.s32 %s34, 1
      // Predicated region
      $region13: #{unet_fire_forward.1} parent=11 // pred_check
        %p625 = pneg %p133
      $region14: #{unet_fire_forward.1} parent=11 // pred_check_branch
        %627 = sbr.rel (%p625) target = $region16
      $region15: #{unet_fire_forward.1} parent=11 // pred_region
        _
      $region16: #{unet_fire_forward.1} parent=11 // pred_fallthru
        _
      // Predicated region
      $region17: #{unet_fire_forward.1} parent=11 // pred_check
        %p628 = pneg %p154
      $region18: #{unet_fire_forward.1} parent=11 // pred_check_branch
        %630 = sbr.rel (%p628) target = $region20
      $region19: #{unet_fire_forward.1} parent=11 // pred_region
        _
      $region20: #{unet_fire_forward.1} parent=11 // pred_fallthru
        _
      // Predicated region
      $region21: #{unet_fire_forward.1} parent=11 // pred_check
        %p631 = pneg %p175
      $region22: #{unet_fire_forward.1} parent=11 // pred_check_branch
        %633 = sbr.rel (%p631) target = $region24
      $region23: #{unet_fire_forward.1} parent=11 // pred_region
        _
      $region24: #{unet_fire_forward.1} parent=11 // pred_fallthru
        _
      // Predicated region
      $region25: #{unet_fire_forward.1} parent=11 // pred_check
        %p634 = pneg %p196
      $region26: #{unet_fire_forward.1} parent=11 // pred_check_branch
        %636 = sbr.rel (%p634) target = $region28
      $region27: #{unet_fire_forward.1} parent=11 // pred_region
        _
      $region28: #{unet_fire_forward.1} parent=11 // pred_fallthru
        _
      // Predicated region
      $region29: #{unet_fire_forward.1} parent=11 // pred_check
        %p637 = pneg %p217
      $region30: #{unet_fire_forward.1} parent=11 // pred_check_branch
        %639 = sbr.rel (%p637) target = $region32
      $region31: #{unet_fire_forward.1} parent=11 // pred_region
        _
      $region32: #{unet_fire_forward.1} parent=11 // pred_fallthru
        _
      // Predicated region
      $region33: #{unet_fire_forward.1} parent=11 // pred_check
        %p640 = pneg %p238
      $region34: #{unet_fire_forward.1} parent=11 // pred_check_branch
        %642 = sbr.rel (%p640) target = $region36
      $region35: #{unet_fire_forward.1} parent=11 // pred_region
        _
      $region36: #{unet_fire_forward.1} parent=11 // pred_fallthru
        _
      // Predicated region
      $region37: #{unet_fire_forward.1} parent=11 // pred_check
        %p643 = pneg %p259
      $region38: #{unet_fire_forward.1} parent=11 // pred_check_branch
        %645 = sbr.rel (%p643) target = $region40
      $region39: #{unet_fire_forward.1} parent=11 // pred_region
        _
      $region40: #{unet_fire_forward.1} parent=11 // pred_fallthru
        _
      // Predicated region
      $region41: #{unet_fire_forward.1} parent=11 // pred_check
        %p646 = pneg %p280
      $region42: #{unet_fire_forward.1} parent=11 // pred_check_branch
        %648 = sbr.rel (%p646) target = $region44
      $region43: #{unet_fire_forward.1} parent=11 // pred_region
        _
      $region44: #{unet_fire_forward.1} parent=11 // pred_fallthru
        _
      // Predicated region
      $region45: #{unet_fire_forward.1} parent=11 // pred_check
        %p649 = pneg %p301
      $region46: #{unet_fire_forward.1} parent=11 // pred_check_branch
        %651 = sbr.rel (%p649) target = $region48
      $region47: #{unet_fire_forward.1} parent=11 // pred_region
        _
      $region48: #{unet_fire_forward.1} parent=11 // pred_fallthru
        _
      // Predicated region
      $region49: #{unet_fire_forward.1} parent=11 // pred_check
        %p652 = pneg %p322
      $region50: #{unet_fire_forward.1} parent=11 // pred_check_branch
        %654 = sbr.rel (%p652) target = $region52
      $region51: #{unet_fire_forward.1} parent=11 // pred_region
        _
      $region52: #{unet_fire_forward.1} parent=11 // pred_fallthru
        _
      // Predicated region
      $region53: #{unet_fire_forward.1} parent=11 // pred_check
        %p655 = pneg %p343
      $region54: #{unet_fire_forward.1} parent=11 // pred_check_branch
        %657 = sbr.rel (%p655) target = $region56
      $region55: #{unet_fire_forward.1} parent=11 // pred_region
        _
      $region56: #{unet_fire_forward.1} parent=11 // pred_fallthru
        _
      // Predicated region
      $region57: #{unet_fire_forward.1} parent=11 // pred_check
        %p658 = pneg %p364
      $region58: #{unet_fire_forward.1} parent=11 // pred_check_branch
        %660 = sbr.rel (%p658) target = $region60
      $region59: #{unet_fire_forward.1} parent=11 // pred_region
        _
      $region60: #{unet_fire_forward.1} parent=11 // pred_fallthru
        _
      // Predicated region
      $region61: #{unet_fire_forward.1} parent=11 // pred_check
        %p661 = pneg %p385
      $region62: #{unet_fire_forward.1} parent=11 // pred_check_branch
        %663 = sbr.rel (%p661) target = $region64
      $region63: #{unet_fire_forward.1} parent=11 // pred_region
        _
      $region64: #{unet_fire_forward.1} parent=11 // pred_fallthru
        _
      // Predicated region
      $region65: #{unet_fire_forward.1} parent=11 // pred_check
        %p664 = pneg %p406
      $region66: #{unet_fire_forward.1} parent=11 // pred_check_branch
        %666 = sbr.rel (%p664) target = $region68
      $region67: #{unet_fire_forward.1} parent=11 // pred_region
        _
      $region68: #{unet_fire_forward.1} parent=11 // pred_fallthru
        _
      // Predicated region
      $region69: #{unet_fire_forward.1} parent=11 // pred_check
        %p667 = pneg %p427
      $region70: #{unet_fire_forward.1} parent=11 // pred_check_branch
        %669 = sbr.rel (%p667) target = $region72
      $region71: #{unet_fire_forward.1} parent=11 // pred_region
        _
      $region72: #{unet_fire_forward.1} parent=11 // pred_fallthru
        _
      // Predicated region
      $region73: #{unet_fire_forward.1} parent=11 // pred_check
        %p670 = pneg %p448
      $region74: #{unet_fire_forward.1} parent=11 // pred_check_branch
        %672 = sbr.rel (%p670) target = $region76
      $region75: #{unet_fire_forward.1} parent=11 // pred_region
        _
      $region76: #{unet_fire_forward.1} parent=11 // pred_fallthru
        _
      // Predicated region
      $region77: #{unet_fire_forward.1} parent=11 // pred_check
        %p673 = pneg %p469
      $region78: #{unet_fire_forward.1} parent=11 // pred_check_branch
        %675 = sbr.rel (%p673) target = $region80
      $region79: #{unet_fire_forward.1} parent=11 // pred_region
        _
      $region80: #{unet_fire_forward.1} parent=11 // pred_fallthru
        _
      // Predicated region
      $region81: #{unet_fire_forward.1} parent=11 // pred_check
        %p676 = pneg %p490
      $region82: #{unet_fire_forward.1} parent=11 // pred_check_branch
        %678 = sbr.rel (%p676) target = $region84
      $region83: #{unet_fire_forward.1} parent=11 // pred_region
        _
      $region84: #{unet_fire_forward.1} parent=11 // pred_fallthru
        _
      // Predicated region
      $region85: #{unet_fire_forward.1} parent=11 // pred_check
        %p679 = pneg %p511
      $region86: #{unet_fire_forward.1} parent=11 // pred_check_branch
        %681 = sbr.rel (%p679) target = $region88
      $region87: #{unet_fire_forward.1} parent=11 // pred_region
        _
      $region88: #{unet_fire_forward.1} parent=11 // pred_fallthru
        _
      // Predicated region
      $region89: #{unet_fire_forward.1} parent=11 // pred_check
        %p682 = pneg %p532
      $region90: #{unet_fire_forward.1} parent=11 // pred_check_branch
        %684 = sbr.rel (%p682) target = $region92
      $region91: #{unet_fire_forward.1} parent=11 // pred_region
        _
      $region92: #{unet_fire_forward.1} parent=11 // pred_fallthru
        _
    $region12: #{unet_fire_forward.1} parent=5 // pred_fallthru
      _
    %p685 = scmp.lt.s32.totalorder %s34, 2
    // Predicated region
    $region93: #{unet_fire_forward.1} parent=5 // pred_check
      %p686 = pneg %p685
    $region94: #{unet_fire_forward.1} parent=5 // pred_check_branch
      %688 = sbr.rel (%p686) target = $region96
    $region95: #{unet_fire_forward.1} parent=5 // pred_region
      // Predicated region
      $region97: #{unet_fire_forward.1} parent=95 // pred_check
        %p689 = pneg %p54
      $region98: #{unet_fire_forward.1} parent=95 // pred_check_branch
        %691 = sbr.rel (%p689) target = $region100
      $region99: #{unet_fire_forward.1} parent=95 // pred_region
        %p692 = scmp.lt.s32.totalorder %s34, 1
        %s693 = scalar_select %p692, %s34, 1
        %s694 = smul.addr %s693, 2
        %s695 = smul.addr %s694, 4
        %s696 = scalar_lea.vmem %s0, %s695
      $region100: #{unet_fire_forward.1} parent=95 // pred_fallthru
        _
      // Predicated region
      $region101: #{unet_fire_forward.1} parent=95 // pred_check
        %p697 = pneg %p80
      $region102: #{unet_fire_forward.1} parent=95 // pred_check_branch
        %699 = sbr.rel (%p697) target = $region104
      $region103: #{unet_fire_forward.1} parent=95 // pred_region
        %p700 = scmp.lt.s32.totalorder %s34, 1
        %s701 = scalar_select %p700, %s34, 1
        %s702 = smul.addr %s701, 2
        %s703 = smul.addr %s702, 8
        %s704 = scalar_lea.vmem %s1, %s703
      $region104: #{unet_fire_forward.1} parent=95 // pred_fallthru
        _
      // Predicated region
      $region105: #{unet_fire_forward.1} parent=95 // pred_check
        %p705 = pneg %p106
      $region106: #{unet_fire_forward.1} parent=95 // pred_check_branch
        %707 = sbr.rel (%p705) target = $region108
      $region107: #{unet_fire_forward.1} parent=95 // pred_region
        %p708 = scmp.lt.s32.totalorder %s34, 1
        %s709 = scalar_select %p708, %s34, 1
        %s710 = smul.addr %s709, 2
        %s711 = smul.addr %s710, 8
        %s712 = scalar_lea.vmem %s2, %s711
      $region108: #{unet_fire_forward.1} parent=95 // pred_fallthru
        _
    $region96: #{unet_fire_forward.1} parent=5 // pred_fallthru
      _
    %p713 = scmp.le.s32.totalorder 1, %s34
    %p714 = scmp.lt.s32.totalorder %s34, 3
    %p715 = pnand %p713, %p714
    %p716 = pneg %p715
    // Predicated region
    $region109: #{unet_fire_forward.1} parent=5 // pred_check
      _
    $region110: #{unet_fire_forward.1} parent=5 // pred_check_branch
      %718 = sbr.rel (%p715) target = $region112
    $region111: #{unet_fire_forward.1} parent=5 // pred_region
      %s719 = ssub.s32 %s34, 1
      %p720 = scmp.lt.s32.totalorder %s39, 1
      %s721 = scalar_select %p720, %s39, 1
      %s722 = smul.addr %s721, 2
      %s723 = smul.addr %s722, 4
      %s724 = scalar_lea.vmem %s0, %s723
      %p725 = pneg %p60
      %p726 = pneg %p57
      %p727 = scmp.lt.s32.totalorder %s39, 1
      %s728 = scalar_select %p727, %s39, 1
      %s729 = smul.addr %s728, 2
      %s730 = smul.addr %s729, 8
      %s731 = scalar_lea.vmem %s1, %s730
      %p732 = pneg %p86
      %p733 = pneg %p83
      %p734 = scmp.lt.s32.totalorder %s39, 1
      %s735 = scalar_select %p734, %s39, 1
      %s736 = smul.addr %s735, 2
      %s737 = smul.addr %s736, 8
      %s738 = scalar_lea.vmem %s2, %s737
      %p739 = pneg %p112
      %p740 = pneg %p109
      %p741 = pneg %p133
      %p742 = pneg %p130
      %p743 = pneg %p154
      %p744 = pneg %p151
      %p745 = pneg %p175
      %p746 = pneg %p172
      %p747 = pneg %p196
      %p748 = pneg %p193
      %p749 = pneg %p217
      %p750 = pneg %p214
      %p751 = pneg %p238
      %p752 = pneg %p235
      %p753 = pneg %p259
      %p754 = pneg %p256
      %p755 = pneg %p280
      %p756 = pneg %p277
      %p757 = pneg %p301
      %p758 = pneg %p298
      %p759 = pneg %p322
      %p760 = pneg %p319
      %p761 = pneg %p343
      %p762 = pneg %p340
      %p763 = pneg %p364
      %p764 = pneg %p361
      %p765 = pneg %p385
      %p766 = pneg %p382
      %p767 = pneg %p406
      %p768 = pneg %p403
      %p769 = pneg %p427
      %p770 = pneg %p424
      %p771 = pneg %p448
      %p772 = pneg %p445
      %p773 = pneg %p469
      %p774 = pneg %p466
      %p775 = pneg %p490
      %p776 = pneg %p487
      %p777 = pneg %p511
      %p778 = pneg %p508
      %p779 = pneg %p532
      %p780 = pneg %p529
      %p781 = pneg %p558
      %p782 = pneg %p555
      %p783 = scmp.lt.s32.totalorder %s39, 1
      %s784 = scalar_select %p783, %s39, 1
      %s785 = smul.addr %s784, 2
      %s786 = scalar_lea.vmem %s23, %s785
      %p787 = pneg %p584
      %p788 = pneg %p581
      %p789 = scmp.lt.s32.totalorder %s39, 1
      %s790 = scalar_select %p789, %s39, 1
      %s791 = smul.addr %s790, 2
      %s792 = smul.addr %s791, 8
      %s793 = scalar_lea.vmem %s24, %s792
      %p794 = pneg %p610
      %p795 = pneg %p607
      %p796 = scmp.lt.s32.totalorder %s39, 1
      %s797 = scalar_select %p796, %s39, 1
      %s798 = smul.addr %s797, 2
      %s799 = smul.addr %s798, 8
      %s800 = scalar_lea.vmem %s25, %s799
      %p801 = scmp.lt.s32.totalorder %s39, 1
      %s802 = scalar_select %p801, %s39, 1
      %s803 = smul.addr %s802, 2
      %s804 = smul.addr %s803, 4
      %s805 = scalar_lea.vmem %s0, %s804
      %p806 = scmp.lt.s32.totalorder %s39, 1
      %s807 = scalar_select %p806, %s39, 1
      %s808 = smul.addr %s807, 2
      %s809 = smul.addr %s808, 8
      %s810 = scalar_lea.vmem %s1, %s809
      %p811 = scmp.lt.s32.totalorder %s39, 1
      %s812 = scalar_select %p811, %s39, 1
      %s813 = smul.addr %s812, 2
      %s814 = smul.addr %s813, 8
      %s815 = scalar_lea.vmem %s2, %s814
      %p816 = scmp.lt.s32.totalorder %s39, 1
      %s817 = scalar_select %p816, %s39, 1
      %s818 = smul.addr %s817, 2
      %s819 = scalar_lea.vmem %s23, %s818
      %p820 = scmp.lt.s32.totalorder %s39, 1
      %s821 = scalar_select %p820, %s39, 1
      %s822 = smul.addr %s821, 2
      %s823 = smul.addr %s822, 8
      %s824 = scalar_lea.vmem %s24, %s823
      %p825 = scmp.lt.s32.totalorder %s39, 1
      %s826 = scalar_select %p825, %s39, 1
      %s827 = smul.addr %s826, 2
      %s828 = smul.addr %s827, 8
      %s829 = scalar_lea.vmem %s25, %s828
      %830 = vst [vmem:[#allocation2] sm:$0xff] 0.0
      %831 = vst [vmem:[#allocation2 + $0x8] sm:$0xff] 0.0
      %vm832 = vcmask 277504
      %833 = vst.msk [vmem:[#allocation2 + $0x10] sm:$0xff] %vm832, 0.0
      %v834 = vlaneseq
      %v835 = vand.u32 %v834, 127
      %v836 = vadd.s32 %v835, 128
      %vm837 = vcmp.lt.s32.totalorder %v835, 0
      %v838 = vsub.s32 0, %v835
      %v839 = vsel %vm837, %v838, %v835
      %v840 = vshrl.u32 %v839, 4
      %v841 = vand.u32 %v839, 15
      %v842 = vsub.s32 0, %v841
      %v843 = vsel %vm837, %v842, %v841
      %vm844 = vcmp.lt.s32.totalorder %v836, 0
      %v845 = vsub.s32 0, %v836
      %v846 = vsel %vm844, %v845, %v836
      %v847 = vshrl.u32 %v846, 4
      %v848 = vand.u32 %v846, 15
      %v849 = vsub.s32 0, %v848
      %v850 = vsel %vm844, %v849, %v848
      %vm851 = vcmp.ne.s32.totalorder %v843, 0
      %vm852 = vcmp.ne.s32.totalorder %v850, 0
      %vm853 = vcmp.lt.s32.totalorder %v843, 0
      %vm854 = vcmp.lt.s32.totalorder %v850, 0
      %vm855 = vmand %vm853, %vm851
      %vm856 = vmand %vm854, %vm852
      %v857 = vadd.s32 %v843, 16
      %v858 = vadd.s32 %v850, 16
      %v859 = vsel %vm855, %v857, %v843
      %v860 = vsel %vm856, %v858, %v850
      %vm861 = vcmp.ge.s32.totalorder %v859, 1
      %vm862 = vcmp.ge.s32.totalorder %v860, 1
      %vm863 = vcmp.le.s32.totalorder %v859, 14
      %vm864 = vcmp.le.s32.totalorder %v860, 14
      %v865 = vld [vmem:[%s805] sm:$0xff]
      %v866 = vld [vmem:[%s3] sm:$0xff]
      %868 = vst [vmem:[#allocation1] ss:$2 sm:$0xff] %v865
      %v869 = vld.sshfl [vmem:[#allocation1] sm:$0xff pattern:$0x75316420]
      %v870 = vld.sshfl [vmem:[#allocation1 + $0x8] sm:$0xff pattern:$0x75316420]
      %871 = vrot.lane.b32.xlu0 %v869, 17
      %v872 = vpop.permute.xlu0 %871
      %873 = vrot.lane.b32.xlu0 %v870, 17
      %v874 = vpop.permute.xlu0 %873
      %vm875 = vcmask 138240
      %v876 = vsel %vm875, %v872, %v874
      %vm880 = vcmask 1043592
      %881 = vst.msk [vmem:[#allocation2] sm:$0xf] %vm880, %v872
      %882 = vst [vmem:[#allocation2 + $0x8] sm:$0xf] %v876
      %vm883 = vcmask 134144
      %884 = vst.msk [vmem:[#allocation2 + $0x10] sm:$0xf] %vm883, %v874
      %v885 = vld [vmem:[#allocation2] sm:$0xff]
      %v886 = vld [vmem:[#allocation2 + $0x8] sm:$0xff]
      %v887 = vsel %vm861, 1, 0
      %v888 = vsel %vm862, 1, 0
      %vm889 = vcmp.eq.s32.totalorder %v887, 1
      %vm890 = vcmp.eq.s32.totalorder %v888, 1
      %v891 = vsel %vm889, %v885, 0.0
      %v892 = vsel %vm890, %v886, 0.0
      %v893 = vld [vmem:[#allocation2 + $0x10] sm:$0xff]
      %v894 = vsel %vm863, 1, 0
      %v895 = vsel %vm864, 1, 0
      %vm896 = vcmp.eq.s32.totalorder %v894, 1
      %vm897 = vcmp.eq.s32.totalorder %v895, 1
      %901 = vrot.lane.b32.xlu0 %v885, 126
      %v902 = vpop.permute.xlu0 %901
      %903 = vrot.lane.b32.xlu0 %v886, 126
      %v904 = vpop.permute.xlu0 %903
      %905 = vrot.lane.b32.xlu0 %v893, 126
      %v906 = vpop.permute.xlu0 %905
      %vm907 = vcmask 1031168
      %v908 = vsel %vm907, %v902, %v904
      %v909 = vsel %vm907, %v904, %v906
      %v912 = vsel %vm896, %v908, 0.0
      %v913 = vsel %vm897, %v909, 0.0
      %914 = vrot.lane.b32.xlu0 %v885, 112
      %v915 = vpop.permute.xlu0 %914
      %916 = vrot.lane.b32.xlu0 %v886, 112
      %v917 = vpop.permute.xlu0 %916
      %918 = vrot.lane.b32.xlu0 %v893, 112
      %v919 = vpop.permute.xlu0 %918
      %vm920 = vcmask 916480
      %v921 = vsel %vm920, %v915, %v917
      %v922 = vsel %vm920, %v917, %v919
      %v925 = vsel %vm889, %v921, 0.0
      %v926 = vsel %vm890, %v922, 0.0
      %927 = vrot.lane.b32.xlu0 %v885, 110
      %v928 = vpop.permute.xlu0 %927
      %929 = vrot.lane.b32.xlu0 %v886, 110
      %v930 = vpop.permute.xlu0 %929
      %931 = vrot.lane.b32.xlu0 %v893, 110
      %v932 = vpop.permute.xlu0 %931
      %vm933 = vcmask 900096
      %v934 = vsel %vm933, %v928, %v930
      %v935 = vsel %vm933, %v930, %v932
      %v938 = vsel %vm896, %v934, 0.0
      %v939 = vsel %vm897, %v935, 0.0
      %940 = vrot.lane.b32.xlu0 %v885, 96
      %v941 = vpop.permute.xlu0 %940
      %942 = vrot.lane.b32.xlu0 %v886, 96
      %v943 = vpop.permute.xlu0 %942
      %944 = vrot.lane.b32.xlu0 %v893, 96
      %v945 = vpop.permute.xlu0 %944
      %vm946 = vcmask 785408
      %v947 = vsel %vm946, %v941, %v943
      %v948 = vsel %vm946, %v943, %v945
      %v951 = vsel %vm889, %v947, 0.0
      %v952 = vsel %vm890, %v948, 0.0
      %953 = vrot.lane.b32.xlu0 %v885, 94
      %v954 = vpop.permute.xlu0 %953
      %955 = vrot.lane.b32.xlu0 %v886, 94
      %v956 = vpop.permute.xlu0 %955
      %957 = vrot.lane.b32.xlu0 %v893, 94
      %v958 = vpop.permute.xlu0 %957
      %vm959 = vcmask 769024
      %v960 = vsel %vm959, %v954, %v956
      %v961 = vsel %vm959, %v956, %v958
      %v964 = vsel %vm896, %v960, 0.0
      %v965 = vsel %vm897, %v961, 0.0
      %966 = vrot.lane.b32.xlu0 %v885, 127
      %v967 = vpop.permute.xlu0 %966
      %968 = vrot.lane.b32.xlu0 %v886, 127
      %v969 = vpop.permute.xlu0 %968
      %970 = vrot.lane.b32.xlu0 %v893, 127
      %v971 = vpop.permute.xlu0 %970
      %vm972 = vcmask 1039360
      %v973 = vsel %vm972, %v967, %v969
      %v974 = vsel %vm972, %v969, %v971
      %977 = vrot.lane.b32.xlu0 %v885, 111
      %v978 = vpop.permute.xlu0 %977
      %979 = vrot.lane.b32.xlu0 %v886, 111
      %v980 = vpop.permute.xlu0 %979
      %981 = vrot.lane.b32.xlu0 %v893, 111
      %v982 = vpop.permute.xlu0 %981
      %vm983 = vcmask 908288
      %v984 = vsel %vm983, %v978, %v980
      %v985 = vsel %vm983, %v980, %v982
      %988 = vrot.lane.b32.xlu0 %v885, 95
      %v989 = vpop.permute.xlu0 %988
      %990 = vrot.lane.b32.xlu0 %v886, 95
      %v991 = vpop.permute.xlu0 %990
      %992 = vrot.lane.b32.xlu0 %v893, 95
      %v993 = vpop.permute.xlu0 %992
      %vm994 = vcmask 777216
      %v995 = vsel %vm994, %v989, %v991
      %v996 = vsel %vm994, %v991, %v993
      %v999 = vld [vmem:[%s4] sm:$0xff]
      %1001 = vset.pattern.permute.xlu0 0
      %1002 = vperm.xlu0 %1001, %v999
      %v1003 = vpop.permute.xlu0 %1002
      %vm1005 = vcmask 588800
      %v1007 = vsel %vm1005, %v866, 0
      %1009 = vmatpush.msra.mxu0 0.0
      %1010 = vmatpush.msra.mxu0 0.0
      %1011 = vmatpush.msra.mxu0 0.0
      %1012 = vmatpush.msra.mxu0 0.0
      %1013 = vmatpush.msra.mxu0 0.0
      %1014 = vmatpush.msra.mxu0 0.0
      %1015 = vmatpush.msra.mxu0 0.0
      %1016 = vmatpush.msra.mxu0 %v964
      %1017 = vmatpush.msra.mxu0 %v995
      %1018 = vmatpush.msra.mxu0 %v951
      %1019 = vmatpush.msra.mxu0 %v938
      %1020 = vmatpush.msra.mxu0 %v984
      %1021 = vmatpush.msra.mxu0 %v925
      %1022 = vmatpush.msra.mxu0 %v912
      %1023 = vmatpush.msra.mxu0 %v973
      %1024 = vmatpush.msra.mxu0 %v891
      %1025 = vmatmul.f32.gmra.mxu0 %v1007
      %v1026 = vpop.f32.mrf.mxu0
      %v1027 = vadd.f32 %v1003, %v1026
      %1028 = vdwg.mxu0
      %1029 = vmatpush.msra.mxu0 0.0
      %1030 = vmatpush.msra.mxu0 0.0
      %1031 = vmatpush.msra.mxu0 0.0
      %1032 = vmatpush.msra.mxu0 0.0
      %1033 = vmatpush.msra.mxu0 0.0
      %1034 = vmatpush.msra.mxu0 0.0
      %1035 = vmatpush.msra.mxu0 0.0
      %1036 = vmatpush.msra.mxu0 %v965
      %1037 = vmatpush.msra.mxu0 %v996
      %1038 = vmatpush.msra.mxu0 %v952
      %1039 = vmatpush.msra.mxu0 %v939
      %1040 = vmatpush.msra.mxu0 %v985
      %1041 = vmatpush.msra.mxu0 %v926
      %1042 = vmatpush.msra.mxu0 %v913
      %1043 = vmatpush.msra.mxu0 %v974
      %1044 = vmatpush.msra.mxu0 %v892
      %1045 = vmatmul.f32.gmra.mxu0 %v1007
      %v1046 = vpop.f32.mrf.mxu0
      %v1047 = vadd.f32 %v1003, %v1046
      %1048 = vdwg.mxu0
      %v1049 = vmax.f32 %v1027, 0.0
      %v1050 = vmax.f32 %v1047, 0.0
      %v1051 = vld [vmem:[%s810] sm:$0xff]
      %v1052 = vld [vmem:[%s810 + $0x8] sm:$0xff]
      %v1053 = vld [vmem:[%s5] sm:$0xff]
      %v1054 = vld [vmem:[%s5 + $0x8] sm:$0xff]
      %v1055 = vld [vmem:[%s5 + $0x10] sm:$0xff]
      %1058 = vrot.lane.b32.xlu0 %v1049, 17
      %v1059 = vpop.permute.xlu0 %1058
      %1060 = vrot.lane.b32.xlu0 %v1050, 17
      %v1061 = vpop.permute.xlu0 %1060
      %v1062 = vsel %vm875, %v1059, %v1061
      %vm1066 = vcmask 1047688
      %1067 = vst.msk [vmem:[#allocation2] sm:$0xff] %vm1066, %v1059
      %1068 = vst [vmem:[#allocation2 + $0x8] sm:$0xff] %v1062
      %1069 = vst.msk [vmem:[#allocation2 + $0x10] sm:$0xff] %vm875, %v1061
      %v1070 = vld [vmem:[#allocation2] sm:$0xff]
      %v1071 = vld [vmem:[#allocation2 + $0x8] sm:$0xff]
      %v1072 = vsel %vm889, %v1070, 0.0
      %v1073 = vsel %vm890, %v1071, 0.0
      %v1074 = vld [vmem:[#allocation2 + $0x10] sm:$0xff]
      %1078 = vrot.lane.b32.xlu0 %v1070, 126
      %v1079 = vpop.permute.xlu0 %1078
      %1080 = vrot.lane.b32.xlu0 %v1071, 126
      %v1081 = vpop.permute.xlu0 %1080
      %1082 = vrot.lane.b32.xlu0 %v1074, 126
      %v1083 = vpop.permute.xlu0 %1082
      %v1084 = vsel %vm907, %v1079, %v1081
      %v1085 = vsel %vm907, %v1081, %v1083
      %v1088 = vsel %vm896, %v1084, 0.0
      %v1089 = vsel %vm897, %v1085, 0.0
      %1090 = vrot.lane.b32.xlu0 %v1070, 112
      %v1091 = vpop.permute.xlu0 %1090
      %1092 = vrot.lane.b32.xlu0 %v1071, 112
      %v1093 = vpop.permute.xlu0 %1092
      %1094 = vrot.lane.b32.xlu0 %v1074, 112
      %v1095 = vpop.permute.xlu0 %1094
      %v1096 = vsel %vm920, %v1091, %v1093
      %v1097 = vsel %vm920, %v1093, %v1095
      %v1100 = vsel %vm889, %v1096, 0.0
      %v1101 = vsel %vm890, %v1097, 0.0
      %1102 = vrot.lane.b32.xlu0 %v1070, 110
      %v1103 = vpop.permute.xlu0 %1102
      %1104 = vrot.lane.b32.xlu0 %v1071, 110
      %v1105 = vpop.permute.xlu0 %1104
      %1106 = vrot.lane.b32.xlu0 %v1074, 110
      %v1107 = vpop.permute.xlu0 %1106
      %v1108 = vsel %vm933, %v1103, %v1105
      %v1109 = vsel %vm933, %v1105, %v1107
      %v1112 = vsel %vm896, %v1108, 0.0
      %v1113 = vsel %vm897, %v1109, 0.0
      %1114 = vrot.lane.b32.xlu0 %v1070, 96
      %v1115 = vpop.permute.xlu0 %1114
      %1116 = vrot.lane.b32.xlu0 %v1071, 96
      %v1117 = vpop.permute.xlu0 %1116
      %1118 = vrot.lane.b32.xlu0 %v1074, 96
      %v1119 = vpop.permute.xlu0 %1118
      %v1120 = vsel %vm946, %v1115, %v1117
      %v1121 = vsel %vm946, %v1117, %v1119
      %v1124 = vsel %vm889, %v1120, 0.0
      %v1125 = vsel %vm890, %v1121, 0.0
      %1126 = vrot.lane.b32.xlu0 %v1070, 94
      %v1127 = vpop.permute.xlu0 %1126
      %1128 = vrot.lane.b32.xlu0 %v1071, 94
      %v1129 = vpop.permute.xlu0 %1128
      %1130 = vrot.lane.b32.xlu0 %v1074, 94
      %v1131 = vpop.permute.xlu0 %1130
      %v1132 = vsel %vm959, %v1127, %v1129
      %v1133 = vsel %vm959, %v1129, %v1131
      %v1136 = vsel %vm896, %v1132, 0.0
      %v1137 = vsel %vm897, %v1133, 0.0
      %1138 = vrot.lane.b32.xlu0 %v1070, 127
      %v1139 = vpop.permute.xlu0 %1138
      %1140 = vrot.lane.b32.xlu0 %v1071, 127
      %v1141 = vpop.permute.xlu0 %1140
      %1142 = vrot.lane.b32.xlu0 %v1074, 127
      %v1143 = vpop.permute.xlu0 %1142
      %v1144 = vsel %vm972, %v1139, %v1141
      %v1145 = vsel %vm972, %v1141, %v1143
      %1148 = vrot.lane.b32.xlu0 %v1070, 111
      %v1149 = vpop.permute.xlu0 %1148
      %1150 = vrot.lane.b32.xlu0 %v1071, 111
      %v1151 = vpop.permute.xlu0 %1150
      %1152 = vrot.lane.b32.xlu0 %v1074, 111
      %v1153 = vpop.permute.xlu0 %1152
      %v1154 = vsel %vm983, %v1149, %v1151
      %v1155 = vsel %vm983, %v1151, %v1153
      %1158 = vrot.lane.b32.xlu0 %v1070, 95
      %v1159 = vpop.permute.xlu0 %1158
      %1160 = vrot.lane.b32.xlu0 %v1071, 95
      %v1161 = vpop.permute.xlu0 %1160
      %1162 = vrot.lane.b32.xlu0 %v1074, 95
      %v1163 = vpop.permute.xlu0 %1162
      %v1164 = vsel %vm994, %v1159, %v1161
      %v1165 = vsel %vm994, %v1161, %v1163
      %v1168 = vld [vmem:[%s8] sm:$0xff]
      %v1169 = vld [vmem:[%s8 + $0x8] sm:$0xff]
      %v1170 = vld [vmem:[%s8 + $0x10] sm:$0xff]
      %1172 = vset.pattern.permute.xlu0 0
      %1173 = vperm.xlu0 %1172, %v1168
      %v1174 = vpop.permute.xlu0 %1173
      %1177 = vset.pattern.permute.xlu0 0
      %1178 = vperm.xlu0 %1177, %v1169
      %v1179 = vpop.permute.xlu0 %1178
      %1182 = vset.pattern.permute.xlu0 0
      %1183 = vperm.xlu0 %1182, %v1170
      %v1184 = vpop.permute.xlu0 %1183
      %v1187 = vsel %vm1005, %v1053, 0
      %v1190 = vsel %vm1005, %v1054, 0
      %v1193 = vsel %vm1005, %v1055, 0
      %1195 = vmatpush.msra.mxu0 0.0
      %1196 = vmatpush.msra.mxu0 0.0
      %1197 = vmatpush.msra.mxu0 0.0
      %1198 = vmatpush.msra.mxu0 0.0
      %1199 = vmatpush.msra.mxu0 0.0
      %1200 = vmatpush.msra.mxu0 0.0
      %1201 = vmatpush.msra.mxu0 0.0
      %1202 = vmatpush.msra.mxu0 %v1136
      %1203 = vmatpush.msra.mxu0 %v1164
      %1204 = vmatpush.msra.mxu0 %v1124
      %1205 = vmatpush.msra.mxu0 %v1112
      %1206 = vmatpush.msra.mxu0 %v1154
      %1207 = vmatpush.msra.mxu0 %v1100
      %1208 = vmatpush.msra.mxu0 %v1088
      %1209 = vmatpush.msra.mxu0 %v1144
      %1210 = vmatpush.msra.mxu0 %v1072
      %1211 = vmatmul.f32.gmra.mxu0 %v1187
      %v1212 = vpop.f32.mrf.mxu0
      %v1213 = vadd.f32 %v1174, %v1212
      %1214 = vmatmul.f32.gmra.mxu0 %v1190
      %v1215 = vpop.f32.mrf.mxu0
      %v1216 = vadd.f32 %v1179, %v1215
      %1217 = vmatmul.f32.gmra.mxu0 %v1193
      %v1218 = vpop.f32.mrf.mxu0
      %v1219 = vadd.f32 %v1184, %v1218
      %1220 = vdwg.mxu0
      %1221 = vmatpush.msra.mxu0 0.0
      %1222 = vmatpush.msra.mxu0 0.0
      %1223 = vmatpush.msra.mxu0 0.0
      %1224 = vmatpush.msra.mxu0 0.0
      %1225 = vmatpush.msra.mxu0 0.0
      %1226 = vmatpush.msra.mxu0 0.0
      %1227 = vmatpush.msra.mxu0 0.0
      %1228 = vmatpush.msra.mxu0 %v1137
      %1229 = vmatpush.msra.mxu0 %v1165
      %1230 = vmatpush.msra.mxu0 %v1125
      %1231 = vmatpush.msra.mxu0 %v1113
      %1232 = vmatpush.msra.mxu0 %v1155
      %1233 = vmatpush.msra.mxu0 %v1101
      %1234 = vmatpush.msra.mxu0 %v1089
      %1235 = vmatpush.msra.mxu0 %v1145
      %1236 = vmatpush.msra.mxu0 %v1073
      %1237 = vmatmul.f32.gmra.mxu0 %v1187
      %v1238 = vpop.f32.mrf.mxu0
      %v1239 = vadd.f32 %v1174, %v1238
      %1240 = vmatmul.f32.gmra.mxu0 %v1190
      %v1241 = vpop.f32.mrf.mxu0
      %v1242 = vadd.f32 %v1179, %v1241
      %1243 = vmatmul.f32.gmra.mxu0 %v1193
      %v1244 = vpop.f32.mrf.mxu0
      %v1245 = vadd.f32 %v1184, %v1244
      %1246 = vdwg.mxu0
      %v1247 = vld [vmem:[%s6] sm:$0xff]
      %v1248 = vld [vmem:[%s6 + $0x8] sm:$0xff]
      %1251 = vrot.lane.b32.xlu0 %v1051, 17
      %v1252 = vpop.permute.xlu0 %1251
      %1253 = vrot.lane.b32.xlu0 %v1052, 17
      %v1254 = vpop.permute.xlu0 %1253
      %v1255 = vsel %vm875, %v1252, %v1254
      %1259 = vst.msk [vmem:[#allocation2] sm:$0xff] %vm1066, %v1252
      %1260 = vst [vmem:[#allocation2 + $0x8] sm:$0xff] %v1255
      %1261 = vst.msk [vmem:[#allocation2 + $0x10] sm:$0xff] %vm875, %v1254
      %v1262 = vld [vmem:[#allocation2] sm:$0xff]
      %v1263 = vld [vmem:[#allocation2 + $0x8] sm:$0xff]
      %v1264 = vsel %vm889, %v1262, 0.0
      %v1265 = vsel %vm890, %v1263, 0.0
      %v1266 = vld [vmem:[#allocation2 + $0x10] sm:$0xff]
      %1270 = vrot.lane.b32.xlu0 %v1262, 126
      %v1271 = vpop.permute.xlu0 %1270
      %1272 = vrot.lane.b32.xlu0 %v1263, 126
      %v1273 = vpop.permute.xlu0 %1272
      %1274 = vrot.lane.b32.xlu0 %v1266, 126
      %v1275 = vpop.permute.xlu0 %1274
      %v1276 = vsel %vm907, %v1271, %v1273
      %v1277 = vsel %vm907, %v1273, %v1275
      %v1280 = vsel %vm896, %v1276, 0.0
      %v1281 = vsel %vm897, %v1277, 0.0
      %1282 = vrot.lane.b32.xlu0 %v1262, 112
      %v1283 = vpop.permute.xlu0 %1282
      %1284 = vrot.lane.b32.xlu0 %v1263, 112
      %v1285 = vpop.permute.xlu0 %1284
      %1286 = vrot.lane.b32.xlu0 %v1266, 112
      %v1287 = vpop.permute.xlu0 %1286
      %v1288 = vsel %vm920, %v1283, %v1285
      %v1289 = vsel %vm920, %v1285, %v1287
      %v1292 = vsel %vm889, %v1288, 0.0
      %v1293 = vsel %vm890, %v1289, 0.0
      %1294 = vrot.lane.b32.xlu0 %v1262, 110
      %v1295 = vpop.permute.xlu0 %1294
      %1296 = vrot.lane.b32.xlu0 %v1263, 110
      %v1297 = vpop.permute.xlu0 %1296
      %1298 = vrot.lane.b32.xlu0 %v1266, 110
      %v1299 = vpop.permute.xlu0 %1298
      %v1300 = vsel %vm933, %v1295, %v1297
      %v1301 = vsel %vm933, %v1297, %v1299
      %v1304 = vsel %vm896, %v1300, 0.0
      %v1305 = vsel %vm897, %v1301, 0.0
      %1306 = vrot.lane.b32.xlu0 %v1262, 96
      %v1307 = vpop.permute.xlu0 %1306
      %1308 = vrot.lane.b32.xlu0 %v1263, 96
      %v1309 = vpop.permute.xlu0 %1308
      %1310 = vrot.lane.b32.xlu0 %v1266, 96
      %v1311 = vpop.permute.xlu0 %1310
      %v1312 = vsel %vm946, %v1307, %v1309
      %v1313 = vsel %vm946, %v1309, %v1311
      %v1316 = vsel %vm889, %v1312, 0.0
      %v1317 = vsel %vm890, %v1313, 0.0
      %1318 = vrot.lane.b32.xlu0 %v1262, 94
      %v1319 = vpop.permute.xlu0 %1318
      %1320 = vrot.lane.b32.xlu0 %v1263, 94
      %v1321 = vpop.permute.xlu0 %1320
      %1322 = vrot.lane.b32.xlu0 %v1266, 94
      %v1323 = vpop.permute.xlu0 %1322
      %v1324 = vsel %vm959, %v1319, %v1321
      %v1325 = vsel %vm959, %v1321, %v1323
      %v1328 = vsel %vm896, %v1324, 0.0
      %v1329 = vsel %vm897, %v1325, 0.0
      %1330 = vrot.lane.b32.xlu0 %v1262, 127
      %v1331 = vpop.permute.xlu0 %1330
      %1332 = vrot.lane.b32.xlu0 %v1263, 127
      %v1333 = vpop.permute.xlu0 %1332
      %1334 = vrot.lane.b32.xlu0 %v1266, 127
      %v1335 = vpop.permute.xlu0 %1334
      %v1336 = vsel %vm972, %v1331, %v1333
      %v1337 = vsel %vm972, %v1333, %v1335
      %1340 = vrot.lane.b32.xlu0 %v1262, 111
      %v1341 = vpop.permute.xlu0 %1340
      %1342 = vrot.lane.b32.xlu0 %v1263, 111
      %v1343 = vpop.permute.xlu0 %1342
      %1344 = vrot.lane.b32.xlu0 %v1266, 111
      %v1345 = vpop.permute.xlu0 %1344
      %v1346 = vsel %vm983, %v1341, %v1343
      %v1347 = vsel %vm983, %v1343, %v1345
      %1350 = vrot.lane.b32.xlu0 %v1262, 95
      %v1351 = vpop.permute.xlu0 %1350
      %1352 = vrot.lane.b32.xlu0 %v1263, 95
      %v1353 = vpop.permute.xlu0 %1352
      %1354 = vrot.lane.b32.xlu0 %v1266, 95
      %v1355 = vpop.permute.xlu0 %1354
      %v1356 = vsel %vm994, %v1351, %v1353
      %v1357 = vsel %vm994, %v1353, %v1355
      %v1361 = vsel %vm1005, %v1247, 0
      %v1364 = vsel %vm1005, %v1248, 0
      %1366 = vmatpush.msra.mxu0 0.0
      %1367 = vmatpush.msra.mxu0 0.0
      %1368 = vmatpush.msra.mxu0 0.0
      %1369 = vmatpush.msra.mxu0 0.0
      %1370 = vmatpush.msra.mxu0 0.0
      %1371 = vmatpush.msra.mxu0 0.0
      %1372 = vmatpush.msra.mxu0 0.0
      %1373 = vmatpush.msra.mxu0 %v1328
      %1374 = vmatpush.msra.mxu0 %v1356
      %1375 = vmatpush.msra.mxu0 %v1316
      %1376 = vmatpush.msra.mxu0 %v1304
      %1377 = vmatpush.msra.mxu0 %v1346
      %1378 = vmatpush.msra.mxu0 %v1292
      %1379 = vmatpush.msra.mxu0 %v1280
      %1380 = vmatpush.msra.mxu0 %v1336
      %1381 = vmatpush.msra.mxu0 %v1264
      %1382 = vmatmul.f32.gmra.mxu0 %v1361
      %v1383 = vpop.f32.mrf.mxu0
      %v1384 = vadd.f32 0.0, %v1383
      %1385 = vmatmul.f32.gmra.mxu0 %v1364
      %v1386 = vpop.f32.mrf.mxu0
      %v1387 = vadd.f32 0.0, %v1386
      %1388 = vdwg.mxu0
      %1389 = vmatpush.msra.mxu0 0.0
      %1390 = vmatpush.msra.mxu0 0.0
      %1391 = vmatpush.msra.mxu0 0.0
      %1392 = vmatpush.msra.mxu0 0.0
      %1393 = vmatpush.msra.mxu0 0.0
      %1394 = vmatpush.msra.mxu0 0.0
      %1395 = vmatpush.msra.mxu0 0.0
      %1396 = vmatpush.msra.mxu0 %v1329
      %1397 = vmatpush.msra.mxu0 %v1357
      %1398 = vmatpush.msra.mxu0 %v1317
      %1399 = vmatpush.msra.mxu0 %v1305
      %1400 = vmatpush.msra.mxu0 %v1347
      %1401 = vmatpush.msra.mxu0 %v1293
      %1402 = vmatpush.msra.mxu0 %v1281
      %1403 = vmatpush.msra.mxu0 %v1337
      %1404 = vmatpush.msra.mxu0 %v1265
      %1405 = vmatmul.f32.gmra.mxu0 %v1361
      %v1406 = vpop.f32.mrf.mxu0
      %v1407 = vadd.f32 0.0, %v1406
      %1408 = vmatmul.f32.gmra.mxu0 %v1364
      %v1409 = vpop.f32.mrf.mxu0
      %v1410 = vadd.f32 0.0, %v1409
      %1411 = vdwg.mxu0
      %v1412 = vadd.f32 %v1213, %v1384
      %v1413 = vadd.f32 %v1239, %v1407
      %v1414 = vxor.u32 %v1412, 2147483648
      %v1415 = vxor.u32 %v1413, 2147483648
      %v1416 = vmul.f32 %v1414, 1.442695
      %v1417 = vpow.pop %v1416
      %v1418 = vmul.f32 %v1415, 1.442695
      %v1419 = vpow.pop %v1418
      %v1420 = vadd.f32 %v1417, 1.0
      %v1421 = vadd.f32 %v1419, 1.0
      %v1422 = vrcp.pop %v1420
      %v1423 = vmul.f32 %v1420, %v1422
      %v1424 = vsub.f32 1.0, %v1423
      %v1425 = vmul.f32 %v1422, %v1424
      %v1426 = vadd.f32 %v1422, %v1425
      %vm1427 = vweird.f32 %v1420
      %vm1428 = vweird.f32 %v1422
      %vm1429 = vmor %vm1427, %vm1428
      %v1430 = vsel %vm1429, %v1422, %v1426
      %v1431 = vand.u32 2147483647, %v1420
      %vm1432 = vcmp.eq.f32.partialorder %v1431, 8.507059e+37
      %v1433 = vand.u32 %v1420, 2147483648
      %v1434 = vor.u32 1.1754944e-38, %v1433
      %v1435 = vsel %vm1432, %v1434, %v1430
      %v1436 = vmul.f32 1.0, %v1435
      %v1437 = vrcp.pop %v1421
      %v1438 = vmul.f32 %v1421, %v1437
      %v1439 = vsub.f32 1.0, %v1438
      %v1440 = vmul.f32 %v1437, %v1439
      %v1441 = vadd.f32 %v1437, %v1440
      %vm1442 = vweird.f32 %v1421
      %vm1443 = vweird.f32 %v1437
      %vm1444 = vmor %vm1442, %vm1443
      %v1445 = vsel %vm1444, %v1437, %v1441
      %v1446 = vand.u32 2147483647, %v1421
      %vm1447 = vcmp.eq.f32.partialorder %v1446, 8.507059e+37
      %v1448 = vand.u32 %v1421, 2147483648
      %v1449 = vor.u32 1.1754944e-38, %v1448
      %v1450 = vsel %vm1447, %v1449, %v1445
      %v1451 = vmul.f32 1.0, %v1450
      %v1452 = vadd.f32 %v1216, %v1387
      %v1453 = vadd.f32 %v1242, %v1410
      %v1454 = vxor.u32 %v1452, 2147483648
      %v1455 = vxor.u32 %v1453, 2147483648
      %v1456 = vmul.f32 %v1454, 1.442695
      %v1457 = vpow.pop %v1456
      %v1458 = vmul.f32 %v1455, 1.442695
      %v1459 = vpow.pop %v1458
      %v1460 = vadd.f32 %v1457, 1.0
      %v1461 = vadd.f32 %v1459, 1.0
      %v1462 = vrcp.pop %v1460
      %v1463 = vmul.f32 %v1460, %v1462
      %v1464 = vsub.f32 1.0, %v1463
      %v1465 = vmul.f32 %v1462, %v1464
      %v1466 = vadd.f32 %v1462, %v1465
      %vm1467 = vweird.f32 %v1460
      %vm1468 = vweird.f32 %v1462
      %vm1469 = vmor %vm1467, %vm1468
      %v1470 = vsel %vm1469, %v1462, %v1466
      %v1471 = vand.u32 2147483647, %v1460
      %vm1472 = vcmp.eq.f32.partialorder %v1471, 8.507059e+37
      %v1473 = vand.u32 %v1460, 2147483648
      %v1474 = vor.u32 1.1754944e-38, %v1473
      %v1475 = vsel %vm1472, %v1474, %v1470
      %v1476 = vmul.f32 1.0, %v1475
      %v1477 = vrcp.pop %v1461
      %v1478 = vmul.f32 %v1461, %v1477
      %v1479 = vsub.f32 1.0, %v1478
      %v1480 = vmul.f32 %v1477, %v1479
      %v1481 = vadd.f32 %v1477, %v1480
      %vm1482 = vweird.f32 %v1461
      %vm1483 = vweird.f32 %v1477
      %vm1484 = vmor %vm1482, %vm1483
      %v1485 = vsel %vm1484, %v1477, %v1481
      %v1486 = vand.u32 2147483647, %v1461
      %vm1487 = vcmp.eq.f32.partialorder %v1486, 8.507059e+37
      %v1488 = vand.u32 %v1461, 2147483648
      %v1489 = vor.u32 1.1754944e-38, %v1488
      %v1490 = vsel %vm1487, %v1489, %v1485
      %v1491 = vmul.f32 1.0, %v1490
      %v1492 = vld [vmem:[%s7] sm:$0xff]
      %v1493 = vmul.f32 %v1051, %v1476
      %v1494 = vmul.f32 %v1052, %v1491
      %1497 = vrot.lane.b32.xlu0 %v1493, 17
      %v1498 = vpop.permute.xlu0 %1497
      %1499 = vrot.lane.b32.xlu0 %v1494, 17
      %v1500 = vpop.permute.xlu0 %1499
      %v1501 = vsel %vm875, %v1498, %v1500
      %1505 = vst.msk [vmem:[#allocation2] sm:$0xff] %vm1066, %v1498
      %1506 = vst [vmem:[#allocation2 + $0x8] sm:$0xff] %v1501
      %1507 = vst.msk [vmem:[#allocation2 + $0x10] sm:$0xff] %vm875, %v1500
      %v1508 = vld [vmem:[#allocation2] sm:$0xff]
      %v1509 = vld [vmem:[#allocation2 + $0x8] sm:$0xff]
      %v1510 = vsel %vm889, %v1508, 0.0
      %v1511 = vsel %vm890, %v1509, 0.0
      %v1512 = vld [vmem:[#allocation2 + $0x10] sm:$0xff]
      %1516 = vrot.lane.b32.xlu0 %v1508, 126
      %v1517 = vpop.permute.xlu0 %1516
      %1518 = vrot.lane.b32.xlu0 %v1509, 126
      %v1519 = vpop.permute.xlu0 %1518
      %1520 = vrot.lane.b32.xlu0 %v1512, 126
      %v1521 = vpop.permute.xlu0 %1520
      %v1522 = vsel %vm907, %v1517, %v1519
      %v1523 = vsel %vm907, %v1519, %v1521
      %v1526 = vsel %vm896, %v1522, 0.0
      %v1527 = vsel %vm897, %v1523, 0.0
      %1528 = vrot.lane.b32.xlu0 %v1508, 112
      %v1529 = vpop.permute.xlu0 %1528
      %1530 = vrot.lane.b32.xlu0 %v1509, 112
      %v1531 = vpop.permute.xlu0 %1530
      %1532 = vrot.lane.b32.xlu0 %v1512, 112
      %v1533 = vpop.permute.xlu0 %1532
      %v1534 = vsel %vm920, %v1529, %v1531
      %v1535 = vsel %vm920, %v1531, %v1533
      %v1538 = vsel %vm889, %v1534, 0.0
      %v1539 = vsel %vm890, %v1535, 0.0
      %1540 = vrot.lane.b32.xlu0 %v1508, 110
      %v1541 = vpop.permute.xlu0 %1540
      %1542 = vrot.lane.b32.xlu0 %v1509, 110
      %v1543 = vpop.permute.xlu0 %1542
      %1544 = vrot.lane.b32.xlu0 %v1512, 110
      %v1545 = vpop.permute.xlu0 %1544
      %v1546 = vsel %vm933, %v1541, %v1543
      %v1547 = vsel %vm933, %v1543, %v1545
      %v1550 = vsel %vm896, %v1546, 0.0
      %v1551 = vsel %vm897, %v1547, 0.0
      %1552 = vrot.lane.b32.xlu0 %v1508, 96
      %v1553 = vpop.permute.xlu0 %1552
      %1554 = vrot.lane.b32.xlu0 %v1509, 96
      %v1555 = vpop.permute.xlu0 %1554
      %1556 = vrot.lane.b32.xlu0 %v1512, 96
      %v1557 = vpop.permute.xlu0 %1556
      %v1558 = vsel %vm946, %v1553, %v1555
      %v1559 = vsel %vm946, %v1555, %v1557
      %v1562 = vsel %vm889, %v1558, 0.0
      %v1563 = vsel %vm890, %v1559, 0.0
      %1564 = vrot.lane.b32.xlu0 %v1508, 94
      %v1565 = vpop.permute.xlu0 %1564
      %1566 = vrot.lane.b32.xlu0 %v1509, 94
      %v1567 = vpop.permute.xlu0 %1566
      %1568 = vrot.lane.b32.xlu0 %v1512, 94
      %v1569 = vpop.permute.xlu0 %1568
      %v1570 = vsel %vm959, %v1565, %v1567
      %v1571 = vsel %vm959, %v1567, %v1569
      %v1574 = vsel %vm896, %v1570, 0.0
      %v1575 = vsel %vm897, %v1571, 0.0
      %1576 = vrot.lane.b32.xlu0 %v1508, 127
      %v1577 = vpop.permute.xlu0 %1576
      %1578 = vrot.lane.b32.xlu0 %v1509, 127
      %v1579 = vpop.permute.xlu0 %1578
      %1580 = vrot.lane.b32.xlu0 %v1512, 127
      %v1581 = vpop.permute.xlu0 %1580
      %v1582 = vsel %vm972, %v1577, %v1579
      %v1583 = vsel %vm972, %v1579, %v1581
      %1586 = vrot.lane.b32.xlu0 %v1508, 111
      %v1587 = vpop.permute.xlu0 %1586
      %1588 = vrot.lane.b32.xlu0 %v1509, 111
      %v1589 = vpop.permute.xlu0 %1588
      %1590 = vrot.lane.b32.xlu0 %v1512, 111
      %v1591 = vpop.permute.xlu0 %1590
      %v1592 = vsel %vm983, %v1587, %v1589
      %v1593 = vsel %vm983, %v1589, %v1591
      %1596 = vrot.lane.b32.xlu0 %v1508, 95
      %v1597 = vpop.permute.xlu0 %1596
      %1598 = vrot.lane.b32.xlu0 %v1509, 95
      %v1599 = vpop.permute.xlu0 %1598
      %1600 = vrot.lane.b32.xlu0 %v1512, 95
      %v1601 = vpop.permute.xlu0 %1600
      %v1602 = vsel %vm994, %v1597, %v1599
      %v1603 = vsel %vm994, %v1599, %v1601
      %v1607 = vsel %vm1005, %v1492, 0
      %1609 = vmatpush.msra.mxu0 0.0
      %1610 = vmatpush.msra.mxu0 0.0
      %1611 = vmatpush.msra.mxu0 0.0
      %1612 = vmatpush.msra.mxu0 0.0
      %1613 = vmatpush.msra.mxu0 0.0
      %1614 = vmatpush.msra.mxu0 0.0
      %1615 = vmatpush.msra.mxu0 0.0
      %1616 = vmatpush.msra.mxu0 %v1574
      %1617 = vmatpush.msra.mxu0 %v1602
      %1618 = vmatpush.msra.mxu0 %v1562
      %1619 = vmatpush.msra.mxu0 %v1550
      %1620 = vmatpush.msra.mxu0 %v1592
      %1621 = vmatpush.msra.mxu0 %v1538
      %1622 = vmatpush.msra.mxu0 %v1526
      %1623 = vmatpush.msra.mxu0 %v1582
      %1624 = vmatpush.msra.mxu0 %v1510
      %1625 = vmatmul.f32.gmra.mxu0 %v1607
      %v1626 = vpop.f32.mrf.mxu0
      %v1627 = vadd.f32 0.0, %v1626
      %1628 = vdwg.mxu0
      %1629 = vmatpush.msra.mxu0 0.0
      %1630 = vmatpush.msra.mxu0 0.0
      %1631 = vmatpush.msra.mxu0 0.0
      %1632 = vmatpush.msra.mxu0 0.0
      %1633 = vmatpush.msra.mxu0 0.0
      %1634 = vmatpush.msra.mxu0 0.0
      %1635 = vmatpush.msra.mxu0 0.0
      %1636 = vmatpush.msra.mxu0 %v1575
      %1637 = vmatpush.msra.mxu0 %v1603
      %1638 = vmatpush.msra.mxu0 %v1563
      %1639 = vmatpush.msra.mxu0 %v1551
      %1640 = vmatpush.msra.mxu0 %v1593
      %1641 = vmatpush.msra.mxu0 %v1539
      %1642 = vmatpush.msra.mxu0 %v1527
      %1643 = vmatpush.msra.mxu0 %v1583
      %1644 = vmatpush.msra.mxu0 %v1511
      %1645 = vmatmul.f32.gmra.mxu0 %v1607
      %v1646 = vpop.f32.mrf.mxu0
      %v1647 = vadd.f32 0.0, %v1646
      %1648 = vdwg.mxu0
      %v1649 = vadd.f32 %v1219, %v1627
      %v1650 = vadd.f32 %v1245, %v1647
      %v1651 = vtanh.pop %v1649
      %v1652 = vtanh.pop %v1650
      %v1653 = vsub.f32 1.0, %v1436
      %v1654 = vsub.f32 1.0, %v1451
      %v1655 = vmul.f32 %v1051, %v1653
      %v1656 = vmul.f32 %v1052, %v1654
      %v1657 = vmul.f32 %v1651, %v1436
      %v1658 = vmul.f32 %v1652, %v1451
      %v1659 = vadd.f32 %v1655, %v1657
      %v1660 = vadd.f32 %v1656, %v1658
      %1661 = vst [vmem:[%s824] sm:$0xff] %v1659
      %1662 = vst [vmem:[%s824 + $0x8] sm:$0xff] %v1660
      %v1663 = vld [vmem:[%s9] sm:$0xff]
      %1666 = vrot.lane.b32.xlu0 %v1659, 17
      %v1667 = vpop.permute.xlu0 %1666
      %1668 = vrot.lane.b32.xlu0 %v1660, 17
      %v1669 = vpop.permute.xlu0 %1668
      %v1670 = vsel %vm875, %v1667, %v1669
      %1674 = vst.msk [vmem:[#allocation2] sm:$0xff] %vm1066, %v1667
      %1675 = vst [vmem:[#allocation2 + $0x8] sm:$0xff] %v1670
      %1676 = vst.msk [vmem:[#allocation2 + $0x10] sm:$0xff] %vm875, %v1669
      %v1677 = vld [vmem:[#allocation2] sm:$0xff]
      %v1678 = vld [vmem:[#allocation2 + $0x8] sm:$0xff]
      %v1679 = vsel %vm889, %v1677, 0.0
      %v1680 = vsel %vm890, %v1678, 0.0
      %v1681 = vld [vmem:[#allocation2 + $0x10] sm:$0xff]
      %1685 = vrot.lane.b32.xlu0 %v1677, 126
      %v1686 = vpop.permute.xlu0 %1685
      %1687 = vrot.lane.b32.xlu0 %v1678, 126
      %v1688 = vpop.permute.xlu0 %1687
      %1689 = vrot.lane.b32.xlu0 %v1681, 126
      %v1690 = vpop.permute.xlu0 %1689
      %v1691 = vsel %vm907, %v1686, %v1688
      %v1692 = vsel %vm907, %v1688, %v1690
      %v1695 = vsel %vm896, %v1691, 0.0
      %v1696 = vsel %vm897, %v1692, 0.0
      %1697 = vrot.lane.b32.xlu0 %v1677, 112
      %v1698 = vpop.permute.xlu0 %1697
      %1699 = vrot.lane.b32.xlu0 %v1678, 112
      %v1700 = vpop.permute.xlu0 %1699
      %1701 = vrot.lane.b32.xlu0 %v1681, 112
      %v1702 = vpop.permute.xlu0 %1701
      %v1703 = vsel %vm920, %v1698, %v1700
      %v1704 = vsel %vm920, %v1700, %v1702
      %v1707 = vsel %vm889, %v1703, 0.0
      %v1708 = vsel %vm890, %v1704, 0.0
      %1709 = vrot.lane.b32.xlu0 %v1677, 110
      %v1710 = vpop.permute.xlu0 %1709
      %1711 = vrot.lane.b32.xlu0 %v1678, 110
      %v1712 = vpop.permute.xlu0 %1711
      %1713 = vrot.lane.b32.xlu0 %v1681, 110
      %v1714 = vpop.permute.xlu0 %1713
      %v1715 = vsel %vm933, %v1710, %v1712
      %v1716 = vsel %vm933, %v1712, %v1714
      %v1719 = vsel %vm896, %v1715, 0.0
      %v1720 = vsel %vm897, %v1716, 0.0
      %1721 = vrot.lane.b32.xlu0 %v1677, 96
      %v1722 = vpop.permute.xlu0 %1721
      %1723 = vrot.lane.b32.xlu0 %v1678, 96
      %v1724 = vpop.permute.xlu0 %1723
      %1725 = vrot.lane.b32.xlu0 %v1681, 96
      %v1726 = vpop.permute.xlu0 %1725
      %v1727 = vsel %vm946, %v1722, %v1724
      %v1728 = vsel %vm946, %v1724, %v1726
      %v1731 = vsel %vm889, %v1727, 0.0
      %v1732 = vsel %vm890, %v1728, 0.0
      %1733 = vrot.lane.b32.xlu0 %v1677, 94
      %v1734 = vpop.permute.xlu0 %1733
      %1735 = vrot.lane.b32.xlu0 %v1678, 94
      %v1736 = vpop.permute.xlu0 %1735
      %1737 = vrot.lane.b32.xlu0 %v1681, 94
      %v1738 = vpop.permute.xlu0 %1737
      %v1739 = vsel %vm959, %v1734, %v1736
      %v1740 = vsel %vm959, %v1736, %v1738
      %v1743 = vsel %vm896, %v1739, 0.0
      %v1744 = vsel %vm897, %v1740, 0.0
      %1745 = vrot.lane.b32.xlu0 %v1677, 127
      %v1746 = vpop.permute.xlu0 %1745
      %1747 = vrot.lane.b32.xlu0 %v1678, 127
      %v1748 = vpop.permute.xlu0 %1747
      %1749 = vrot.lane.b32.xlu0 %v1681, 127
      %v1750 = vpop.permute.xlu0 %1749
      %v1751 = vsel %vm972, %v1746, %v1748
      %v1752 = vsel %vm972, %v1748, %v1750
      %1755 = vrot.lane.b32.xlu0 %v1677, 111
      %v1756 = vpop.permute.xlu0 %1755
      %1757 = vrot.lane.b32.xlu0 %v1678, 111
      %v1758 = vpop.permute.xlu0 %1757
      %1759 = vrot.lane.b32.xlu0 %v1681, 111
      %v1760 = vpop.permute.xlu0 %1759
      %v1761 = vsel %vm983, %v1756, %v1758
      %v1762 = vsel %vm983, %v1758, %v1760
      %1765 = vrot.lane.b32.xlu0 %v1677, 95
      %v1766 = vpop.permute.xlu0 %1765
      %1767 = vrot.lane.b32.xlu0 %v1678, 95
      %v1768 = vpop.permute.xlu0 %1767
      %1769 = vrot.lane.b32.xlu0 %v1681, 95
      %v1770 = vpop.permute.xlu0 %1769
      %v1771 = vsel %vm994, %v1766, %v1768
      %v1772 = vsel %vm994, %v1768, %v1770
      %v1775 = vld [vmem:[%s10] sm:$0xff]
      %1777 = vset.pattern.permute.xlu0 0
      %1778 = vperm.xlu0 %1777, %v1775
      %v1779 = vpop.permute.xlu0 %1778
      %v1782 = vsel %vm1005, %v1663, 0
      %1784 = vmatpush.msra.mxu0 0.0
      %1785 = vmatpush.msra.mxu0 0.0
      %1786 = vmatpush.msra.mxu0 0.0
      %1787 = vmatpush.msra.mxu0 0.0
      %1788 = vmatpush.msra.mxu0 0.0
      %1789 = vmatpush.msra.mxu0 0.0
      %1790 = vmatpush.msra.mxu0 0.0
      %1791 = vmatpush.msra.mxu0 %v1743
      %1792 = vmatpush.msra.mxu0 %v1771
      %1793 = vmatpush.msra.mxu0 %v1731
      %1794 = vmatpush.msra.mxu0 %v1719
      %1795 = vmatpush.msra.mxu0 %v1761
      %1796 = vmatpush.msra.mxu0 %v1707
      %1797 = vmatpush.msra.mxu0 %v1695
      %1798 = vmatpush.msra.mxu0 %v1751
      %1799 = vmatpush.msra.mxu0 %v1679
      %1800 = vmatmul.f32.gmra.mxu0 %v1782
      %v1801 = vpop.f32.mrf.mxu0
      %v1802 = vadd.f32 %v1779, %v1801
      %1803 = vdwg.mxu0
      %1804 = vmatpush.msra.mxu0 0.0
      %1805 = vmatpush.msra.mxu0 0.0
      %1806 = vmatpush.msra.mxu0 0.0
      %1807 = vmatpush.msra.mxu0 0.0
      %1808 = vmatpush.msra.mxu0 0.0
      %1809 = vmatpush.msra.mxu0 0.0
      %1810 = vmatpush.msra.mxu0 0.0
      %1811 = vmatpush.msra.mxu0 %v1744
      %1812 = vmatpush.msra.mxu0 %v1772
      %1813 = vmatpush.msra.mxu0 %v1732
      %1814 = vmatpush.msra.mxu0 %v1720
      %1815 = vmatpush.msra.mxu0 %v1762
      %1816 = vmatpush.msra.mxu0 %v1708
      %1817 = vmatpush.msra.mxu0 %v1696
      %1818 = vmatpush.msra.mxu0 %v1752
      %1819 = vmatpush.msra.mxu0 %v1680
      %1820 = vmatmul.f32.gmra.mxu0 %v1782
      %v1821 = vpop.f32.mrf.mxu0
      %v1822 = vadd.f32 %v1779, %v1821
      %1823 = vdwg.mxu0
      %v1824 = vmax.f32 %v1802, 0.0
      %v1825 = vmax.f32 %v1822, 0.0
      %v1826 = vld [vmem:[%s11] sm:$0xff]
      %1829 = vrot.lane.b32.xlu0 %v1824, 17
      %v1830 = vpop.permute.xlu0 %1829
      %1831 = vrot.lane.b32.xlu0 %v1825, 17
      %v1832 = vpop.permute.xlu0 %1831
      %v1833 = vsel %vm875, %v1830, %v1832
      %1837 = vst.msk [vmem:[#allocation2] sm:$0xff] %vm1066, %v1830
      %1838 = vst [vmem:[#allocation2 + $0x8] sm:$0xff] %v1833
      %1839 = vst.msk [vmem:[#allocation2 + $0x10] sm:$0xff] %vm875, %v1832
      %v1840 = vld [vmem:[#allocation2] sm:$0xff]
      %v1841 = vld [vmem:[#allocation2 + $0x8] sm:$0xff]
      %v1842 = vsel %vm889, %v1840, 0.0
      %v1843 = vsel %vm890, %v1841, 0.0
      %v1844 = vld [vmem:[#allocation2 + $0x10] sm:$0xff]
      %1848 = vrot.lane.b32.xlu0 %v1840, 126
      %v1849 = vpop.permute.xlu0 %1848
      %1850 = vrot.lane.b32.xlu0 %v1841, 126
      %v1851 = vpop.permute.xlu0 %1850
      %1852 = vrot.lane.b32.xlu0 %v1844, 126
      %v1853 = vpop.permute.xlu0 %1852
      %v1854 = vsel %vm907, %v1849, %v1851
      %v1855 = vsel %vm907, %v1851, %v1853
      %v1858 = vsel %vm896, %v1854, 0.0
      %v1859 = vsel %vm897, %v1855, 0.0
      %1860 = vrot.lane.b32.xlu0 %v1840, 112
      %v1861 = vpop.permute.xlu0 %1860
      %1862 = vrot.lane.b32.xlu0 %v1841, 112
      %v1863 = vpop.permute.xlu0 %1862
      %1864 = vrot.lane.b32.xlu0 %v1844, 112
      %v1865 = vpop.permute.xlu0 %1864
      %v1866 = vsel %vm920, %v1861, %v1863
      %v1867 = vsel %vm920, %v1863, %v1865
      %v1870 = vsel %vm889, %v1866, 0.0
      %v1871 = vsel %vm890, %v1867, 0.0
      %1872 = vrot.lane.b32.xlu0 %v1840, 110
      %v1873 = vpop.permute.xlu0 %1872
      %1874 = vrot.lane.b32.xlu0 %v1841, 110
      %v1875 = vpop.permute.xlu0 %1874
      %1876 = vrot.lane.b32.xlu0 %v1844, 110
      %v1877 = vpop.permute.xlu0 %1876
      %v1878 = vsel %vm933, %v1873, %v1875
      %v1879 = vsel %vm933, %v1875, %v1877
      %v1882 = vsel %vm896, %v1878, 0.0
      %v1883 = vsel %vm897, %v1879, 0.0
      %1884 = vrot.lane.b32.xlu0 %v1840, 96
      %v1885 = vpop.permute.xlu0 %1884
      %1886 = vrot.lane.b32.xlu0 %v1841, 96
      %v1887 = vpop.permute.xlu0 %1886
      %1888 = vrot.lane.b32.xlu0 %v1844, 96
      %v1889 = vpop.permute.xlu0 %1888
      %v1890 = vsel %vm946, %v1885, %v1887
      %v1891 = vsel %vm946, %v1887, %v1889
      %v1894 = vsel %vm889, %v1890, 0.0
      %v1895 = vsel %vm890, %v1891, 0.0
      %1896 = vrot.lane.b32.xlu0 %v1840, 94
      %v1897 = vpop.permute.xlu0 %1896
      %1898 = vrot.lane.b32.xlu0 %v1841, 94
      %v1899 = vpop.permute.xlu0 %1898
      %1900 = vrot.lane.b32.xlu0 %v1844, 94
      %v1901 = vpop.permute.xlu0 %1900
      %v1902 = vsel %vm959, %v1897, %v1899
      %v1903 = vsel %vm959, %v1899, %v1901
      %v1906 = vsel %vm896, %v1902, 0.0
      %v1907 = vsel %vm897, %v1903, 0.0
      %1908 = vrot.lane.b32.xlu0 %v1840, 127
      %v1909 = vpop.permute.xlu0 %1908
      %1910 = vrot.lane.b32.xlu0 %v1841, 127
      %v1911 = vpop.permute.xlu0 %1910
      %1912 = vrot.lane.b32.xlu0 %v1844, 127
      %v1913 = vpop.permute.xlu0 %1912
      %v1914 = vsel %vm972, %v1909, %v1911
      %v1915 = vsel %vm972, %v1911, %v1913
      %1918 = vrot.lane.b32.xlu0 %v1840, 111
      %v1919 = vpop.permute.xlu0 %1918
      %1920 = vrot.lane.b32.xlu0 %v1841, 111
      %v1921 = vpop.permute.xlu0 %1920
      %1922 = vrot.lane.b32.xlu0 %v1844, 111
      %v1923 = vpop.permute.xlu0 %1922
      %v1924 = vsel %vm983, %v1919, %v1921
      %v1925 = vsel %vm983, %v1921, %v1923
      %1928 = vrot.lane.b32.xlu0 %v1840, 95
      %v1929 = vpop.permute.xlu0 %1928
      %1930 = vrot.lane.b32.xlu0 %v1841, 95
      %v1931 = vpop.permute.xlu0 %1930
      %1932 = vrot.lane.b32.xlu0 %v1844, 95
      %v1933 = vpop.permute.xlu0 %1932
      %v1934 = vsel %vm994, %v1929, %v1931
      %v1935 = vsel %vm994, %v1931, %v1933
      %v1938 = vld [vmem:[%s12] sm:$0xff]
      %1940 = vset.pattern.permute.xlu0 0
      %1941 = vperm.xlu0 %1940, %v1938
      %v1942 = vpop.permute.xlu0 %1941
      %v1945 = vsel %vm1005, %v1826, 0
      %1947 = vmatpush.msra.mxu0 0.0
      %1948 = vmatpush.msra.mxu0 0.0
      %1949 = vmatpush.msra.mxu0 0.0
      %1950 = vmatpush.msra.mxu0 0.0
      %1951 = vmatpush.msra.mxu0 0.0
      %1952 = vmatpush.msra.mxu0 0.0
      %1953 = vmatpush.msra.mxu0 0.0
      %1954 = vmatpush.msra.mxu0 %v1906
      %1955 = vmatpush.msra.mxu0 %v1934
      %1956 = vmatpush.msra.mxu0 %v1894
      %1957 = vmatpush.msra.mxu0 %v1882
      %1958 = vmatpush.msra.mxu0 %v1924
      %1959 = vmatpush.msra.mxu0 %v1870
      %1960 = vmatpush.msra.mxu0 %v1858
      %1961 = vmatpush.msra.mxu0 %v1914
      %1962 = vmatpush.msra.mxu0 %v1842
      %1963 = vmatmul.f32.gmra.mxu0 %v1945
      %v1964 = vpop.f32.mrf.mxu0
      %v1965 = vadd.f32 %v1942, %v1964
      %1966 = vdwg.mxu0
      %1967 = vmatpush.msra.mxu0 0.0
      %1968 = vmatpush.msra.mxu0 0.0
      %1969 = vmatpush.msra.mxu0 0.0
      %1970 = vmatpush.msra.mxu0 0.0
      %1971 = vmatpush.msra.mxu0 0.0
      %1972 = vmatpush.msra.mxu0 0.0
      %1973 = vmatpush.msra.mxu0 0.0
      %1974 = vmatpush.msra.mxu0 %v1907
      %1975 = vmatpush.msra.mxu0 %v1935
      %1976 = vmatpush.msra.mxu0 %v1895
      %1977 = vmatpush.msra.mxu0 %v1883
      %1978 = vmatpush.msra.mxu0 %v1925
      %1979 = vmatpush.msra.mxu0 %v1871
      %1980 = vmatpush.msra.mxu0 %v1859
      %1981 = vmatpush.msra.mxu0 %v1915
      %1982 = vmatpush.msra.mxu0 %v1843
      %1983 = vmatmul.f32.gmra.mxu0 %v1945
      %v1984 = vpop.f32.mrf.mxu0
      %v1985 = vadd.f32 %v1942, %v1984
      %1986 = vdwg.mxu0
      %v1987 = vadd.f32 %v1965, %v1659
      %v1988 = vadd.f32 %v1985, %v1660
      %v1989 = vmax.f32 %v1987, 0.0
      %v1990 = vmax.f32 %v1988, 0.0
      %v1991 = vld [vmem:[%s815] sm:$0xff]
      %v1992 = vld [vmem:[%s815 + $0x8] sm:$0xff]
      %v1993 = vld [vmem:[%s13] sm:$0xff]
      %v1994 = vld [vmem:[%s13 + $0x8] sm:$0xff]
      %v1995 = vld [vmem:[%s13 + $0x10] sm:$0xff]
      %1998 = vrot.lane.b32.xlu0 %v1989, 17
      %v1999 = vpop.permute.xlu0 %1998
      %2000 = vrot.lane.b32.xlu0 %v1990, 17
      %v2001 = vpop.permute.xlu0 %2000
      %v2002 = vsel %vm875, %v1999, %v2001
      %2006 = vst.msk [vmem:[#allocation2] sm:$0xff] %vm1066, %v1999
      %2007 = vst [vmem:[#allocation2 + $0x8] sm:$0xff] %v2002
      %2008 = vst.msk [vmem:[#allocation2 + $0x10] sm:$0xff] %vm875, %v2001
      %v2009 = vld [vmem:[#allocation2] sm:$0xff]
      %v2010 = vld [vmem:[#allocation2 + $0x8] sm:$0xff]
      %v2011 = vsel %vm889, %v2009, 0.0
      %v2012 = vsel %vm890, %v2010, 0.0
      %v2013 = vld [vmem:[#allocation2 + $0x10] sm:$0xff]
      %2017 = vrot.lane.b32.xlu0 %v2009, 126
      %v2018 = vpop.permute.xlu0 %2017
      %2019 = vrot.lane.b32.xlu0 %v2010, 126
      %v2020 = vpop.permute.xlu0 %2019
      %2021 = vrot.lane.b32.xlu0 %v2013, 126
      %v2022 = vpop.permute.xlu0 %2021
      %v2023 = vsel %vm907, %v2018, %v2020
      %v2024 = vsel %vm907, %v2020, %v2022
      %v2027 = vsel %vm896, %v2023, 0.0
      %v2028 = vsel %vm897, %v2024, 0.0
      %2029 = vrot.lane.b32.xlu0 %v2009, 112
      %v2030 = vpop.permute.xlu0 %2029
      %2031 = vrot.lane.b32.xlu0 %v2010, 112
      %v2032 = vpop.permute.xlu0 %2031
      %2033 = vrot.lane.b32.xlu0 %v2013, 112
      %v2034 = vpop.permute.xlu0 %2033
      %v2035 = vsel %vm920, %v2030, %v2032
      %v2036 = vsel %vm920, %v2032, %v2034
      %v2039 = vsel %vm889, %v2035, 0.0
      %v2040 = vsel %vm890, %v2036, 0.0
      %2041 = vrot.lane.b32.xlu0 %v2009, 110
      %v2042 = vpop.permute.xlu0 %2041
      %2043 = vrot.lane.b32.xlu0 %v2010, 110
      %v2044 = vpop.permute.xlu0 %2043
      %2045 = vrot.lane.b32.xlu0 %v2013, 110
      %v2046 = vpop.permute.xlu0 %2045
      %v2047 = vsel %vm933, %v2042, %v2044
      %v2048 = vsel %vm933, %v2044, %v2046
      %v2051 = vsel %vm896, %v2047, 0.0
      %v2052 = vsel %vm897, %v2048, 0.0
      %2053 = vrot.lane.b32.xlu0 %v2009, 96
      %v2054 = vpop.permute.xlu0 %2053
      %2055 = vrot.lane.b32.xlu0 %v2010, 96
      %v2056 = vpop.permute.xlu0 %2055
      %2057 = vrot.lane.b32.xlu0 %v2013, 96
      %v2058 = vpop.permute.xlu0 %2057
      %v2059 = vsel %vm946, %v2054, %v2056
      %v2060 = vsel %vm946, %v2056, %v2058
      %v2063 = vsel %vm889, %v2059, 0.0
      %v2064 = vsel %vm890, %v2060, 0.0
      %2065 = vrot.lane.b32.xlu0 %v2009, 94
      %v2066 = vpop.permute.xlu0 %2065
      %2067 = vrot.lane.b32.xlu0 %v2010, 94
      %v2068 = vpop.permute.xlu0 %2067
      %2069 = vrot.lane.b32.xlu0 %v2013, 94
      %v2070 = vpop.permute.xlu0 %2069
      %v2071 = vsel %vm959, %v2066, %v2068
      %v2072 = vsel %vm959, %v2068, %v2070
      %v2075 = vsel %vm896, %v2071, 0.0
      %v2076 = vsel %vm897, %v2072, 0.0
      %2077 = vrot.lane.b32.xlu0 %v2009, 127
      %v2078 = vpop.permute.xlu0 %2077
      %2079 = vrot.lane.b32.xlu0 %v2010, 127
      %v2080 = vpop.permute.xlu0 %2079
      %2081 = vrot.lane.b32.xlu0 %v2013, 127
      %v2082 = vpop.permute.xlu0 %2081
      %v2083 = vsel %vm972, %v2078, %v2080
      %v2084 = vsel %vm972, %v2080, %v2082
      %2087 = vrot.lane.b32.xlu0 %v2009, 111
      %v2088 = vpop.permute.xlu0 %2087
      %2089 = vrot.lane.b32.xlu0 %v2010, 111
      %v2090 = vpop.permute.xlu0 %2089
      %2091 = vrot.lane.b32.xlu0 %v2013, 111
      %v2092 = vpop.permute.xlu0 %2091
      %v2093 = vsel %vm983, %v2088, %v2090
      %v2094 = vsel %vm983, %v2090, %v2092
      %2097 = vrot.lane.b32.xlu0 %v2009, 95
      %v2098 = vpop.permute.xlu0 %2097
      %2099 = vrot.lane.b32.xlu0 %v2010, 95
      %v2100 = vpop.permute.xlu0 %2099
      %2101 = vrot.lane.b32.xlu0 %v2013, 95
      %v2102 = vpop.permute.xlu0 %2101
      %v2103 = vsel %vm994, %v2098, %v2100
      %v2104 = vsel %vm994, %v2100, %v2102
      %v2107 = vld [vmem:[%s16] sm:$0xff]
      %v2108 = vld [vmem:[%s16 + $0x8] sm:$0xff]
      %v2109 = vld [vmem:[%s16 + $0x10] sm:$0xff]
      %2111 = vset.pattern.permute.xlu0 0
      %2112 = vperm.xlu0 %2111, %v2107
      %v2113 = vpop.permute.xlu0 %2112
      %2116 = vset.pattern.permute.xlu0 0
      %2117 = vperm.xlu0 %2116, %v2108
      %v2118 = vpop.permute.xlu0 %2117
      %2121 = vset.pattern.permute.xlu0 0
      %2122 = vperm.xlu0 %2121, %v2109
      %v2123 = vpop.permute.xlu0 %2122
      %v2126 = vsel %vm1005, %v1993, 0
      %v2129 = vsel %vm1005, %v1994, 0
      %v2132 = vsel %vm1005, %v1995, 0
      %2134 = vmatpush.msra.mxu0 0.0
      %2135 = vmatpush.msra.mxu0 0.0
      %2136 = vmatpush.msra.mxu0 0.0
      %2137 = vmatpush.msra.mxu0 0.0
      %2138 = vmatpush.msra.mxu0 0.0
      %2139 = vmatpush.msra.mxu0 0.0
      %2140 = vmatpush.msra.mxu0 0.0
      %2141 = vmatpush.msra.mxu0 %v2075
      %2142 = vmatpush.msra.mxu0 %v2103
      %2143 = vmatpush.msra.mxu0 %v2063
      %2144 = vmatpush.msra.mxu0 %v2051
      %2145 = vmatpush.msra.mxu0 %v2093
      %2146 = vmatpush.msra.mxu0 %v2039
      %2147 = vmatpush.msra.mxu0 %v2027
      %2148 = vmatpush.msra.mxu0 %v2083
      %2149 = vmatpush.msra.mxu0 %v2011
      %2150 = vmatmul.f32.gmra.mxu0 %v2126
      %v2151 = vpop.f32.mrf.mxu0
      %v2152 = vadd.f32 %v2113, %v2151
      %2153 = vmatmul.f32.gmra.mxu0 %v2129
      %v2154 = vpop.f32.mrf.mxu0
      %v2155 = vadd.f32 %v2118, %v2154
      %2156 = vmatmul.f32.gmra.mxu0 %v2132
      %v2157 = vpop.f32.mrf.mxu0
      %v2158 = vadd.f32 %v2123, %v2157
      %2159 = vdwg.mxu0
      %2160 = vmatpush.msra.mxu0 0.0
      %2161 = vmatpush.msra.mxu0 0.0
      %2162 = vmatpush.msra.mxu0 0.0
      %2163 = vmatpush.msra.mxu0 0.0
      %2164 = vmatpush.msra.mxu0 0.0
      %2165 = vmatpush.msra.mxu0 0.0
      %2166 = vmatpush.msra.mxu0 0.0
      %2167 = vmatpush.msra.mxu0 %v2076
      %2168 = vmatpush.msra.mxu0 %v2104
      %2169 = vmatpush.msra.mxu0 %v2064
      %2170 = vmatpush.msra.mxu0 %v2052
      %2171 = vmatpush.msra.mxu0 %v2094
      %2172 = vmatpush.msra.mxu0 %v2040
      %2173 = vmatpush.msra.mxu0 %v2028
      %2174 = vmatpush.msra.mxu0 %v2084
      %2175 = vmatpush.msra.mxu0 %v2012
      %2176 = vmatmul.f32.gmra.mxu0 %v2126
      %v2177 = vpop.f32.mrf.mxu0
      %v2178 = vadd.f32 %v2113, %v2177
      %2179 = vmatmul.f32.gmra.mxu0 %v2129
      %v2180 = vpop.f32.mrf.mxu0
      %v2181 = vadd.f32 %v2118, %v2180
      %2182 = vmatmul.f32.gmra.mxu0 %v2132
      %v2183 = vpop.f32.mrf.mxu0
      %v2184 = vadd.f32 %v2123, %v2183
      %2185 = vdwg.mxu0
      %v2186 = vld [vmem:[%s14] sm:$0xff]
      %v2187 = vld [vmem:[%s14 + $0x8] sm:$0xff]
      %2190 = vrot.lane.b32.xlu0 %v1991, 17
      %v2191 = vpop.permute.xlu0 %2190
      %2192 = vrot.lane.b32.xlu0 %v1992, 17
      %v2193 = vpop.permute.xlu0 %2192
      %v2194 = vsel %vm875, %v2191, %v2193
      %2198 = vst.msk [vmem:[#allocation2] sm:$0xff] %vm1066, %v2191
      %2199 = vst [vmem:[#allocation2 + $0x8] sm:$0xff] %v2194
      %2200 = vst.msk [vmem:[#allocation2 + $0x10] sm:$0xff] %vm875, %v2193
      %v2201 = vld [vmem:[#allocation2] sm:$0xff]
      %v2202 = vld [vmem:[#allocation2 + $0x8] sm:$0xff]
      %v2203 = vsel %vm889, %v2201, 0.0
      %v2204 = vsel %vm890, %v2202, 0.0
      %v2205 = vld [vmem:[#allocation2 + $0x10] sm:$0xff]
      %2209 = vrot.lane.b32.xlu0 %v2201, 126
      %v2210 = vpop.permute.xlu0 %2209
      %2211 = vrot.lane.b32.xlu0 %v2202, 126
      %v2212 = vpop.permute.xlu0 %2211
      %2213 = vrot.lane.b32.xlu0 %v2205, 126
      %v2214 = vpop.permute.xlu0 %2213
      %v2215 = vsel %vm907, %v2210, %v2212
      %v2216 = vsel %vm907, %v2212, %v2214
      %v2219 = vsel %vm896, %v2215, 0.0
      %v2220 = vsel %vm897, %v2216, 0.0
      %2221 = vrot.lane.b32.xlu0 %v2201, 112
      %v2222 = vpop.permute.xlu0 %2221
      %2223 = vrot.lane.b32.xlu0 %v2202, 112
      %v2224 = vpop.permute.xlu0 %2223
      %2225 = vrot.lane.b32.xlu0 %v2205, 112
      %v2226 = vpop.permute.xlu0 %2225
      %v2227 = vsel %vm920, %v2222, %v2224
      %v2228 = vsel %vm920, %v2224, %v2226
      %v2231 = vsel %vm889, %v2227, 0.0
      %v2232 = vsel %vm890, %v2228, 0.0
      %2233 = vrot.lane.b32.xlu0 %v2201, 110
      %v2234 = vpop.permute.xlu0 %2233
      %2235 = vrot.lane.b32.xlu0 %v2202, 110
      %v2236 = vpop.permute.xlu0 %2235
      %2237 = vrot.lane.b32.xlu0 %v2205, 110
      %v2238 = vpop.permute.xlu0 %2237
      %v2239 = vsel %vm933, %v2234, %v2236
      %v2240 = vsel %vm933, %v2236, %v2238
      %v2243 = vsel %vm896, %v2239, 0.0
      %v2244 = vsel %vm897, %v2240, 0.0
      %2245 = vrot.lane.b32.xlu0 %v2201, 96
      %v2246 = vpop.permute.xlu0 %2245
      %2247 = vrot.lane.b32.xlu0 %v2202, 96
      %v2248 = vpop.permute.xlu0 %2247
      %2249 = vrot.lane.b32.xlu0 %v2205, 96
      %v2250 = vpop.permute.xlu0 %2249
      %v2251 = vsel %vm946, %v2246, %v2248
      %v2252 = vsel %vm946, %v2248, %v2250
      %v2255 = vsel %vm889, %v2251, 0.0
      %v2256 = vsel %vm890, %v2252, 0.0
      %2257 = vrot.lane.b32.xlu0 %v2201, 94
      %v2258 = vpop.permute.xlu0 %2257
      %2259 = vrot.lane.b32.xlu0 %v2202, 94
      %v2260 = vpop.permute.xlu0 %2259
      %2261 = vrot.lane.b32.xlu0 %v2205, 94
      %v2262 = vpop.permute.xlu0 %2261
      %v2263 = vsel %vm959, %v2258, %v2260
      %v2264 = vsel %vm959, %v2260, %v2262
      %v2267 = vsel %vm896, %v2263, 0.0
      %v2268 = vsel %vm897, %v2264, 0.0
      %2269 = vrot.lane.b32.xlu0 %v2201, 127
      %v2270 = vpop.permute.xlu0 %2269
      %2271 = vrot.lane.b32.xlu0 %v2202, 127
      %v2272 = vpop.permute.xlu0 %2271
      %2273 = vrot.lane.b32.xlu0 %v2205, 127
      %v2274 = vpop.permute.xlu0 %2273
      %v2275 = vsel %vm972, %v2270, %v2272
      %v2276 = vsel %vm972, %v2272, %v2274
      %2279 = vrot.lane.b32.xlu0 %v2201, 111
      %v2280 = vpop.permute.xlu0 %2279
      %2281 = vrot.lane.b32.xlu0 %v2202, 111
      %v2282 = vpop.permute.xlu0 %2281
      %2283 = vrot.lane.b32.xlu0 %v2205, 111
      %v2284 = vpop.permute.xlu0 %2283
      %v2285 = vsel %vm983, %v2280, %v2282
      %v2286 = vsel %vm983, %v2282, %v2284
      %2289 = vrot.lane.b32.xlu0 %v2201, 95
      %v2290 = vpop.permute.xlu0 %2289
      %2291 = vrot.lane.b32.xlu0 %v2202, 95
      %v2292 = vpop.permute.xlu0 %2291
      %2293 = vrot.lane.b32.xlu0 %v2205, 95
      %v2294 = vpop.permute.xlu0 %2293
      %v2295 = vsel %vm994, %v2290, %v2292
      %v2296 = vsel %vm994, %v2292, %v2294
      %v2300 = vsel %vm1005, %v2186, 0
      %v2303 = vsel %vm1005, %v2187, 0
      %2305 = vmatpush.msra.mxu0 0.0
      %2306 = vmatpush.msra.mxu0 0.0
      %2307 = vmatpush.msra.mxu0 0.0
      %2308 = vmatpush.msra.mxu0 0.0
      %2309 = vmatpush.msra.mxu0 0.0
      %2310 = vmatpush.msra.mxu0 0.0
      %2311 = vmatpush.msra.mxu0 0.0
      %2312 = vmatpush.msra.mxu0 %v2267
      %2313 = vmatpush.msra.mxu0 %v2295
      %2314 = vmatpush.msra.mxu0 %v2255
      %2315 = vmatpush.msra.mxu0 %v2243
      %2316 = vmatpush.msra.mxu0 %v2285
      %2317 = vmatpush.msra.mxu0 %v2231
      %2318 = vmatpush.msra.mxu0 %v2219
      %2319 = vmatpush.msra.mxu0 %v2275
      %2320 = vmatpush.msra.mxu0 %v2203
      %2321 = vmatmul.f32.gmra.mxu0 %v2300
      %v2322 = vpop.f32.mrf.mxu0
      %v2323 = vadd.f32 0.0, %v2322
      %2324 = vmatmul.f32.gmra.mxu0 %v2303
      %v2325 = vpop.f32.mrf.mxu0
      %v2326 = vadd.f32 0.0, %v2325
      %2327 = vdwg.mxu0
      %2328 = vmatpush.msra.mxu0 0.0
      %2329 = vmatpush.msra.mxu0 0.0
      %2330 = vmatpush.msra.mxu0 0.0
      %2331 = vmatpush.msra.mxu0 0.0
      %2332 = vmatpush.msra.mxu0 0.0
      %2333 = vmatpush.msra.mxu0 0.0
      %2334 = vmatpush.msra.mxu0 0.0
      %2335 = vmatpush.msra.mxu0 %v2268
      %2336 = vmatpush.msra.mxu0 %v2296
      %2337 = vmatpush.msra.mxu0 %v2256
      %2338 = vmatpush.msra.mxu0 %v2244
      %2339 = vmatpush.msra.mxu0 %v2286
      %2340 = vmatpush.msra.mxu0 %v2232
      %2341 = vmatpush.msra.mxu0 %v2220
      %2342 = vmatpush.msra.mxu0 %v2276
      %2343 = vmatpush.msra.mxu0 %v2204
      %2344 = vmatmul.f32.gmra.mxu0 %v2300
      %v2345 = vpop.f32.mrf.mxu0
      %v2346 = vadd.f32 0.0, %v2345
      %2347 = vmatmul.f32.gmra.mxu0 %v2303
      %v2348 = vpop.f32.mrf.mxu0
      %v2349 = vadd.f32 0.0, %v2348
      %2350 = vdwg.mxu0
      %v2351 = vadd.f32 %v2152, %v2323
      %v2352 = vadd.f32 %v2178, %v2346
      %v2353 = vxor.u32 %v2351, 2147483648
      %v2354 = vxor.u32 %v2352, 2147483648
      %v2355 = vmul.f32 %v2353, 1.442695
      %v2356 = vpow.pop %v2355
      %v2357 = vmul.f32 %v2354, 1.442695
      %v2358 = vpow.pop %v2357
      %v2359 = vadd.f32 %v2356, 1.0
      %v2360 = vadd.f32 %v2358, 1.0
      %v2361 = vrcp.pop %v2359
      %v2362 = vmul.f32 %v2359, %v2361
      %v2363 = vsub.f32 1.0, %v2362
      %v2364 = vmul.f32 %v2361, %v2363
      %v2365 = vadd.f32 %v2361, %v2364
      %vm2366 = vweird.f32 %v2359
      %vm2367 = vweird.f32 %v2361
      %vm2368 = vmor %vm2366, %vm2367
      %v2369 = vsel %vm2368, %v2361, %v2365
      %v2370 = vand.u32 2147483647, %v2359
      %vm2371 = vcmp.eq.f32.partialorder %v2370, 8.507059e+37
      %v2372 = vand.u32 %v2359, 2147483648
      %v2373 = vor.u32 1.1754944e-38, %v2372
      %v2374 = vsel %vm2371, %v2373, %v2369
      %v2375 = vmul.f32 1.0, %v2374
      %v2376 = vrcp.pop %v2360
      %v2377 = vmul.f32 %v2360, %v2376
      %v2378 = vsub.f32 1.0, %v2377
      %v2379 = vmul.f32 %v2376, %v2378
      %v2380 = vadd.f32 %v2376, %v2379
      %vm2381 = vweird.f32 %v2360
      %vm2382 = vweird.f32 %v2376
      %vm2383 = vmor %vm2381, %vm2382
      %v2384 = vsel %vm2383, %v2376, %v2380
      %v2385 = vand.u32 2147483647, %v2360
      %vm2386 = vcmp.eq.f32.partialorder %v2385, 8.507059e+37
      %v2387 = vand.u32 %v2360, 2147483648
      %v2388 = vor.u32 1.1754944e-38, %v2387
      %v2389 = vsel %vm2386, %v2388, %v2384
      %v2390 = vmul.f32 1.0, %v2389
      %v2391 = vadd.f32 %v2155, %v2326
      %v2392 = vadd.f32 %v2181, %v2349
      %v2393 = vxor.u32 %v2391, 2147483648
      %v2394 = vxor.u32 %v2392, 2147483648
      %v2395 = vmul.f32 %v2393, 1.442695
      %v2396 = vpow.pop %v2395
      %v2397 = vmul.f32 %v2394, 1.442695
      %v2398 = vpow.pop %v2397
      %v2399 = vadd.f32 %v2396, 1.0
      %v2400 = vadd.f32 %v2398, 1.0
      %v2401 = vrcp.pop %v2399
      %v2402 = vmul.f32 %v2399, %v2401
      %v2403 = vsub.f32 1.0, %v2402
      %v2404 = vmul.f32 %v2401, %v2403
      %v2405 = vadd.f32 %v2401, %v2404
      %vm2406 = vweird.f32 %v2399
      %vm2407 = vweird.f32 %v2401
      %vm2408 = vmor %vm2406, %vm2407
      %v2409 = vsel %vm2408, %v2401, %v2405
      %v2410 = vand.u32 2147483647, %v2399
      %vm2411 = vcmp.eq.f32.partialorder %v2410, 8.507059e+37
      %v2412 = vand.u32 %v2399, 2147483648
      %v2413 = vor.u32 1.1754944e-38, %v2412
      %v2414 = vsel %vm2411, %v2413, %v2409
      %v2415 = vmul.f32 1.0, %v2414
      %v2416 = vrcp.pop %v2400
      %v2417 = vmul.f32 %v2400, %v2416
      %v2418 = vsub.f32 1.0, %v2417
      %v2419 = vmul.f32 %v2416, %v2418
      %v2420 = vadd.f32 %v2416, %v2419
      %vm2421 = vweird.f32 %v2400
      %vm2422 = vweird.f32 %v2416
      %vm2423 = vmor %vm2421, %vm2422
      %v2424 = vsel %vm2423, %v2416, %v2420
      %v2425 = vand.u32 2147483647, %v2400
      %vm2426 = vcmp.eq.f32.partialorder %v2425, 8.507059e+37
      %v2427 = vand.u32 %v2400, 2147483648
      %v2428 = vor.u32 1.1754944e-38, %v2427
      %v2429 = vsel %vm2426, %v2428, %v2424
      %v2430 = vmul.f32 1.0, %v2429
      %v2431 = vld [vmem:[%s15] sm:$0xff]
      %v2432 = vmul.f32 %v1991, %v2415
      %v2433 = vmul.f32 %v1992, %v2430
      %2436 = vrot.lane.b32.xlu0 %v2432, 17
      %v2437 = vpop.permute.xlu0 %2436
      %2438 = vrot.lane.b32.xlu0 %v2433, 17
      %v2439 = vpop.permute.xlu0 %2438
      %v2440 = vsel %vm875, %v2437, %v2439
      %2444 = vst.msk [vmem:[#allocation2] sm:$0xff] %vm1066, %v2437
      %2445 = vst [vmem:[#allocation2 + $0x8] sm:$0xff] %v2440
      %2446 = vst.msk [vmem:[#allocation2 + $0x10] sm:$0xff] %vm875, %v2439
      %v2447 = vld [vmem:[#allocation2] sm:$0xff]
      %v2448 = vld [vmem:[#allocation2 + $0x8] sm:$0xff]
      %v2449 = vsel %vm889, %v2447, 0.0
      %v2450 = vsel %vm890, %v2448, 0.0
      %v2451 = vld [vmem:[#allocation2 + $0x10] sm:$0xff]
      %2455 = vrot.lane.b32.xlu0 %v2447, 126
      %v2456 = vpop.permute.xlu0 %2455
      %2457 = vrot.lane.b32.xlu0 %v2448, 126
      %v2458 = vpop.permute.xlu0 %2457
      %2459 = vrot.lane.b32.xlu0 %v2451, 126
      %v2460 = vpop.permute.xlu0 %2459
      %v2461 = vsel %vm907, %v2456, %v2458
      %v2462 = vsel %vm907, %v2458, %v2460
      %v2465 = vsel %vm896, %v2461, 0.0
      %v2466 = vsel %vm897, %v2462, 0.0
      %2467 = vrot.lane.b32.xlu0 %v2447, 112
      %v2468 = vpop.permute.xlu0 %2467
      %2469 = vrot.lane.b32.xlu0 %v2448, 112
      %v2470 = vpop.permute.xlu0 %2469
      %2471 = vrot.lane.b32.xlu0 %v2451, 112
      %v2472 = vpop.permute.xlu0 %2471
      %v2473 = vsel %vm920, %v2468, %v2470
      %v2474 = vsel %vm920, %v2470, %v2472
      %v2477 = vsel %vm889, %v2473, 0.0
      %v2478 = vsel %vm890, %v2474, 0.0
      %2479 = vrot.lane.b32.xlu0 %v2447, 110
      %v2480 = vpop.permute.xlu0 %2479
      %2481 = vrot.lane.b32.xlu0 %v2448, 110
      %v2482 = vpop.permute.xlu0 %2481
      %2483 = vrot.lane.b32.xlu0 %v2451, 110
      %v2484 = vpop.permute.xlu0 %2483
      %v2485 = vsel %vm933, %v2480, %v2482
      %v2486 = vsel %vm933, %v2482, %v2484
      %v2489 = vsel %vm896, %v2485, 0.0
      %v2490 = vsel %vm897, %v2486, 0.0
      %2491 = vrot.lane.b32.xlu0 %v2447, 96
      %v2492 = vpop.permute.xlu0 %2491
      %2493 = vrot.lane.b32.xlu0 %v2448, 96
      %v2494 = vpop.permute.xlu0 %2493
      %2495 = vrot.lane.b32.xlu0 %v2451, 96
      %v2496 = vpop.permute.xlu0 %2495
      %v2497 = vsel %vm946, %v2492, %v2494
      %v2498 = vsel %vm946, %v2494, %v2496
      %v2501 = vsel %vm889, %v2497, 0.0
      %v2502 = vsel %vm890, %v2498, 0.0
      %2503 = vrot.lane.b32.xlu0 %v2447, 94
      %v2504 = vpop.permute.xlu0 %2503
      %2505 = vrot.lane.b32.xlu0 %v2448, 94
      %v2506 = vpop.permute.xlu0 %2505
      %2507 = vrot.lane.b32.xlu0 %v2451, 94
      %v2508 = vpop.permute.xlu0 %2507
      %v2509 = vsel %vm959, %v2504, %v2506
      %v2510 = vsel %vm959, %v2506, %v2508
      %v2513 = vsel %vm896, %v2509, 0.0
      %v2514 = vsel %vm897, %v2510, 0.0
      %2515 = vrot.lane.b32.xlu0 %v2447, 127
      %v2516 = vpop.permute.xlu0 %2515
      %2517 = vrot.lane.b32.xlu0 %v2448, 127
      %v2518 = vpop.permute.xlu0 %2517
      %2519 = vrot.lane.b32.xlu0 %v2451, 127
      %v2520 = vpop.permute.xlu0 %2519
      %v2521 = vsel %vm972, %v2516, %v2518
      %v2522 = vsel %vm972, %v2518, %v2520
      %2525 = vrot.lane.b32.xlu0 %v2447, 111
      %v2526 = vpop.permute.xlu0 %2525
      %2527 = vrot.lane.b32.xlu0 %v2448, 111
      %v2528 = vpop.permute.xlu0 %2527
      %2529 = vrot.lane.b32.xlu0 %v2451, 111
      %v2530 = vpop.permute.xlu0 %2529
      %v2531 = vsel %vm983, %v2526, %v2528
      %v2532 = vsel %vm983, %v2528, %v2530
      %2535 = vrot.lane.b32.xlu0 %v2447, 95
      %v2536 = vpop.permute.xlu0 %2535
      %2537 = vrot.lane.b32.xlu0 %v2448, 95
      %v2538 = vpop.permute.xlu0 %2537
      %2539 = vrot.lane.b32.xlu0 %v2451, 95
      %v2540 = vpop.permute.xlu0 %2539
      %v2541 = vsel %vm994, %v2536, %v2538
      %v2542 = vsel %vm994, %v2538, %v2540
      %v2546 = vsel %vm1005, %v2431, 0
      %2548 = vmatpush.msra.mxu0 0.0
      %2549 = vmatpush.msra.mxu0 0.0
      %2550 = vmatpush.msra.mxu0 0.0
      %2551 = vmatpush.msra.mxu0 0.0
      %2552 = vmatpush.msra.mxu0 0.0
      %2553 = vmatpush.msra.mxu0 0.0
      %2554 = vmatpush.msra.mxu0 0.0
      %2555 = vmatpush.msra.mxu0 %v2513
      %2556 = vmatpush.msra.mxu0 %v2541
      %2557 = vmatpush.msra.mxu0 %v2501
      %2558 = vmatpush.msra.mxu0 %v2489
      %2559 = vmatpush.msra.mxu0 %v2531
      %2560 = vmatpush.msra.mxu0 %v2477
      %2561 = vmatpush.msra.mxu0 %v2465
      %2562 = vmatpush.msra.mxu0 %v2521
      %2563 = vmatpush.msra.mxu0 %v2449
      %2564 = vmatmul.f32.gmra.mxu0 %v2546
      %v2565 = vpop.f32.mrf.mxu0
      %v2566 = vadd.f32 0.0, %v2565
      %2567 = vdwg.mxu0
      %2568 = vmatpush.msra.mxu0 0.0
      %2569 = vmatpush.msra.mxu0 0.0
      %2570 = vmatpush.msra.mxu0 0.0
      %2571 = vmatpush.msra.mxu0 0.0
      %2572 = vmatpush.msra.mxu0 0.0
      %2573 = vmatpush.msra.mxu0 0.0
      %2574 = vmatpush.msra.mxu0 0.0
      %2575 = vmatpush.msra.mxu0 %v2514
      %2576 = vmatpush.msra.mxu0 %v2542
      %2577 = vmatpush.msra.mxu0 %v2502
      %2578 = vmatpush.msra.mxu0 %v2490
      %2579 = vmatpush.msra.mxu0 %v2532
      %2580 = vmatpush.msra.mxu0 %v2478
      %2581 = vmatpush.msra.mxu0 %v2466
      %2582 = vmatpush.msra.mxu0 %v2522
      %2583 = vmatpush.msra.mxu0 %v2450
      %2584 = vmatmul.f32.gmra.mxu0 %v2546
      %v2585 = vpop.f32.mrf.mxu0
      %v2586 = vadd.f32 0.0, %v2585
      %2587 = vdwg.mxu0
      %v2588 = vadd.f32 %v2158, %v2566
      %v2589 = vadd.f32 %v2184, %v2586
      %v2590 = vtanh.pop %v2588
      %v2591 = vtanh.pop %v2589
      %v2592 = vsub.f32 1.0, %v2375
      %v2593 = vsub.f32 1.0, %v2390
      %v2594 = vmul.f32 %v1991, %v2592
      %v2595 = vmul.f32 %v1992, %v2593
      %v2596 = vmul.f32 %v2590, %v2375
      %v2597 = vmul.f32 %v2591, %v2390
      %v2598 = vadd.f32 %v2594, %v2596
      %v2599 = vadd.f32 %v2595, %v2597
      %2600 = vst [vmem:[%s829] sm:$0xff] %v2598
      %2601 = vst [vmem:[%s829 + $0x8] sm:$0xff] %v2599
      %v2602 = vld [vmem:[%s17] sm:$0xff]
      %2605 = vrot.lane.b32.xlu0 %v2598, 17
      %v2606 = vpop.permute.xlu0 %2605
      %2607 = vrot.lane.b32.xlu0 %v2599, 17
      %v2608 = vpop.permute.xlu0 %2607
      %v2609 = vsel %vm875, %v2606, %v2608
      %2613 = vst.msk [vmem:[#allocation2] sm:$0xff] %vm1066, %v2606
      %2614 = vst [vmem:[#allocation2 + $0x8] sm:$0xff] %v2609
      %2615 = vst.msk [vmem:[#allocation2 + $0x10] sm:$0xff] %vm875, %v2608
      %v2616 = vld [vmem:[#allocation2] sm:$0xff]
      %v2617 = vld [vmem:[#allocation2 + $0x8] sm:$0xff]
      %v2618 = vsel %vm889, %v2616, 0.0
      %v2619 = vsel %vm890, %v2617, 0.0
      %v2620 = vld [vmem:[#allocation2 + $0x10] sm:$0xff]
      %2624 = vrot.lane.b32.xlu0 %v2616, 126
      %v2625 = vpop.permute.xlu0 %2624
      %2626 = vrot.lane.b32.xlu0 %v2617, 126
      %v2627 = vpop.permute.xlu0 %2626
      %2628 = vrot.lane.b32.xlu0 %v2620, 126
      %v2629 = vpop.permute.xlu0 %2628
      %v2630 = vsel %vm907, %v2625, %v2627
      %v2631 = vsel %vm907, %v2627, %v2629
      %v2634 = vsel %vm896, %v2630, 0.0
      %v2635 = vsel %vm897, %v2631, 0.0
      %2636 = vrot.lane.b32.xlu0 %v2616, 112
      %v2637 = vpop.permute.xlu0 %2636
      %2638 = vrot.lane.b32.xlu0 %v2617, 112
      %v2639 = vpop.permute.xlu0 %2638
      %2640 = vrot.lane.b32.xlu0 %v2620, 112
      %v2641 = vpop.permute.xlu0 %2640
      %v2642 = vsel %vm920, %v2637, %v2639
      %v2643 = vsel %vm920, %v2639, %v2641
      %v2646 = vsel %vm889, %v2642, 0.0
      %v2647 = vsel %vm890, %v2643, 0.0
      %2648 = vrot.lane.b32.xlu0 %v2616, 110
      %v2649 = vpop.permute.xlu0 %2648
      %2650 = vrot.lane.b32.xlu0 %v2617, 110
      %v2651 = vpop.permute.xlu0 %2650
      %2652 = vrot.lane.b32.xlu0 %v2620, 110
      %v2653 = vpop.permute.xlu0 %2652
      %v2654 = vsel %vm933, %v2649, %v2651
      %v2655 = vsel %vm933, %v2651, %v2653
      %v2658 = vsel %vm896, %v2654, 0.0
      %v2659 = vsel %vm897, %v2655, 0.0
      %2660 = vrot.lane.b32.xlu0 %v2616, 96
      %v2661 = vpop.permute.xlu0 %2660
      %2662 = vrot.lane.b32.xlu0 %v2617, 96
      %v2663 = vpop.permute.xlu0 %2662
      %2664 = vrot.lane.b32.xlu0 %v2620, 96
      %v2665 = vpop.permute.xlu0 %2664
      %v2666 = vsel %vm946, %v2661, %v2663
      %v2667 = vsel %vm946, %v2663, %v2665
      %v2670 = vsel %vm889, %v2666, 0.0
      %v2671 = vsel %vm890, %v2667, 0.0
      %2672 = vrot.lane.b32.xlu0 %v2616, 94
      %v2673 = vpop.permute.xlu0 %2672
      %2674 = vrot.lane.b32.xlu0 %v2617, 94
      %v2675 = vpop.permute.xlu0 %2674
      %2676 = vrot.lane.b32.xlu0 %v2620, 94
      %v2677 = vpop.permute.xlu0 %2676
      %v2678 = vsel %vm959, %v2673, %v2675
      %v2679 = vsel %vm959, %v2675, %v2677
      %v2682 = vsel %vm896, %v2678, 0.0
      %v2683 = vsel %vm897, %v2679, 0.0
      %2684 = vrot.lane.b32.xlu0 %v2616, 127
      %v2685 = vpop.permute.xlu0 %2684
      %2686 = vrot.lane.b32.xlu0 %v2617, 127
      %v2687 = vpop.permute.xlu0 %2686
      %2688 = vrot.lane.b32.xlu0 %v2620, 127
      %v2689 = vpop.permute.xlu0 %2688
      %v2690 = vsel %vm972, %v2685, %v2687
      %v2691 = vsel %vm972, %v2687, %v2689
      %2694 = vrot.lane.b32.xlu0 %v2616, 111
      %v2695 = vpop.permute.xlu0 %2694
      %2696 = vrot.lane.b32.xlu0 %v2617, 111
      %v2697 = vpop.permute.xlu0 %2696
      %2698 = vrot.lane.b32.xlu0 %v2620, 111
      %v2699 = vpop.permute.xlu0 %2698
      %v2700 = vsel %vm983, %v2695, %v2697
      %v2701 = vsel %vm983, %v2697, %v2699
      %2704 = vrot.lane.b32.xlu0 %v2616, 95
      %v2705 = vpop.permute.xlu0 %2704
      %2706 = vrot.lane.b32.xlu0 %v2617, 95
      %v2707 = vpop.permute.xlu0 %2706
      %2708 = vrot.lane.b32.xlu0 %v2620, 95
      %v2709 = vpop.permute.xlu0 %2708
      %v2710 = vsel %vm994, %v2705, %v2707
      %v2711 = vsel %vm994, %v2707, %v2709
      %v2714 = vld [vmem:[%s18] sm:$0xff]
      %2716 = vset.pattern.permute.xlu0 0
      %2717 = vperm.xlu0 %2716, %v2714
      %v2718 = vpop.permute.xlu0 %2717
      %v2721 = vsel %vm1005, %v2602, 0
      %2723 = vmatpush.msra.mxu0 0.0
      %2724 = vmatpush.msra.mxu0 0.0
      %2725 = vmatpush.msra.mxu0 0.0
      %2726 = vmatpush.msra.mxu0 0.0
      %2727 = vmatpush.msra.mxu0 0.0
      %2728 = vmatpush.msra.mxu0 0.0
      %2729 = vmatpush.msra.mxu0 0.0
      %2730 = vmatpush.msra.mxu0 %v2682
      %2731 = vmatpush.msra.mxu0 %v2710
      %2732 = vmatpush.msra.mxu0 %v2670
      %2733 = vmatpush.msra.mxu0 %v2658
      %2734 = vmatpush.msra.mxu0 %v2700
      %2735 = vmatpush.msra.mxu0 %v2646
      %2736 = vmatpush.msra.mxu0 %v2634
      %2737 = vmatpush.msra.mxu0 %v2690
      %2738 = vmatpush.msra.mxu0 %v2618
      %2739 = vmatmul.f32.gmra.mxu0 %v2721
      %v2740 = vpop.f32.mrf.mxu0
      %v2741 = vadd.f32 %v2718, %v2740
      %2742 = vdwg.mxu0
      %2743 = vmatpush.msra.mxu0 0.0
      %2744 = vmatpush.msra.mxu0 0.0
      %2745 = vmatpush.msra.mxu0 0.0
      %2746 = vmatpush.msra.mxu0 0.0
      %2747 = vmatpush.msra.mxu0 0.0
      %2748 = vmatpush.msra.mxu0 0.0
      %2749 = vmatpush.msra.mxu0 0.0
      %2750 = vmatpush.msra.mxu0 %v2683
      %2751 = vmatpush.msra.mxu0 %v2711
      %2752 = vmatpush.msra.mxu0 %v2671
      %2753 = vmatpush.msra.mxu0 %v2659
      %2754 = vmatpush.msra.mxu0 %v2701
      %2755 = vmatpush.msra.mxu0 %v2647
      %2756 = vmatpush.msra.mxu0 %v2635
      %2757 = vmatpush.msra.mxu0 %v2691
      %2758 = vmatpush.msra.mxu0 %v2619
      %2759 = vmatmul.f32.gmra.mxu0 %v2721
      %v2760 = vpop.f32.mrf.mxu0
      %v2761 = vadd.f32 %v2718, %v2760
      %2762 = vdwg.mxu0
      %v2763 = vmax.f32 %v2741, 0.0
      %v2764 = vmax.f32 %v2761, 0.0
      %v2765 = vld [vmem:[%s19] sm:$0xff]
      %2768 = vrot.lane.b32.xlu0 %v2763, 17
      %v2769 = vpop.permute.xlu0 %2768
      %2770 = vrot.lane.b32.xlu0 %v2764, 17
      %v2771 = vpop.permute.xlu0 %2770
      %v2772 = vsel %vm875, %v2769, %v2771
      %2776 = vst.msk [vmem:[#allocation2] sm:$0xff] %vm1066, %v2769
      %2777 = vst [vmem:[#allocation2 + $0x8] sm:$0xff] %v2772
      %2778 = vst.msk [vmem:[#allocation2 + $0x10] sm:$0xff] %vm875, %v2771
      %v2779 = vld [vmem:[#allocation2] sm:$0xff]
      %v2780 = vld [vmem:[#allocation2 + $0x8] sm:$0xff]
      %v2781 = vsel %vm889, %v2779, 0.0
      %v2782 = vsel %vm890, %v2780, 0.0
      %v2783 = vld [vmem:[#allocation2 + $0x10] sm:$0xff]
      %2787 = vrot.lane.b32.xlu0 %v2779, 126
      %v2788 = vpop.permute.xlu0 %2787
      %2789 = vrot.lane.b32.xlu0 %v2780, 126
      %v2790 = vpop.permute.xlu0 %2789
      %2791 = vrot.lane.b32.xlu0 %v2783, 126
      %v2792 = vpop.permute.xlu0 %2791
      %v2793 = vsel %vm907, %v2788, %v2790
      %v2794 = vsel %vm907, %v2790, %v2792
      %v2797 = vsel %vm896, %v2793, 0.0
      %v2798 = vsel %vm897, %v2794, 0.0
      %2799 = vrot.lane.b32.xlu0 %v2779, 112
      %v2800 = vpop.permute.xlu0 %2799
      %2801 = vrot.lane.b32.xlu0 %v2780, 112
      %v2802 = vpop.permute.xlu0 %2801
      %2803 = vrot.lane.b32.xlu0 %v2783, 112
      %v2804 = vpop.permute.xlu0 %2803
      %v2805 = vsel %vm920, %v2800, %v2802
      %v2806 = vsel %vm920, %v2802, %v2804
      %v2809 = vsel %vm889, %v2805, 0.0
      %v2810 = vsel %vm890, %v2806, 0.0
      %2811 = vrot.lane.b32.xlu0 %v2779, 110
      %v2812 = vpop.permute.xlu0 %2811
      %2813 = vrot.lane.b32.xlu0 %v2780, 110
      %v2814 = vpop.permute.xlu0 %2813
      %2815 = vrot.lane.b32.xlu0 %v2783, 110
      %v2816 = vpop.permute.xlu0 %2815
      %v2817 = vsel %vm933, %v2812, %v2814
      %v2818 = vsel %vm933, %v2814, %v2816
      %v2821 = vsel %vm896, %v2817, 0.0
      %v2822 = vsel %vm897, %v2818, 0.0
      %2823 = vrot.lane.b32.xlu0 %v2779, 96
      %v2824 = vpop.permute.xlu0 %2823
      %2825 = vrot.lane.b32.xlu0 %v2780, 96
      %v2826 = vpop.permute.xlu0 %2825
      %2827 = vrot.lane.b32.xlu0 %v2783, 96
      %v2828 = vpop.permute.xlu0 %2827
      %v2829 = vsel %vm946, %v2824, %v2826
      %v2830 = vsel %vm946, %v2826, %v2828
      %v2833 = vsel %vm889, %v2829, 0.0
      %v2834 = vsel %vm890, %v2830, 0.0
      %2835 = vrot.lane.b32.xlu0 %v2779, 94
      %v2836 = vpop.permute.xlu0 %2835
      %2837 = vrot.lane.b32.xlu0 %v2780, 94
      %v2838 = vpop.permute.xlu0 %2837
      %2839 = vrot.lane.b32.xlu0 %v2783, 94
      %v2840 = vpop.permute.xlu0 %2839
      %v2841 = vsel %vm959, %v2836, %v2838
      %v2842 = vsel %vm959, %v2838, %v2840
      %v2845 = vsel %vm896, %v2841, 0.0
      %v2846 = vsel %vm897, %v2842, 0.0
      %2847 = vrot.lane.b32.xlu0 %v2779, 127
      %v2848 = vpop.permute.xlu0 %2847
      %2849 = vrot.lane.b32.xlu0 %v2780, 127
      %v2850 = vpop.permute.xlu0 %2849
      %2851 = vrot.lane.b32.xlu0 %v2783, 127
      %v2852 = vpop.permute.xlu0 %2851
      %v2853 = vsel %vm972, %v2848, %v2850
      %v2854 = vsel %vm972, %v2850, %v2852
      %2857 = vrot.lane.b32.xlu0 %v2779, 111
      %v2858 = vpop.permute.xlu0 %2857
      %2859 = vrot.lane.b32.xlu0 %v2780, 111
      %v2860 = vpop.permute.xlu0 %2859
      %2861 = vrot.lane.b32.xlu0 %v2783, 111
      %v2862 = vpop.permute.xlu0 %2861
      %v2863 = vsel %vm983, %v2858, %v2860
      %v2864 = vsel %vm983, %v2860, %v2862
      %2867 = vrot.lane.b32.xlu0 %v2779, 95
      %v2868 = vpop.permute.xlu0 %2867
      %2869 = vrot.lane.b32.xlu0 %v2780, 95
      %v2870 = vpop.permute.xlu0 %2869
      %2871 = vrot.lane.b32.xlu0 %v2783, 95
      %v2872 = vpop.permute.xlu0 %2871
      %v2873 = vsel %vm994, %v2868, %v2870
      %v2874 = vsel %vm994, %v2870, %v2872
      %v2877 = vld [vmem:[%s20] sm:$0xff]
      %2879 = vset.pattern.permute.xlu0 0
      %2880 = vperm.xlu0 %2879, %v2877
      %v2881 = vpop.permute.xlu0 %2880
      %v2884 = vsel %vm1005, %v2765, 0
      %2886 = vmatpush.msra.mxu0 0.0
      %2887 = vmatpush.msra.mxu0 0.0
      %2888 = vmatpush.msra.mxu0 0.0
      %2889 = vmatpush.msra.mxu0 0.0
      %2890 = vmatpush.msra.mxu0 0.0
      %2891 = vmatpush.msra.mxu0 0.0
      %2892 = vmatpush.msra.mxu0 0.0
      %2893 = vmatpush.msra.mxu0 %v2845
      %2894 = vmatpush.msra.mxu0 %v2873
      %2895 = vmatpush.msra.mxu0 %v2833
      %2896 = vmatpush.msra.mxu0 %v2821
      %2897 = vmatpush.msra.mxu0 %v2863
      %2898 = vmatpush.msra.mxu0 %v2809
      %2899 = vmatpush.msra.mxu0 %v2797
      %2900 = vmatpush.msra.mxu0 %v2853
      %2901 = vmatpush.msra.mxu0 %v2781
      %2902 = vmatmul.f32.gmra.mxu0 %v2884
      %v2903 = vpop.f32.mrf.mxu0
      %v2904 = vadd.f32 %v2881, %v2903
      %2905 = vdwg.mxu0
      %2906 = vmatpush.msra.mxu0 0.0
      %2907 = vmatpush.msra.mxu0 0.0
      %2908 = vmatpush.msra.mxu0 0.0
      %2909 = vmatpush.msra.mxu0 0.0
      %2910 = vmatpush.msra.mxu0 0.0
      %2911 = vmatpush.msra.mxu0 0.0
      %2912 = vmatpush.msra.mxu0 0.0
      %2913 = vmatpush.msra.mxu0 %v2846
      %2914 = vmatpush.msra.mxu0 %v2874
      %2915 = vmatpush.msra.mxu0 %v2834
      %2916 = vmatpush.msra.mxu0 %v2822
      %2917 = vmatpush.msra.mxu0 %v2864
      %2918 = vmatpush.msra.mxu0 %v2810
      %2919 = vmatpush.msra.mxu0 %v2798
      %2920 = vmatpush.msra.mxu0 %v2854
      %2921 = vmatpush.msra.mxu0 %v2782
      %2922 = vmatmul.f32.gmra.mxu0 %v2884
      %v2923 = vpop.f32.mrf.mxu0
      %v2924 = vadd.f32 %v2881, %v2923
      %2925 = vdwg.mxu0
      %v2926 = vadd.f32 %v2904, %v2598
      %v2927 = vadd.f32 %v2924, %v2599
      %v2928 = vmax.f32 %v2926, 0.0
      %v2929 = vmax.f32 %v2927, 0.0
      %v2930 = vld [vmem:[%s21] sm:$0x1]
      %v2931 = vld [vmem:[#allocation3] sm:$0x1]
      %2933 = vset.pattern.permute.xlu0 0
      %2934 = vperm.xlu0 %2933, %v2931
      %v2935 = vpop.permute.xlu0 %2934
      %v2937 = vperm.slane %v2935, 0
      %vm2938 = vcmask 64512
      %v2940 = vsel %vm2938, %v2930, 0
      %2942 = vmatpush.msra.mxu0 0.0
      %2943 = vmatpush.msra.mxu0 0.0
      %2944 = vmatpush.msra.mxu0 0.0
      %2945 = vmatpush.msra.mxu0 0.0
      %2946 = vmatpush.msra.mxu0 0.0
      %2947 = vmatpush.msra.mxu0 0.0
      %2948 = vmatpush.msra.mxu0 0.0
      %2949 = vmatpush.msra.mxu0 0.0
      %2950 = vmatpush.msra.mxu0 0.0
      %2951 = vmatpush.msra.mxu0 0.0
      %2952 = vmatpush.msra.mxu0 0.0
      %2953 = vmatpush.msra.mxu0 0.0
      %2954 = vmatpush.msra.mxu0 0.0
      %2955 = vmatpush.msra.mxu0 0.0
      %2956 = vmatpush.msra.mxu0 0.0
      %2957 = vmatpush.msra.mxu0 %v2928
      %2958 = vmatmul.f32.gmra.mxu0 %v2940
      %v2959 = vpop.f32.mrf.mxu0
      %v2960 = vadd.f32 %v2937, %v2959
      %2961 = vdwg.mxu0
      %2962 = vmatpush.msra.mxu0 0.0
      %2963 = vmatpush.msra.mxu0 0.0
      %2964 = vmatpush.msra.mxu0 0.0
      %2965 = vmatpush.msra.mxu0 0.0
      %2966 = vmatpush.msra.mxu0 0.0
      %2967 = vmatpush.msra.mxu0 0.0
      %2968 = vmatpush.msra.mxu0 0.0
      %2969 = vmatpush.msra.mxu0 0.0
      %2970 = vmatpush.msra.mxu0 0.0
      %2971 = vmatpush.msra.mxu0 0.0
      %2972 = vmatpush.msra.mxu0 0.0
      %2973 = vmatpush.msra.mxu0 0.0
      %2974 = vmatpush.msra.mxu0 0.0
      %2975 = vmatpush.msra.mxu0 0.0
      %2976 = vmatpush.msra.mxu0 0.0
      %2977 = vmatpush.msra.mxu0 %v2929
      %2978 = vmatmul.f32.gmra.mxu0 %v2940
      %v2979 = vpop.f32.mrf.mxu0
      %v2980 = vadd.f32 %v2937, %v2979
      %2981 = vdwg.mxu0
      %v2984 = vrot.slane %v2980, 7
      %vm2985 = vcmask 1040384
      %v2986 = vsel %vm2985, %v2960, %v2984
      %v2988 = vlaneseq
      %vm2989 = vcmp.ge.s32.totalorder %v2988, 0
      %vm2990 = vcmp.lt.s32.totalorder %v2988, 256
      %vm2991 = vmand %vm2989, %vm2990
      %2992 = vst.msk [vmem:[%s819] sm:$0x3] %vm2991, %v2986
      %p2993 = scmp.lt.s32.totalorder %s39, 1
      %s2994 = scalar_select %p2993, %s39, 1
      %s2995 = smul.addr %s2994, 2
      %s2996 = scalar_lea.vmem %s23, %s2995
      %p2997 = scmp.lt.s32.totalorder %s39, 1
      %s2998 = scalar_select %p2997, %s39, 1
      %s2999 = smul.addr %s2998, 2
      %s3000 = smul.addr %s2999, 8
      %s3001 = scalar_lea.vmem %s24, %s3000
      %p3002 = scmp.lt.s32.totalorder %s39, 1
      %s3003 = scalar_select %p3002, %s39, 1
      %s3004 = smul.addr %s3003, 2
      %s3005 = smul.addr %s3004, 8
      %s3006 = scalar_lea.vmem %s25, %s3005
      // Predicated region
      $region113: #{unet_fire_forward.1} parent=111 // pred_check
        %p3007 = pneg %p555
      $region114: #{unet_fire_forward.1} parent=111 // pred_check_branch
        %3009 = sbr.rel (%p3007) target = $region116
      $region115: #{unet_fire_forward.1} parent=111 // pred_region
        _
      $region116: #{unet_fire_forward.1} parent=111 // pred_fallthru
        _
      // Predicated region
      $region117: #{unet_fire_forward.1} parent=111 // pred_check
        %p3010 = pneg %p581
      $region118: #{unet_fire_forward.1} parent=111 // pred_check_branch
        %3012 = sbr.rel (%p3010) target = $region120
      $region119: #{unet_fire_forward.1} parent=111 // pred_region
        _
      $region120: #{unet_fire_forward.1} parent=111 // pred_fallthru
        _
      // Predicated region
      $region121: #{unet_fire_forward.1} parent=111 // pred_check
        %p3013 = pneg %p607
      $region122: #{unet_fire_forward.1} parent=111 // pred_check_branch
        %3015 = sbr.rel (%p3013) target = $region124
      $region123: #{unet_fire_forward.1} parent=111 // pred_region
        _
      $region124: #{unet_fire_forward.1} parent=111 // pred_fallthru
        _
    $region112: #{unet_fire_forward.1} parent=5 // pred_fallthru
      _
    %p3016 = scmp.le.s32.totalorder 2, %s34
    // Predicated region
    $region125: #{unet_fire_forward.1} parent=5 // pred_check
      %p3017 = pneg %p3016
    $region126: #{unet_fire_forward.1} parent=5 // pred_check_branch
      %3019 = sbr.rel (%p3017) target = $region128
    $region127: #{unet_fire_forward.1} parent=5 // pred_region
      %s3020 = ssub.s32 %s34, 2
      // Predicated region
      $region129: #{unet_fire_forward.1} parent=127 // pred_check
        %p3021 = pneg %p561
      $region130: #{unet_fire_forward.1} parent=127 // pred_check_branch
        %3023 = sbr.rel (%p3021) target = $region132
      $region131: #{unet_fire_forward.1} parent=127 // pred_region
        %p3024 = scmp.lt.s32.totalorder %s40, 1
        %s3025 = scalar_select %p3024, %s40, 1
        %s3026 = smul.addr %s3025, 2
        %s3027 = scalar_lea.vmem %s23, %s3026
      $region132: #{unet_fire_forward.1} parent=127 // pred_fallthru
        _
      // Predicated region
      $region133: #{unet_fire_forward.1} parent=127 // pred_check
        %p3028 = pneg %p587
      $region134: #{unet_fire_forward.1} parent=127 // pred_check_branch
        %3030 = sbr.rel (%p3028) target = $region136
      $region135: #{unet_fire_forward.1} parent=127 // pred_region
        %p3031 = scmp.lt.s32.totalorder %s40, 1
        %s3032 = scalar_select %p3031, %s40, 1
        %s3033 = smul.addr %s3032, 2
        %s3034 = smul.addr %s3033, 8
        %s3035 = scalar_lea.vmem %s24, %s3034
      $region136: #{unet_fire_forward.1} parent=127 // pred_fallthru
        _
      // Predicated region
      $region137: #{unet_fire_forward.1} parent=127 // pred_check
        %p3036 = pneg %p613
      $region138: #{unet_fire_forward.1} parent=127 // pred_check_branch
        %3038 = sbr.rel (%p3036) target = $region140
      $region139: #{unet_fire_forward.1} parent=127 // pred_region
        %p3039 = scmp.lt.s32.totalorder %s40, 1
        %s3040 = scalar_select %p3039, %s40, 1
        %s3041 = smul.addr %s3040, 2
        %s3042 = smul.addr %s3041, 8
        %s3043 = scalar_lea.vmem %s25, %s3042
      $region140: #{unet_fire_forward.1} parent=127 // pred_fallthru
        _
    $region128: #{unet_fire_forward.1} parent=5 // pred_fallthru
      _
  $region6: #{unet_fire_forward.1} parent=0 // loop_footer
    %s38 = sadd.s32 1, %s34
  $region7: #{unet_fire_forward.1} parent=0 // loop_footer_branch
    %33 = sbr.rel target = $region3
  $region8: #{unet_fire_forward.1} parent=0 // loop_exit
    _

</llo_original>
